<compile_context>
chip_gen: v7x
topology: tpu7x:2x2x1
jax: 0.10.0
libtpu: 0.0.40
codegen_flags: <defaults>
</compile_context>

<pallas_src>
import jax
import jax.numpy as jnp
from jax.experimental import pallas as pl
from jax.experimental.pallas import tpu as pltpu


def _vmem_limit_bytes(resident_bytes):
    """grid=(1,) kernels keep whole arrays resident; leave headroom for the block
    copies and clamp to the smallest physical VMEM across generations (v7x: 64 MiB)."""
    return int(min(max(2 * resident_bytes, 32 * 1024 * 1024), 64 * 1024 * 1024))


# ----------------------------------------------------------------------------
# Kernel 1: hoisted LSTM input projection, BOTH directions fused in one matmul.
# ----------------------------------------------------------------------------
def _proj_kernel(x_ref, w_ref, b_ref, g_ref):
    g_ref[...] = (jnp.dot(x_ref[...], w_ref[...], preferred_element_type=jnp.float32)
                  + b_ref[...]).astype(g_ref.dtype)


def _lstm_input_proj(x2d, wih_cat, bias_cat):
    """(T*N, E) bf16 rows -> (T*N, 8*Hd) bf16 pre-activations [fwd gates | bwd gates]."""
    M, E = x2d.shape
    G8 = wih_cat.shape[1]
    tm = min(M, 1024)
    return pl.pallas_call(
        _proj_kernel,
        out_shape=jax.ShapeDtypeStruct((M, G8), jnp.bfloat16),
        grid=(pl.cdiv(M, tm),),
        in_specs=[
            pl.BlockSpec((tm, E), lambda i: (i, 0)),
            pl.BlockSpec((E, G8), lambda i: (0, 0)),
            pl.BlockSpec((1, G8), lambda i: (0, 0)),
        ],
        out_specs=pl.BlockSpec((tm, G8), lambda i: (i, 0)),
        compiler_params=pltpu.CompilerParams(dimension_semantics=("parallel",)),
    )(x2d, wih_cat, bias_cat)


# ----------------------------------------------------------------------------
# Kernel 2: bidirectional recurrence, one fused recurrent matmul per timestep.
# ----------------------------------------------------------------------------
def _bilstm_recur_kernel(gin_ref, whh_ref, y_ref):
    # gin_ref: (T, N, 8*Hd) bf16 pre-activations, time-major, [fwd | bwd] on lanes.
    # whh_ref: (2*Hd, 8*Hd) bf16 block-diagonal [[whh_f, 0], [0, whh_b]].
    # y_ref  : (T, N, 2*Hd) bf16 output, [:, :, :Hd] forward / [:, :, Hd:] backward.
    T, N, H = y_ref.shape
    Hd = H // 2
    G = 4 * Hd
    f32 = jnp.float32
    bf16 = jnp.bfloat16

    whh = whh_ref[...]  # loaded once, held across the whole recurrence

    def gates(g, c):
        i = jax.nn.sigmoid(g[:, 0 * Hd:1 * Hd])
        f = jax.nn.sigmoid(g[:, 1 * Hd:2 * Hd])
        gg = jnp.tanh(g[:, 2 * Hd:3 * Hd])
        o = jax.nn.sigmoid(g[:, 3 * Hd:4 * Hd])
        c_new = f * c + i * gg
        h_new = o * jnp.tanh(c_new)
        return h_new, c_new

    def step(t, carry):
        h_cat, c_f, c_b = carry
        tb = T - 1 - t
        # ONE MXU push/pop per step for both directions (latency-critical chain).
        rec = jnp.dot(h_cat.astype(bf16), whh, preferred_element_type=f32)  # (N, 8*Hd)
        g_f = gin_ref[t, :, 0:G].astype(f32) + rec[:, 0:G]
        g_b = gin_ref[tb, :, G:2 * G].astype(f32) + rec[:, G:2 * G]
        h_f, c_f = gates(g_f, c_f)
        h_b, c_b = gates(g_b, c_b)
        # Direct stores: no scratch buffers, no trailing concatenate/re-store pass.
        y_ref[t, :, 0:Hd] = h_f.astype(y_ref.dtype)
        y_ref[tb, :, Hd:2 * Hd] = h_b.astype(y_ref.dtype)
        return jnp.concatenate([h_f, h_b], axis=-1), c_f, c_b

    h0 = jnp.zeros((N, 2 * Hd), f32)
    c0 = jnp.zeros((N, Hd), f32)
    jax.lax.fori_loop(0, T, step, (h0, c0, c0), unroll=min(T, 8))


def _bilstm(x_tm, p):
    """Bidirectional single-layer LSTM over time-major (T, N, E) -> (T, N, 2*Hd) bf16."""
    T, N, E = x_tm.shape
    Hd = p["lstm_f_whh"].shape[0]
    G8 = 8 * Hd
    bf16 = jnp.bfloat16

    # Fused [forward | backward] input weights; PyTorch adds b_ih + b_hh -> pre-sum.
    wih_cat = jnp.concatenate([p["lstm_f_wih"], p["lstm_b_wih"]], axis=1).astype(bf16)
    bias_cat = jnp.concatenate([p["lstm_f_b_ih"] + p["lstm_f_b_hh"],
                                p["lstm_b_b_ih"] + p["lstm_b_b_hh"]], axis=1)
    # Block-diagonal recurrent weight -> one matmul per timestep drives both directions.
    zb = jnp.zeros((Hd, 4 * Hd), p["lstm_f_whh"].dtype)
    whh_bd = jnp.concatenate([
        jnp.concatenate([p["lstm_f_whh"], zb], axis=1),
        jnp.concatenate([zb, p["lstm_b_whh"]], axis=1)], axis=0).astype(bf16)

    # Hoisted projection: one big MXU matmul for the whole sequence, bf16 intermediate.
    x2d = x_tm.reshape(T * N, E).astype(bf16)
    gin = _lstm_input_proj(x2d, wih_cat, bias_cat).reshape(T, N, G8)

    full = lambda s: pl.BlockSpec(s, lambda i: (0,) * len(s))
    resident = (T * N * G8) * 2 + (T * N * 2 * Hd) * 2 + (2 * Hd * G8) * 2
    return pl.pallas_call(
        _bilstm_recur_kernel,
        out_shape=jax.ShapeDtypeStruct((T, N, 2 * Hd), bf16),
        grid=(1,),
        in_specs=[full((T, N, G8)), full((2 * Hd, G8))],
        out_specs=full((T, N, 2 * Hd)),
        compiler_params=pltpu.CompilerParams(
            dimension_semantics=("arbitrary",),
            vmem_limit_bytes=_vmem_limit_bytes(resident)),
    )(gin, whh_bd)


# ----------------------------------------------------------------------------
# Kernel 3: attention + pooling + classification / cosine head, batched over B.
# ----------------------------------------------------------------------------
def _attention_head_kernel(q_ref, a_ref,
                           wa_ref, ba_ref, wq_ref, bq_ref, wl_ref, bl_ref,
                           wq2_ref, bq2_ref, wa2_ref, ba2_ref,
                           score_ref, cos_ref):
    Tq, B, H = q_ref.shape
    R = a_ref.shape[0]            # = Ta * B; row r -> (time t = r // B, batch b = r % B)
    Ta = R // B
    f32 = jnp.float32
    bf16 = jnp.bfloat16

    # Question pooling: torch.mean(question_lstm, dim=-2).
    out_q = jnp.mean(q_ref[...].astype(f32), axis=0)                          # (B, H)

    # Both Linear biases sit inside the tanh in the reference:
    #   m = tanh(a @ Wa + ba + q_mean @ Wq + bq)  -> fold (bq + ba) here.
    proj_q = (jnp.dot(out_q.astype(bf16), wq_ref[...], preferred_element_type=f32)
              + bq_ref[...] + ba_ref[...])                                    # (B, H)

    # One-hot batch-selection masks from iota (no per-b loop, no reshape/transpose).
    row_mod = jax.lax.broadcasted_iota(jnp.int32, (R, B), 0) % B
    col_idx = jax.lax.broadcasted_iota(jnp.int32, (R, B), 1)
    sel_rb = row_mod == col_idx                                               # (R, B)
    sel_rb_f = sel_rb.astype(f32)
    sel_br_f = (jax.lax.broadcasted_iota(jnp.int32, (B, R), 0)
                == jax.lax.broadcasted_iota(jnp.int32, (B, R), 1) % B).astype(f32)  # (B, R)

    # Batched attention: MXU M = Ta*B instead of per-b M = Ta.
    a = a_ref[...]                                                            # (R, H) bf16
    ma = jnp.dot(a, wa_ref[...], preferred_element_type=f32)                  # (R, H)
    mq = jnp.dot(sel_rb_f, proj_q, preferred_element_type=f32)                # proj_q[r % B]
    m = jnp.tanh(ma + mq)

    # atten_last(.) as a lane reduce (avoids an N=1 matmul); wl passed as (1, H).
    logit = jnp.sum(m * wl_ref[...], axis=-1, keepdims=True) + bl_ref[...]    # (R, 1)

    # Per-batch softmax over time (dim=-2) via the one-hot masks.
    neg = jnp.float32(-1e30)
    col_max = jnp.max(jnp.where(sel_rb, logit, neg), axis=0, keepdims=True)   # (1, B)
    row_max = jnp.sum(jnp.where(sel_rb, col_max, 0.0), axis=1, keepdims=True)  # (R, 1)
    e = jnp.exp(logit - row_max)
    col_sum = jnp.sum(jnp.where(sel_rb, e, 0.0), axis=0, keepdims=True)       # (1, B)
    row_sum = jnp.sum(jnp.where(sel_rb, col_sum, 0.0), axis=1, keepdims=True)  # (R, 1)
    s = e / row_sum                                                           # softmax over time

    # pool = torch.mean(s * a, dim=-2): per-batch weighted MEAN over time.
    weighted = s * a.astype(f32)                                              # (R, H)
    pool = jnp.dot(sel_br_f, weighted, preferred_element_type=f32) * (1.0 / Ta)  # (B, H)

    # Classification branch: softmax(tanh(Wq2*q_mean + Wa2*pool), dim=-1), batched M=B.
    pre = jnp.tanh(
        jnp.dot(out_q.astype(bf16), wq2_ref[...], preferred_element_type=f32) + bq2_ref[...]
        + jnp.dot(pool.astype(bf16), wa2_ref[...], preferred_element_type=f32) + ba2_ref[...])
    pre = pre - jnp.max(pre, axis=-1, keepdims=True)
    ee = jnp.exp(pre)
    score_ref[...] = ee / jnp.sum(ee, axis=-1, keepdims=True)

    # Regression branch: cosine_similarity(q_mean, pool, dim=-1).
    eps = jnp.float32(1e-8)
    num = jnp.sum(out_q * pool, axis=-1, keepdims=True)
    qn = jnp.maximum(jnp.sqrt(jnp.sum(out_q * out_q, axis=-1, keepdims=True)), eps)
    pn = jnp.maximum(jnp.sqrt(jnp.sum(pool * pool, axis=-1, keepdims=True)), eps)
    cos_ref[...] = num / (qn * pn)


def _attention_head(q_lstm, a_lstm, p):
    Tq, B, H = q_lstm.shape
    Ta = a_lstm.shape[0]
    bf16 = jnp.bfloat16
    a2d = a_lstm.reshape(Ta * B, H)               # free HBM-level reshape, rows = t*B + b
    full = lambda s: pl.BlockSpec(s, lambda i: (0,) * len(s))
    score, cos = pl.pallas_call(
        _attention_head_kernel,
        out_shape=(jax.ShapeDtypeStruct((B, H), jnp.float32),
                   jax.ShapeDtypeStruct((B, 1), jnp.float32)),
        grid=(1,),
        in_specs=[full((Tq, B, H)), full((Ta * B, H)),
                  full((H, H)), full((1, H)),          # atten_weight_a
                  full((H, H)), full((1, H)),          # atten_weight_q
                  full((1, H)), full((1, 1)),          # atten_last (weight transposed)
                  full((H, H)), full((1, H)),          # question_weight
                  full((H, H)), full((1, H))],         # answer_weight
        out_specs=(full((B, H)), full((B, 1))),
        compiler_params=pltpu.CompilerParams(dimension_semantics=("arbitrary",)),
    )(q_lstm, a2d,
      p["atten_a_w"].astype(bf16), p["atten_a_b"],
      p["atten_q_w"].astype(bf16), p["atten_q_b"],
      p["atten_last_w"].T, p["atten_last_b"],
      p["question_w"].astype(bf16), p["question_b"],
      p["answer_w"].astype(bf16), p["answer_b"])
    return score, cos[:, 0]


# ----------------------------------------------------------------------------
# Full forward
# ----------------------------------------------------------------------------
def bilstm_cnn_forward(params, question, good_answer, is_classification=True):
    emb = params["embedding"]
    B, Tq = question.shape
    Ta = good_answer.shape[1]
    if Tq == Ta:
        # Fuse question+answer on the batch axis: one gather, one BiLSTM pass.
        # Gathering with transposed token ids yields the time-major layout directly.
        tokens = jnp.concatenate([question, good_answer], axis=0)   # (2B, T)
        x_tm = emb[tokens.T]                                        # (T, 2B, E)
        y = _bilstm(x_tm, params)                                   # (T, 2B, H) bf16
        q_lstm, a_lstm = y[:, :B, :], y[:, B:, :]
    else:
        q_lstm = _bilstm(emb[question.T], params)
        a_lstm = _bilstm(emb[good_answer.T], params)
    score, good_score = _attention_head(q_lstm, a_lstm, params)
    if is_classification:
        predic = jnp.argmax(score, axis=-1)
        return score, predic
    return good_score


# ----------------------------------------------------------------------------
# Deterministic parameter construction
# ----------------------------------------------------------------------------
def make_params(key, vocab, embed_dim, hidden, num_class):
    Hd = hidden // 2
    ks = jax.random.split(key, 22)
    n = lambda k, shape, s=0.1: (s * jax.random.normal(k, shape)).astype(jnp.float32)
    return {
        "embedding": n(ks[0], (vocab, embed_dim), 1.0),
        # forward-direction LSTM (weights stored as [in, out]; gate order i, f, g, o)
        "lstm_f_wih": n(ks[1], (embed_dim, 4 * Hd)),
        "lstm_f_whh": n(ks[2], (Hd, 4 * Hd)),
        "lstm_f_b_ih": n(ks[3], (1, 4 * Hd)),
        "lstm_f_b_hh": n(ks[4], (1, 4 * Hd)),
        # backward-direction LSTM
        "lstm_b_wih": n(ks[5], (embed_dim, 4 * Hd)),
        "lstm_b_whh": n(ks[6], (Hd, 4 * Hd)),
        "lstm_b_b_ih": n(ks[7], (1, 4 * Hd)),
        "lstm_b_b_hh": n(ks[8], (1, 4 * Hd)),
        # attention / head linears, stored as [in, out]
        "atten_a_w": n(ks[9], (hidden, hidden)), "atten_a_b": n(ks[10], (1, hidden)),
        "atten_q_w": n(ks[11], (hidden, hidden)), "atten_q_b": n(ks[12], (1, hidden)),
        "atten_last_w": n(ks[13], (hidden, 1)), "atten_last_b": n(ks[14], (1, 1)),
        "question_w": n(ks[15], (hidden, hidden)), "question_b": n(ks[16], (1, hidden)),
        "answer_w": n(ks[17], (hidden, hidden)), "answer_b": n(ks[18], (1, hidden)),
        # declared in __init__ but unused in forward() (kept for shape fidelity)
        "classify_w": n(ks[19], (hidden, num_class)), "classify_b": n(ks[20], (1, num_class)),
    }


if __name__ == "__main__":
    B, T, E, H, V, NUM_CLASS = 2, 8, 32, 32, 50, 3

    key = jax.random.PRNGKey(0)
    k_params, k_q, k_a = jax.random.split(key, 3)
    params = make_params(k_params, V, E, H, NUM_CLASS)

    question = jax.random.randint(k_q, (B, T), 0, V, dtype=jnp.int32)
    good_answer = jax.random.randint(k_a, (B, T), 0, V, dtype=jnp.int32)

    fwd_cls = jax.jit(lambda p, q, a: bilstm_cnn_forward(p, q, a, True))
    fwd_reg = jax.jit(lambda p, q, a: bilstm_cnn_forward(p, q, a, False))

    score, predic = fwd_cls(params, question, good_answer)
    good_score = fwd_reg(params, question, good_answer)

    jax.block_until_ready((score, predic, good_score))
    assert score.shape == (B, H) and predic.shape == (B,) and good_score.shape == (B,)
    assert bool(jnp.allclose(jnp.sum(score, axis=-1), 1.0, atol=1e-3))
    print("KERNEL_OK")
</pallas_src>

<mosaic_0001>
module attributes {stable_mosaic.version = 11 : i64} {
  func.func @_proj_kernel(%arg0: i32, %arg1: memref<32x32xbf16, #tpu.memory_space<vmem>>, %arg2: memref<32x128xbf16, #tpu.memory_space<vmem>>, %arg3: memref<1x128xf32, #tpu.memory_space<vmem>>, %arg4: memref<32x128xbf16, #tpu.memory_space<vmem>>) attributes {dimension_semantics = [#tpu.dimension_semantics<parallel>], iteration_bounds = array<i64: 1>, scalar_prefetch = 0 : i64, scratch_operands = 0 : i64, tpu.core_type = #tpu.core_type<tc>, window_params = [{transform_indices = @transform_0, window_bounds = array<i64: 32, 32>}, {pipeline_mode = #tpu.pipeline_mode<synchronous>, transform_indices = @transform_1, window_bounds = array<i64: 32, 128>}, {pipeline_mode = #tpu.pipeline_mode<synchronous>, transform_indices = @transform_2, window_bounds = array<i64: 1, 128>}, {transform_indices = @transform_3, window_bounds = array<i64: 32, 128>}]} {
    %c0 = arith.constant 0 : index
    %c0_0 = arith.constant 0 : index
    %0 = vector.load %arg1[%c0, %c0_0] : memref<32x32xbf16, #tpu.memory_space<vmem>>, vector<32x32xbf16>
    %c0_1 = arith.constant 0 : index
    %c0_2 = arith.constant 0 : index
    %1 = vector.load %arg2[%c0_1, %c0_2] : memref<32x128xbf16, #tpu.memory_space<vmem>>, vector<32x128xbf16>
    %cst = arith.constant dense<0.000000e+00> : vector<32x128xf32>
    %2 = tpu.matmul %0, %1, %cst {dimension_numbers = #tpu.dot_dimension_numbers<[1], [0], [0], [1], [0, 0, 1, 1], [], []>} : vector<32x32xbf16>, vector<32x128xbf16>, vector<32x128xf32> -> vector<32x128xf32>
    %c0_3 = arith.constant 0 : index
    %c0_4 = arith.constant 0 : index
    %3 = vector.load %arg3[%c0_3, %c0_4] : memref<1x128xf32, #tpu.memory_space<vmem>>, vector<1x128xf32>
    %4 = vector.broadcast %3 : vector<1x128xf32> to vector<32x128xf32>
    %5 = arith.addf %2, %4 : vector<32x128xf32>
    %6 = arith.truncf %5 : vector<32x128xf32> to vector<32x128xbf16>
    %c0_5 = arith.constant 0 : index
    %c0_6 = arith.constant 0 : index
    %7 = vector.load %arg4[%c0_5, %c0_6] : memref<32x128xbf16, #tpu.memory_space<vmem>>, vector<32x128xbf16>
    tpu.vector_store %arg4[%c0_5, %c0_6], %6 {strides = array<i32>} : memref<32x128xbf16, #tpu.memory_space<vmem>>, vector<32x128xbf16>,
    return
  }
  func.func @transform_0(%arg0: i32) -> (i32, i32) {
    %c0_i32 = arith.constant 0 : i32
    %c0_i32_0 = arith.constant 0 : i32
    return %arg0, %c0_i32 : i32, i32
  }
  func.func @transform_1(%arg0: i32) -> (i32, i32) {
    %c0_i32 = arith.constant 0 : i32
    %c0_i32_0 = arith.constant 0 : i32
    %c0_i32_1 = arith.constant 0 : i32
    return %c0_i32, %c0_i32_0 : i32, i32
  }
  func.func @transform_2(%arg0: i32) -> (i32, i32) {
    %c0_i32 = arith.constant 0 : i32
    %c0_i32_0 = arith.constant 0 : i32
    %c0_i32_1 = arith.constant 0 : i32
    return %c0_i32, %c0_i32_0 : i32, i32
  }
  func.func @transform_3(%arg0: i32) -> (i32, i32) {
    %c0_i32 = arith.constant 0 : i32
    %c0_i32_0 = arith.constant 0 : i32
    return %arg0, %c0_i32 : i32, i32
  }
}

module attributes {stable_mosaic.version = 11 : i64} {
  func.func @_bilstm_recur_kernel(%arg0: i32, %arg1: memref<8x4x128xbf16, #tpu.memory_space<vmem>>, %arg2: memref<32x128xbf16, #tpu.memory_space<vmem>>, %arg3: memref<8x4x32xbf16, #tpu.memory_space<vmem>>) attributes {dimension_semantics = [#tpu.dimension_semantics<arbitrary>], iteration_bounds = array<i64: 1>, scalar_prefetch = 0 : i64, scratch_operands = 0 : i64, tpu.core_type = #tpu.core_type<tc>, window_params = [{pipeline_mode = #tpu.pipeline_mode<synchronous>, transform_indices = @transform_0, window_bounds = array<i64: 8, 4, 128>}, {pipeline_mode = #tpu.pipeline_mode<synchronous>, transform_indices = @transform_1, window_bounds = array<i64: 32, 128>}, {pipeline_mode = #tpu.pipeline_mode<synchronous>, transform_indices = @transform_2, window_bounds = array<i64: 8, 4, 32>}]} {
    %c0 = arith.constant 0 : index
    %c0_0 = arith.constant 0 : index
    %0 = vector.load %arg2[%c0, %c0_0] : memref<32x128xbf16, #tpu.memory_space<vmem>>, vector<32x128xbf16>
    %cst = arith.constant 0.000000e+00 : f32
    %1 = vector.broadcast %cst : f32 to vector<4x32xf32>
    %cst_1 = arith.constant 0.000000e+00 : f32
    %2 = vector.broadcast %cst_1 : f32 to vector<4x16xf32>
    %c0_i32 = arith.constant 0 : i32
    %c7_i32 = arith.constant 7 : i32
    %3 = arith.subi %c7_i32, %c0_i32 : i32
    %4 = arith.truncf %1 : vector<4x32xf32> to vector<4x32xbf16>
    %cst_2 = arith.constant dense<0.000000e+00> : vector<4x128xf32>
    %5 = tpu.matmul %4, %0, %cst_2 {dimension_numbers = #tpu.dot_dimension_numbers<[1], [0], [0], [1], [0, 0, 1, 1], [], []>} : vector<4x32xbf16>, vector<32x128xbf16>, vector<4x128xf32> -> vector<4x128xf32>
    %6 = arith.index_cast %c0_i32 : i32 to index
    %c0_3 = arith.constant 0 : index
    %c0_4 = arith.constant 0 : index
    %7 = vector.load %arg1[%6, %c0_3, %c0_4] : memref<8x4x128xbf16, #tpu.memory_space<vmem>>, vector<1x4x64xbf16>
    %8 = vector.shape_cast %7 : vector<1x4x64xbf16> to vector<4x64xbf16>
    %9 = arith.extf %8 : vector<4x64xbf16> to vector<4x64xf32>
    %10 = vector.extract_strided_slice %5 {offsets = [0, 0], sizes = [4, 64], strides = [1, 1]} : vector<4x128xf32> to vector<4x64xf32>
    %11 = arith.addf %9, %10 : vector<4x64xf32>
    %12 = arith.index_cast %3 : i32 to index
    %c0_5 = arith.constant 0 : index
    %c64 = arith.constant 64 : index
    %13 = vector.load %arg1[%12, %c0_5, %c64] : memref<8x4x128xbf16, #tpu.memory_space<vmem>>, vector<1x4x64xbf16>
    %14 = vector.shape_cast %13 : vector<1x4x64xbf16> to vector<4x64xbf16>
    %15 = arith.extf %14 : vector<4x64xbf16> to vector<4x64xf32>
    %16 = vector.extract_strided_slice %5 {offsets = [0, 64], sizes = [4, 64], strides = [1, 1]} : vector<4x128xf32> to vector<4x64xf32>
    %17 = arith.addf %15, %16 : vector<4x64xf32>
    %18 = vector.extract_strided_slice %11 {offsets = [0, 0], sizes = [4, 16], strides = [1, 1]} : vector<4x64xf32> to vector<4x16xf32>
    %19 = arith.negf %18 : vector<4x16xf32>
    %20 = math.exp %19 : vector<4x16xf32>
    %cst_6 = arith.constant 1.000000e+00 : f32
    %21 = vector.broadcast %cst_6 : f32 to vector<4x16xf32>
    %22 = arith.addf %21, %20 : vector<4x16xf32>
    %23 = arith.divf %21, %22 : vector<4x16xf32>
    %24 = vector.extract_strided_slice %11 {offsets = [0, 16], sizes = [4, 16], strides = [1, 1]} : vector<4x64xf32> to vector<4x16xf32>
    %25 = arith.negf %24 : vector<4x16xf32>
    %26 = math.exp %25 : vector<4x16xf32>
    %cst_7 = arith.constant 1.000000e+00 : f32
    %27 = vector.broadcast %cst_7 : f32 to vector<4x16xf32>
    %28 = arith.addf %27, %26 : vector<4x16xf32>
    %29 = arith.divf %27, %28 : vector<4x16xf32>
    %30 = vector.extract_strided_slice %11 {offsets = [0, 32], sizes = [4, 16], strides = [1, 1]} : vector<4x64xf32> to vector<4x16xf32>
    %31 = math.tanh %30 : vector<4x16xf32>
    %32 = vector.extract_strided_slice %11 {offsets = [0, 48], sizes = [4, 16], strides = [1, 1]} : vector<4x64xf32> to vector<4x16xf32>
    %33 = arith.negf %32 : vector<4x16xf32>
    %34 = math.exp %33 : vector<4x16xf32>
    %cst_8 = arith.constant 1.000000e+00 : f32
    %35 = vector.broadcast %cst_8 : f32 to vector<4x16xf32>
    %36 = arith.addf %35, %34 : vector<4x16xf32>
    %37 = arith.divf %35, %36 : vector<4x16xf32>
    %38 = arith.mulf %29, %2 : vector<4x16xf32>
    %39 = arith.mulf %23, %31 : vector<4x16xf32>
    %40 = arith.addf %38, %39 : vector<4x16xf32>
    %41 = math.tanh %40 : vector<4x16xf32>
    %42 = arith.mulf %37, %41 : vector<4x16xf32>
    %43 = vector.extract_strided_slice %17 {offsets = [0, 0], sizes = [4, 16], strides = [1, 1]} : vector<4x64xf32> to vector<4x16xf32>
    %44 = arith.negf %43 : vector<4x16xf32>
    %45 = math.exp %44 : vector<4x16xf32>
    %cst_9 = arith.constant 1.000000e+00 : f32
    %46 = vector.broadcast %cst_9 : f32 to vector<4x16xf32>
    %47 = arith.addf %46, %45 : vector<4x16xf32>
    %48 = arith.divf %46, %47 : vector<4x16xf32>
    %49 = vector.extract_strided_slice %17 {offsets = [0, 16], sizes = [4, 16], strides = [1, 1]} : vector<4x64xf32> to vector<4x16xf32>
    %50 = arith.negf %49 : vector<4x16xf32>
    %51 = math.exp %50 : vector<4x16xf32>
    %cst_10 = arith.constant 1.000000e+00 : f32
    %52 = vector.broadcast %cst_10 : f32 to vector<4x16xf32>
    %53 = arith.addf %52, %51 : vector<4x16xf32>
    %54 = arith.divf %52, %53 : vector<4x16xf32>
    %55 = vector.extract_strided_slice %17 {offsets = [0, 32], sizes = [4, 16], strides = [1, 1]} : vector<4x64xf32> to vector<4x16xf32>
    %56 = math.tanh %55 : vector<4x16xf32>
    %57 = vector.extract_strided_slice %17 {offsets = [0, 48], sizes = [4, 16], strides = [1, 1]} : vector<4x64xf32> to vector<4x16xf32>
    %58 = arith.negf %57 : vector<4x16xf32>
    %59 = math.exp %58 : vector<4x16xf32>
    %cst_11 = arith.constant 1.000000e+00 : f32
    %60 = vector.broadcast %cst_11 : f32 to vector<4x16xf32>
    %61 = arith.addf %60, %59 : vector<4x16xf32>
    %62 = arith.divf %60, %61 : vector<4x16xf32>
    %63 = arith.mulf %54, %2 : vector<4x16xf32>
    %64 = arith.mulf %48, %56 : vector<4x16xf32>
    %65 = arith.addf %63, %64 : vector<4x16xf32>
    %66 = math.tanh %65 : vector<4x16xf32>
    %67 = arith.mulf %62, %66 : vector<4x16xf32>
    %68 = arith.truncf %42 : vector<4x16xf32> to vector<4x16xbf16>
    %69 = arith.index_cast %c0_i32 : i32 to index
    %c0_12 = arith.constant 0 : index
    %c0_13 = arith.constant 0 : index
    %70 = vector.load %arg3[%69, %c0_12, %c0_13] : memref<8x4x32xbf16, #tpu.memory_space<vmem>>, vector<1x4x16xbf16>
    %71 = vector.shape_cast %70 : vector<1x4x16xbf16> to vector<4x16xbf16>
    %72 = vector.shape_cast %68 : vector<4x16xbf16> to vector<1x4x16xbf16>
    tpu.vector_store %arg3[%69, %c0_12, %c0_13], %72 {strides = array<i32>} : memref<8x4x32xbf16, #tpu.memory_space<vmem>>, vector<1x4x16xbf16>,
    %73 = arith.truncf %67 : vector<4x16xf32> to vector<4x16xbf16>
    %74 = arith.index_cast %3 : i32 to index
    %c0_14 = arith.constant 0 : index
    %c16 = arith.constant 16 : index
    %75 = vector.load %arg3[%74, %c0_14, %c16] : memref<8x4x32xbf16, #tpu.memory_space<vmem>>, vector<1x4x16xbf16>
    %76 = vector.shape_cast %75 : vector<1x4x16xbf16> to vector<4x16xbf16>
    %77 = vector.shape_cast %73 : vector<4x16xbf16> to vector<1x4x16xbf16>
    tpu.vector_store %arg3[%74, %c0_14, %c16], %77 {strides = array<i32>} : memref<8x4x32xbf16, #tpu.memory_space<vmem>>, vector<1x4x16xbf16>,
    %78 = tpu.concatenate %42, %67 in 1 : vector<4x16xf32>, vector<4x16xf32> -> vector<4x32xf32>
    %c1_i32 = arith.constant 1 : i32
    %c7_i32_15 = arith.constant 7 : i32
    %79 = arith.subi %c7_i32_15, %c1_i32 : i32
    %80 = arith.truncf %78 : vector<4x32xf32> to vector<4x32xbf16>
    %cst_16 = arith.constant dense<0.000000e+00> : vector<4x128xf32>
    %81 = tpu.matmul %80, %0, %cst_16 {dimension_numbers = #tpu.dot_dimension_numbers<[1], [0], [0], [1], [0, 0, 1, 1], [], []>} : vector<4x32xbf16>, vector<32x128xbf16>, vector<4x128xf32> -> vector<4x128xf32>
    %82 = arith.index_cast %c1_i32 : i32 to index
    %c0_17 = arith.constant 0 : index
    %c0_18 = arith.constant 0 : index
    %83 = vector.load %arg1[%82, %c0_17, %c0_18] : memref<8x4x128xbf16, #tpu.memory_space<vmem>>, vector<1x4x64xbf16>
    %84 = vector.shape_cast %83 : vector<1x4x64xbf16> to vector<4x64xbf16>
    %85 = arith.extf %84 : vector<4x64xbf16> to vector<4x64xf32>
    %86 = vector.extract_strided_slice %81 {offsets = [0, 0], sizes = [4, 64], strides = [1, 1]} : vector<4x128xf32> to vector<4x64xf32>
    %87 = arith.addf %85, %86 : vector<4x64xf32>
    %88 = arith.index_cast %79 : i32 to index
    %c0_19 = arith.constant 0 : index
    %c64_20 = arith.constant 64 : index
    %89 = vector.load %arg1[%88, %c0_19, %c64_20] : memref<8x4x128xbf16, #tpu.memory_space<vmem>>, vector<1x4x64xbf16>
    %90 = vector.shape_cast %89 : vector<1x4x64xbf16> to vector<4x64xbf16>
    %91 = arith.extf %90 : vector<4x64xbf16> to vector<4x64xf32>
    %92 = vector.extract_strided_slice %81 {offsets = [0, 64], sizes = [4, 64], strides = [1, 1]} : vector<4x128xf32> to vector<4x64xf32>
    %93 = arith.addf %91, %92 : vector<4x64xf32>
    %94 = vector.extract_strided_slice %87 {offsets = [0, 0], sizes = [4, 16], strides = [1, 1]} : vector<4x64xf32> to vector<4x16xf32>
    %95 = arith.negf %94 : vector<4x16xf32>
    %96 = math.exp %95 : vector<4x16xf32>
    %cst_21 = arith.constant 1.000000e+00 : f32
    %97 = vector.broadcast %cst_21 : f32 to vector<4x16xf32>
    %98 = arith.addf %97, %96 : vector<4x16xf32>
    %99 = arith.divf %97, %98 : vector<4x16xf32>
    %100 = vector.extract_strided_slice %87 {offsets = [0, 16], sizes = [4, 16], strides = [1, 1]} : vector<4x64xf32> to vector<4x16xf32>
    %101 = arith.negf %100 : vector<4x16xf32>
    %102 = math.exp %101 : vector<4x16xf32>
    %cst_22 = arith.constant 1.000000e+00 : f32
    %103 = vector.broadcast %cst_22 : f32 to vector<4x16xf32>
    %104 = arith.addf %103, %102 : vector<4x16xf32>
    %105 = arith.divf %103, %104 : vector<4x16xf32>
    %106 = vector.extract_strided_slice %87 {offsets = [0, 32], sizes = [4, 16], strides = [1, 1]} : vector<4x64xf32> to vector<4x16xf32>
    %107 = math.tanh %106 : vector<4x16xf32>
    %108 = vector.extract_strided_slice %87 {offsets = [0, 48], sizes = [4, 16], strides = [1, 1]} : vector<4x64xf32> to vector<4x16xf32>
    %109 = arith.negf %108 : vector<4x16xf32>
    %110 = math.exp %109 : vector<4x16xf32>
    %cst_23 = arith.constant 1.000000e+00 : f32
    %111 = vector.broadcast %cst_23 : f32 to vector<4x16xf32>
    %112 = arith.addf %111, %110 : vector<4x16xf32>
    %113 = arith.divf %111, %112 : vector<4x16xf32>
    %114 = arith.mulf %105, %40 : vector<4x16xf32>
    %115 = arith.mulf %99, %107 : vector<4x16xf32>
    %116 = arith.addf %114, %115 : vector<4x16xf32>
    %117 = math.tanh %116 : vector<4x16xf32>
    %118 = arith.mulf %113, %117 : vector<4x16xf32>
    %119 = vector.extract_strided_slice %93 {offsets = [0, 0], sizes = [4, 16], strides = [1, 1]} : vector<4x64xf32> to vector<4x16xf32>
    %120 = arith.negf %119 : vector<4x16xf32>
    %121 = math.exp %120 : vector<4x16xf32>
    %cst_24 = arith.constant 1.000000e+00 : f32
    %122 = vector.broadcast %cst_24 : f32 to vector<4x16xf32>
    %123 = arith.addf %122, %121 : vector<4x16xf32>
    %124 = arith.divf %122, %123 : vector<4x16xf32>
    %125 = vector.extract_strided_slice %93 {offsets = [0, 16], sizes = [4, 16], strides = [1, 1]} : vector<4x64xf32> to vector<4x16xf32>
    %126 = arith.negf %125 : vector<4x16xf32>
    %127 = math.exp %126 : vector<4x16xf32>
    %cst_25 = arith.constant 1.000000e+00 : f32
    %128 = vector.broadcast %cst_25 : f32 to vector<4x16xf32>
    %129 = arith.addf %128, %127 : vector<4x16xf32>
    %130 = arith.divf %128, %129 : vector<4x16xf32>
    %131 = vector.extract_strided_slice %93 {offsets = [0, 32], sizes = [4, 16], strides = [1, 1]} : vector<4x64xf32> to vector<4x16xf32>
    %132 = math.tanh %131 : vector<4x16xf32>
    %133 = vector.extract_strided_slice %93 {offsets = [0, 48], sizes = [4, 16], strides = [1, 1]} : vector<4x64xf32> to vector<4x16xf32>
    %134 = arith.negf %133 : vector<4x16xf32>
    %135 = math.exp %134 : vector<4x16xf32>
    %cst_26 = arith.constant 1.000000e+00 : f32
    %136 = vector.broadcast %cst_26 : f32 to vector<4x16xf32>
    %137 = arith.addf %136, %135 : vector<4x16xf32>
    %138 = arith.divf %136, %137 : vector<4x16xf32>
    %139 = arith.mulf %130, %65 : vector<4x16xf32>
    %140 = arith.mulf %124, %132 : vector<4x16xf32>
    %141 = arith.addf %139, %140 : vector<4x16xf32>
    %142 = math.tanh %141 : vector<4x16xf32>
    %143 = arith.mulf %138, %142 : vector<4x16xf32>
    %144 = arith.truncf %118 : vector<4x16xf32> to vector<4x16xbf16>
    %145 = arith.index_cast %c1_i32 : i32 to index
    %c0_27 = arith.constant 0 : index
    %c0_28 = arith.constant 0 : index
    %146 = vector.load %arg3[%145, %c0_27, %c0_28] : memref<8x4x32xbf16, #tpu.memory_space<vmem>>, vector<1x4x16xbf16>
    %147 = vector.shape_cast %146 : vector<1x4x16xbf16> to vector<4x16xbf16>
    %148 = vector.shape_cast %144 : vector<4x16xbf16> to vector<1x4x16xbf16>
    tpu.vector_store %arg3[%145, %c0_27, %c0_28], %148 {strides = array<i32>} : memref<8x4x32xbf16, #tpu.memory_space<vmem>>, vector<1x4x16xbf16>,
    %149 = arith.truncf %143 : vector<4x16xf32> to vector<4x16xbf16>
    %150 = arith.index_cast %79 : i32 to index
    %c0_29 = arith.constant 0 : index
    %c16_30 = arith.constant 16 : index
    %151 = vector.load %arg3[%150, %c0_29, %c16_30] : memref<8x4x32xbf16, #tpu.memory_space<vmem>>, vector<1x4x16xbf16>
    %152 = vector.shape_cast %151 : vector<1x4x16xbf16> to vector<4x16xbf16>
    %153 = vector.shape_cast %149 : vector<4x16xbf16> to vector<1x4x16xbf16>
    tpu.vector_store %arg3[%150, %c0_29, %c16_30], %153 {strides = array<i32>} : memref<8x4x32xbf16, #tpu.memory_space<vmem>>, vector<1x4x16xbf16>,
    %154 = tpu.concatenate %118, %143 in 1 : vector<4x16xf32>, vector<4x16xf32> -> vector<4x32xf32>
    %c2_i32 = arith.constant 2 : i32
    %c7_i32_31 = arith.constant 7 : i32
    %155 = arith.subi %c7_i32_31, %c2_i32 : i32
    %156 = arith.truncf %154 : vector<4x32xf32> to vector<4x32xbf16>
    %cst_32 = arith.constant dense<0.000000e+00> : vector<4x128xf32>
    %157 = tpu.matmul %156, %0, %cst_32 {dimension_numbers = #tpu.dot_dimension_numbers<[1], [0], [0], [1], [0, 0, 1, 1], [], []>} : vector<4x32xbf16>, vector<32x128xbf16>, vector<4x128xf32> -> vector<4x128xf32>
    %158 = arith.index_cast %c2_i32 : i32 to index
    %c0_33 = arith.constant 0 : index
    %c0_34 = arith.constant 0 : index
    %159 = vector.load %arg1[%158, %c0_33, %c0_34] : memref<8x4x128xbf16, #tpu.memory_space<vmem>>, vector<1x4x64xbf16>
    %160 = vector.shape_cast %159 : vector<1x4x64xbf16> to vector<4x64xbf16>
    %161 = arith.extf %160 : vector<4x64xbf16> to vector<4x64xf32>
    %162 = vector.extract_strided_slice %157 {offsets = [0, 0], sizes = [4, 64], strides = [1, 1]} : vector<4x128xf32> to vector<4x64xf32>
    %163 = arith.addf %161, %162 : vector<4x64xf32>
    %164 = arith.index_cast %155 : i32 to index
    %c0_35 = arith.constant 0 : index
    %c64_36 = arith.constant 64 : index
    %165 = vector.load %arg1[%164, %c0_35, %c64_36] : memref<8x4x128xbf16, #tpu.memory_space<vmem>>, vector<1x4x64xbf16>
    %166 = vector.shape_cast %165 : vector<1x4x64xbf16> to vector<4x64xbf16>
    %167 = arith.extf %166 : vector<4x64xbf16> to vector<4x64xf32>
    %168 = vector.extract_strided_slice %157 {offsets = [0, 64], sizes = [4, 64], strides = [1, 1]} : vector<4x128xf32> to vector<4x64xf32>
    %169 = arith.addf %167, %168 : vector<4x64xf32>
    %170 = vector.extract_strided_slice %163 {offsets = [0, 0], sizes = [4, 16], strides = [1, 1]} : vector<4x64xf32> to vector<4x16xf32>
    %171 = arith.negf %170 : vector<4x16xf32>
    %172 = math.exp %171 : vector<4x16xf32>
    %cst_37 = arith.constant 1.000000e+00 : f32
    %173 = vector.broadcast %cst_37 : f32 to vector<4x16xf32>
    %174 = arith.addf %173, %172 : vector<4x16xf32>
    %175 = arith.divf %173, %174 : vector<4x16xf32>
    %176 = vector.extract_strided_slice %163 {offsets = [0, 16], sizes = [4, 16], strides = [1, 1]} : vector<4x64xf32> to vector<4x16xf32>
    %177 = arith.negf %176 : vector<4x16xf32>
    %178 = math.exp %177 : vector<4x16xf32>
    %cst_38 = arith.constant 1.000000e+00 : f32
    %179 = vector.broadcast %cst_38 : f32 to vector<4x16xf32>
    %180 = arith.addf %179, %178 : vector<4x16xf32>
    %181 = arith.divf %179, %180 : vector<4x16xf32>
    %182 = vector.extract_strided_slice %163 {offsets = [0, 32], sizes = [4, 16], strides = [1, 1]} : vector<4x64xf32> to vector<4x16xf32>
    %183 = math.tanh %182 : vector<4x16xf32>
    %184 = vector.extract_strided_slice %163 {offsets = [0, 48], sizes = [4, 16], strides = [1, 1]} : vector<4x64xf32> to vector<4x16xf32>
    %185 = arith.negf %184 : vector<4x16xf32>
    %186 = math.exp %185 : vector<4x16xf32>
    %cst_39 = arith.constant 1.000000e+00 : f32
    %187 = vector.broadcast %cst_39 : f32 to vector<4x16xf32>
    %188 = arith.addf %187, %186 : vector<4x16xf32>
    %189 = arith.divf %187, %188 : vector<4x16xf32>
    %190 = arith.mulf %181, %116 : vector<4x16xf32>
    %191 = arith.mulf %175, %183 : vector<4x16xf32>
    %192 = arith.addf %190, %191 : vector<4x16xf32>
    %193 = math.tanh %192 : vector<4x16xf32>
    %194 = arith.mulf %189, %193 : vector<4x16xf32>
    %195 = vector.extract_strided_slice %169 {offsets = [0, 0], sizes = [4, 16], strides = [1, 1]} : vector<4x64xf32> to vector<4x16xf32>
    %196 = arith.negf %195 : vector<4x16xf32>
    %197 = math.exp %196 : vector<4x16xf32>
    %cst_40 = arith.constant 1.000000e+00 : f32
    %198 = vector.broadcast %cst_40 : f32 to vector<4x16xf32>
    %199 = arith.addf %198, %197 : vector<4x16xf32>
    %200 = arith.divf %198, %199 : vector<4x16xf32>
    %201 = vector.extract_strided_slice %169 {offsets = [0, 16], sizes = [4, 16], strides = [1, 1]} : vector<4x64xf32> to vector<4x16xf32>
    %202 = arith.negf %201 : vector<4x16xf32>
    %203 = math.exp %202 : vector<4x16xf32>
    %cst_41 = arith.constant 1.000000e+00 : f32
    %204 = vector.broadcast %cst_41 : f32 to vector<4x16xf32>
    %205 = arith.addf %204, %203 : vector<4x16xf32>
    %206 = arith.divf %204, %205 : vector<4x16xf32>
    %207 = vector.extract_strided_slice %169 {offsets = [0, 32], sizes = [4, 16], strides = [1, 1]} : vector<4x64xf32> to vector<4x16xf32>
    %208 = math.tanh %207 : vector<4x16xf32>
    %209 = vector.extract_strided_slice %169 {offsets = [0, 48], sizes = [4, 16], strides = [1, 1]} : vector<4x64xf32> to vector<4x16xf32>
    %210 = arith.negf %209 : vector<4x16xf32>
    %211 = math.exp %210 : vector<4x16xf32>
    %cst_42 = arith.constant 1.000000e+00 : f32
    %212 = vector.broadcast %cst_42 : f32 to vector<4x16xf32>
    %213 = arith.addf %212, %211 : vector<4x16xf32>
    %214 = arith.divf %212, %213 : vector<4x16xf32>
    %215 = arith.mulf %206, %141 : vector<4x16xf32>
    %216 = arith.mulf %200, %208 : vector<4x16xf32>
    %217 = arith.addf %215, %216 : vector<4x16xf32>
    %218 = math.tanh %217 : vector<4x16xf32>
    %219 = arith.mulf %214, %218 : vector<4x16xf32>
    %220 = arith.truncf %194 : vector<4x16xf32> to vector<4x16xbf16>
    %221 = arith.index_cast %c2_i32 : i32 to index
    %c0_43 = arith.constant 0 : index
    %c0_44 = arith.constant 0 : index
    %222 = vector.load %arg3[%221, %c0_43, %c0_44] : memref<8x4x32xbf16, #tpu.memory_space<vmem>>, vector<1x4x16xbf16>
    %223 = vector.shape_cast %222 : vector<1x4x16xbf16> to vector<4x16xbf16>
    %224 = vector.shape_cast %220 : vector<4x16xbf16> to vector<1x4x16xbf16>
    tpu.vector_store %arg3[%221, %c0_43, %c0_44], %224 {strides = array<i32>} : memref<8x4x32xbf16, #tpu.memory_space<vmem>>, vector<1x4x16xbf16>,
    %225 = arith.truncf %219 : vector<4x16xf32> to vector<4x16xbf16>
    %226 = arith.index_cast %155 : i32 to index
    %c0_45 = arith.constant 0 : index
    %c16_46 = arith.constant 16 : index
    %227 = vector.load %arg3[%226, %c0_45, %c16_46] : memref<8x4x32xbf16, #tpu.memory_space<vmem>>, vector<1x4x16xbf16>
    %228 = vector.shape_cast %227 : vector<1x4x16xbf16> to vector<4x16xbf16>
    %229 = vector.shape_cast %225 : vector<4x16xbf16> to vector<1x4x16xbf16>
    tpu.vector_store %arg3[%226, %c0_45, %c16_46], %229 {strides = array<i32>} : memref<8x4x32xbf16, #tpu.memory_space<vmem>>, vector<1x4x16xbf16>,
    %230 = tpu.concatenate %194, %219 in 1 : vector<4x16xf32>, vector<4x16xf32> -> vector<4x32xf32>
    %c3_i32 = arith.constant 3 : i32
    %c7_i32_47 = arith.constant 7 : i32
    %231 = arith.subi %c7_i32_47, %c3_i32 : i32
    %232 = arith.truncf %230 : vector<4x32xf32> to vector<4x32xbf16>
    %cst_48 = arith.constant dense<0.000000e+00> : vector<4x128xf32>
    %233 = tpu.matmul %232, %0, %cst_48 {dimension_numbers = #tpu.dot_dimension_numbers<[1], [0], [0], [1], [0, 0, 1, 1], [], []>} : vector<4x32xbf16>, vector<32x128xbf16>, vector<4x128xf32> -> vector<4x128xf32>
    %234 = arith.index_cast %c3_i32 : i32 to index
    %c0_49 = arith.constant 0 : index
    %c0_50 = arith.constant 0 : index
    %235 = vector.load %arg1[%234, %c0_49, %c0_50] : memref<8x4x128xbf16, #tpu.memory_space<vmem>>, vector<1x4x64xbf16>
    %236 = vector.shape_cast %235 : vector<1x4x64xbf16> to vector<4x64xbf16>
    %237 = arith.extf %236 : vector<4x64xbf16> to vector<4x64xf32>
    %238 = vector.extract_strided_slice %233 {offsets = [0, 0], sizes = [4, 64], strides = [1, 1]} : vector<4x128xf32> to vector<4x64xf32>
    %239 = arith.addf %237, %238 : vector<4x64xf32>
    %240 = arith.index_cast %231 : i32 to index
    %c0_51 = arith.constant 0 : index
    %c64_52 = arith.constant 64 : index
    %241 = vector.load %arg1[%240, %c0_51, %c64_52] : memref<8x4x128xbf16, #tpu.memory_space<vmem>>, vector<1x4x64xbf16>
    %242 = vector.shape_cast %241 : vector<1x4x64xbf16> to vector<4x64xbf16>
    %243 = arith.extf %242 : vector<4x64xbf16> to vector<4x64xf32>
    %244 = vector.extract_strided_slice %233 {offsets = [0, 64], sizes = [4, 64], strides = [1, 1]} : vector<4x128xf32> to vector<4x64xf32>
    %245 = arith.addf %243, %244 : vector<4x64xf32>
    %246 = vector.extract_strided_slice %239 {offsets = [0, 0], sizes = [4, 16], strides = [1, 1]} : vector<4x64xf32> to vector<4x16xf32>
    %247 = arith.negf %246 : vector<4x16xf32>
    %248 = math.exp %247 : vector<4x16xf32>
    %cst_53 = arith.constant 1.000000e+00 : f32
    %249 = vector.broadcast %cst_53 : f32 to vector<4x16xf32>
    %250 = arith.addf %249, %248 : vector<4x16xf32>
    %251 = arith.divf %249, %250 : vector<4x16xf32>
    %252 = vector.extract_strided_slice %239 {offsets = [0, 16], sizes = [4, 16], strides = [1, 1]} : vector<4x64xf32> to vector<4x16xf32>
    %253 = arith.negf %252 : vector<4x16xf32>
    %254 = math.exp %253 : vector<4x16xf32>
    %cst_54 = arith.constant 1.000000e+00 : f32
    %255 = vector.broadcast %cst_54 : f32 to vector<4x16xf32>
    %256 = arith.addf %255, %254 : vector<4x16xf32>
    %257 = arith.divf %255, %256 : vector<4x16xf32>
    %258 = vector.extract_strided_slice %239 {offsets = [0, 32], sizes = [4, 16], strides = [1, 1]} : vector<4x64xf32> to vector<4x16xf32>
    %259 = math.tanh %258 : vector<4x16xf32>
    %260 = vector.extract_strided_slice %239 {offsets = [0, 48], sizes = [4, 16], strides = [1, 1]} : vector<4x64xf32> to vector<4x16xf32>
    %261 = arith.negf %260 : vector<4x16xf32>
    %262 = math.exp %261 : vector<4x16xf32>
    %cst_55 = arith.constant 1.000000e+00 : f32
    %263 = vector.broadcast %cst_55 : f32 to vector<4x16xf32>
    %264 = arith.addf %263, %262 : vector<4x16xf32>
    %265 = arith.divf %263, %264 : vector<4x16xf32>
    %266 = arith.mulf %257, %192 : vector<4x16xf32>
    %267 = arith.mulf %251, %259 : vector<4x16xf32>
    %268 = arith.addf %266, %267 : vector<4x16xf32>
    %269 = math.tanh %268 : vector<4x16xf32>
    %270 = arith.mulf %265, %269 : vector<4x16xf32>
    %271 = vector.extract_strided_slice %245 {offsets = [0, 0], sizes = [4, 16], strides = [1, 1]} : vector<4x64xf32> to vector<4x16xf32>
    %272 = arith.negf %271 : vector<4x16xf32>
    %273 = math.exp %272 : vector<4x16xf32>
    %cst_56 = arith.constant 1.000000e+00 : f32
    %274 = vector.broadcast %cst_56 : f32 to vector<4x16xf32>
    %275 = arith.addf %274, %273 : vector<4x16xf32>
    %276 = arith.divf %274, %275 : vector<4x16xf32>
    %277 = vector.extract_strided_slice %245 {offsets = [0, 16], sizes = [4, 16], strides = [1, 1]} : vector<4x64xf32> to vector<4x16xf32>
    %278 = arith.negf %277 : vector<4x16xf32>
    %279 = math.exp %278 : vector<4x16xf32>
    %cst_57 = arith.constant 1.000000e+00 : f32
    %280 = vector.broadcast %cst_57 : f32 to vector<4x16xf32>
    %281 = arith.addf %280, %279 : vector<4x16xf32>
    %282 = arith.divf %280, %281 : vector<4x16xf32>
    %283 = vector.extract_strided_slice %245 {offsets = [0, 32], sizes = [4, 16], strides = [1, 1]} : vector<4x64xf32> to vector<4x16xf32>
    %284 = math.tanh %283 : vector<4x16xf32>
    %285 = vector.extract_strided_slice %245 {offsets = [0, 48], sizes = [4, 16], strides = [1, 1]} : vector<4x64xf32> to vector<4x16xf32>
    %286 = arith.negf %285 : vector<4x16xf32>
    %287 = math.exp %286 : vector<4x16xf32>
    %cst_58 = arith.constant 1.000000e+00 : f32
    %288 = vector.broadcast %cst_58 : f32 to vector<4x16xf32>
    %289 = arith.addf %288, %287 : vector<4x16xf32>
    %290 = arith.divf %288, %289 : vector<4x16xf32>
    %291 = arith.mulf %282, %217 : vector<4x16xf32>
    %292 = arith.mulf %276, %284 : vector<4x16xf32>
    %293 = arith.addf %291, %292 : vector<4x16xf32>
    %294 = math.tanh %293 : vector<4x16xf32>
    %295 = arith.mulf %290, %294 : vector<4x16xf32>
    %296 = arith.truncf %270 : vector<4x16xf32> to vector<4x16xbf16>
    %297 = arith.index_cast %c3_i32 : i32 to index
    %c0_59 = arith.constant 0 : index
    %c0_60 = arith.constant 0 : index
    %298 = vector.load %arg3[%297, %c0_59, %c0_60] : memref<8x4x32xbf16, #tpu.memory_space<vmem>>, vector<1x4x16xbf16>
    %299 = vector.shape_cast %298 : vector<1x4x16xbf16> to vector<4x16xbf16>
    %300 = vector.shape_cast %296 : vector<4x16xbf16> to vector<1x4x16xbf16>
    tpu.vector_store %arg3[%297, %c0_59, %c0_60], %300 {strides = array<i32>} : memref<8x4x32xbf16, #tpu.memory_space<vmem>>, vector<1x4x16xbf16>,
    %301 = arith.truncf %295 : vector<4x16xf32> to vector<4x16xbf16>
    %302 = arith.index_cast %231 : i32 to index
    %c0_61 = arith.constant 0 : index
    %c16_62 = arith.constant 16 : index
    %303 = vector.load %arg3[%302, %c0_61, %c16_62] : memref<8x4x32xbf16, #tpu.memory_space<vmem>>, vector<1x4x16xbf16>
    %304 = vector.shape_cast %303 : vector<1x4x16xbf16> to vector<4x16xbf16>
    %305 = vector.shape_cast %301 : vector<4x16xbf16> to vector<1x4x16xbf16>
    tpu.vector_store %arg3[%302, %c0_61, %c16_62], %305 {strides = array<i32>} : memref<8x4x32xbf16, #tpu.memory_space<vmem>>, vector<1x4x16xbf16>,
    %306 = tpu.concatenate %270, %295 in 1 : vector<4x16xf32>, vector<4x16xf32> -> vector<4x32xf32>
    %c4_i32 = arith.constant 4 : i32
    %c7_i32_63 = arith.constant 7 : i32
    %307 = arith.subi %c7_i32_63, %c4_i32 : i32
    %308 = arith.truncf %306 : vector<4x32xf32> to vector<4x32xbf16>
    %cst_64 = arith.constant dense<0.000000e+00> : vector<4x128xf32>
    %309 = tpu.matmul %308, %0, %cst_64 {dimension_numbers = #tpu.dot_dimension_numbers<[1], [0], [0], [1], [0, 0, 1, 1], [], []>} : vector<4x32xbf16>, vector<32x128xbf16>, vector<4x128xf32> -> vector<4x128xf32>
    %310 = arith.index_cast %c4_i32 : i32 to index
    %c0_65 = arith.constant 0 : index
    %c0_66 = arith.constant 0 : index
    %311 = vector.load %arg1[%310, %c0_65, %c0_66] : memref<8x4x128xbf16, #tpu.memory_space<vmem>>, vector<1x4x64xbf16>
    %312 = vector.shape_cast %311 : vector<1x4x64xbf16> to vector<4x64xbf16>
    %313 = arith.extf %312 : vector<4x64xbf16> to vector<4x64xf32>
    %314 = vector.extract_strided_slice %309 {offsets = [0, 0], sizes = [4, 64], strides = [1, 1]} : vector<4x128xf32> to vector<4x64xf32>
    %315 = arith.addf %313, %314 : vector<4x64xf32>
    %316 = arith.index_cast %307 : i32 to index
    %c0_67 = arith.constant 0 : index
    %c64_68 = arith.constant 64 : index
    %317 = vector.load %arg1[%316, %c0_67, %c64_68] : memref<8x4x128xbf16, #tpu.memory_space<vmem>>, vector<1x4x64xbf16>
    %318 = vector.shape_cast %317 : vector<1x4x64xbf16> to vector<4x64xbf16>
    %319 = arith.extf %318 : vector<4x64xbf16> to vector<4x64xf32>
    %320 = vector.extract_strided_slice %309 {offsets = [0, 64], sizes = [4, 64], strides = [1, 1]} : vector<4x128xf32> to vector<4x64xf32>
    %321 = arith.addf %319, %320 : vector<4x64xf32>
    %322 = vector.extract_strided_slice %315 {offsets = [0, 0], sizes = [4, 16], strides = [1, 1]} : vector<4x64xf32> to vector<4x16xf32>
    %323 = arith.negf %322 : vector<4x16xf32>
    %324 = math.exp %323 : vector<4x16xf32>
    %cst_69 = arith.constant 1.000000e+00 : f32
    %325 = vector.broadcast %cst_69 : f32 to vector<4x16xf32>
    %326 = arith.addf %325, %324 : vector<4x16xf32>
    %327 = arith.divf %325, %326 : vector<4x16xf32>
    %328 = vector.extract_strided_slice %315 {offsets = [0, 16], sizes = [4, 16], strides = [1, 1]} : vector<4x64xf32> to vector<4x16xf32>
    %329 = arith.negf %328 : vector<4x16xf32>
    %330 = math.exp %329 : vector<4x16xf32>
    %cst_70 = arith.constant 1.000000e+00 : f32
    %331 = vector.broadcast %cst_70 : f32 to vector<4x16xf32>
    %332 = arith.addf %331, %330 : vector<4x16xf32>
    %333 = arith.divf %331, %332 : vector<4x16xf32>
    %334 = vector.extract_strided_slice %315 {offsets = [0, 32], sizes = [4, 16], strides = [1, 1]} : vector<4x64xf32> to vector<4x16xf32>
    %335 = math.tanh %334 : vector<4x16xf32>
    %336 = vector.extract_strided_slice %315 {offsets = [0, 48], sizes = [4, 16], strides = [1, 1]} : vector<4x64xf32> to vector<4x16xf32>
    %337 = arith.negf %336 : vector<4x16xf32>
    %338 = math.exp %337 : vector<4x16xf32>
    %cst_71 = arith.constant 1.000000e+00 : f32
    %339 = vector.broadcast %cst_71 : f32 to vector<4x16xf32>
    %340 = arith.addf %339, %338 : vector<4x16xf32>
    %341 = arith.divf %339, %340 : vector<4x16xf32>
    %342 = arith.mulf %333, %268 : vector<4x16xf32>
    %343 = arith.mulf %327, %335 : vector<4x16xf32>
    %344 = arith.addf %342, %343 : vector<4x16xf32>
    %345 = math.tanh %344 : vector<4x16xf32>
    %346 = arith.mulf %341, %345 : vector<4x16xf32>
    %347 = vector.extract_strided_slice %321 {offsets = [0, 0], sizes = [4, 16], strides = [1, 1]} : vector<4x64xf32> to vector<4x16xf32>
    %348 = arith.negf %347 : vector<4x16xf32>
    %349 = math.exp %348 : vector<4x16xf32>
    %cst_72 = arith.constant 1.000000e+00 : f32
    %350 = vector.broadcast %cst_72 : f32 to vector<4x16xf32>
    %351 = arith.addf %350, %349 : vector<4x16xf32>
    %352 = arith.divf %350, %351 : vector<4x16xf32>
    %353 = vector.extract_strided_slice %321 {offsets = [0, 16], sizes = [4, 16], strides = [1, 1]} : vector<4x64xf32> to vector<4x16xf32>
    %354 = arith.negf %353 : vector<4x16xf32>
    %355 = math.exp %354 : vector<4x16xf32>
    %cst_73 = arith.constant 1.000000e+00 : f32
    %356 = vector.broadcast %cst_73 : f32 to vector<4x16xf32>
    %357 = arith.addf %356, %355 : vector<4x16xf32>
    %358 = arith.divf %356, %357 : vector<4x16xf32>
    %359 = vector.extract_strided_slice %321 {offsets = [0, 32], sizes = [4, 16], strides = [1, 1]} : vector<4x64xf32> to vector<4x16xf32>
    %360 = math.tanh %359 : vector<4x16xf32>
    %361 = vector.extract_strided_slice %321 {offsets = [0, 48], sizes = [4, 16], strides = [1, 1]} : vector<4x64xf32> to vector<4x16xf32>
    %362 = arith.negf %361 : vector<4x16xf32>
    %363 = math.exp %362 : vector<4x16xf32>
    %cst_74 = arith.constant 1.000000e+00 : f32
    %364 = vector.broadcast %cst_74 : f32 to vector<4x16xf32>
    %365 = arith.addf %364, %363 : vector<4x16xf32>
    %366 = arith.divf %364, %365 : vector<4x16xf32>
    %367 = arith.mulf %358, %293 : vector<4x16xf32>
    %368 = arith.mulf %352, %360 : vector<4x16xf32>
    %369 = arith.addf %367, %368 : vector<4x16xf32>
    %370 = math.tanh %369 : vector<4x16xf32>
    %371 = arith.mulf %366, %370 : vector<4x16xf32>
    %372 = arith.truncf %346 : vector<4x16xf32> to vector<4x16xbf16>
    %373 = arith.index_cast %c4_i32 : i32 to index
    %c0_75 = arith.constant 0 : index
    %c0_76 = arith.constant 0 : index
    %374 = vector.load %arg3[%373, %c0_75, %c0_76] : memref<8x4x32xbf16, #tpu.memory_space<vmem>>, vector<1x4x16xbf16>
    %375 = vector.shape_cast %374 : vector<1x4x16xbf16> to vector<4x16xbf16>
    %376 = vector.shape_cast %372 : vector<4x16xbf16> to vector<1x4x16xbf16>
    tpu.vector_store %arg3[%373, %c0_75, %c0_76], %376 {strides = array<i32>} : memref<8x4x32xbf16, #tpu.memory_space<vmem>>, vector<1x4x16xbf16>,
    %377 = arith.truncf %371 : vector<4x16xf32> to vector<4x16xbf16>
    %378 = arith.index_cast %307 : i32 to index
    %c0_77 = arith.constant 0 : index
    %c16_78 = arith.constant 16 : index
    %379 = vector.load %arg3[%378, %c0_77, %c16_78] : memref<8x4x32xbf16, #tpu.memory_space<vmem>>, vector<1x4x16xbf16>
    %380 = vector.shape_cast %379 : vector<1x4x16xbf16> to vector<4x16xbf16>
    %381 = vector.shape_cast %377 : vector<4x16xbf16> to vector<1x4x16xbf16>
    tpu.vector_store %arg3[%378, %c0_77, %c16_78], %381 {strides = array<i32>} : memref<8x4x32xbf16, #tpu.memory_space<vmem>>, vector<1x4x16xbf16>,
    %382 = tpu.concatenate %346, %371 in 1 : vector<4x16xf32>, vector<4x16xf32> -> vector<4x32xf32>
    %c5_i32 = arith.constant 5 : i32
    %c7_i32_79 = arith.constant 7 : i32
    %383 = arith.subi %c7_i32_79, %c5_i32 : i32
    %384 = arith.truncf %382 : vector<4x32xf32> to vector<4x32xbf16>
    %cst_80 = arith.constant dense<0.000000e+00> : vector<4x128xf32>
    %385 = tpu.matmul %384, %0, %cst_80 {dimension_numbers = #tpu.dot_dimension_numbers<[1], [0], [0], [1], [0, 0, 1, 1], [], []>} : vector<4x32xbf16>, vector<32x128xbf16>, vector<4x128xf32> -> vector<4x128xf32>
    %386 = arith.index_cast %c5_i32 : i32 to index
    %c0_81 = arith.constant 0 : index
    %c0_82 = arith.constant 0 : index
    %387 = vector.load %arg1[%386, %c0_81, %c0_82] : memref<8x4x128xbf16, #tpu.memory_space<vmem>>, vector<1x4x64xbf16>
    %388 = vector.shape_cast %387 : vector<1x4x64xbf16> to vector<4x64xbf16>
    %389 = arith.extf %388 : vector<4x64xbf16> to vector<4x64xf32>
    %390 = vector.extract_strided_slice %385 {offsets = [0, 0], sizes = [4, 64], strides = [1, 1]} : vector<4x128xf32> to vector<4x64xf32>
    %391 = arith.addf %389, %390 : vector<4x64xf32>
    %392 = arith.index_cast %383 : i32 to index
    %c0_83 = arith.constant 0 : index
    %c64_84 = arith.constant 64 : index
    %393 = vector.load %arg1[%392, %c0_83, %c64_84] : memref<8x4x128xbf16, #tpu.memory_space<vmem>>, vector<1x4x64xbf16>
    %394 = vector.shape_cast %393 : vector<1x4x64xbf16> to vector<4x64xbf16>
    %395 = arith.extf %394 : vector<4x64xbf16> to vector<4x64xf32>
    %396 = vector.extract_strided_slice %385 {offsets = [0, 64], sizes = [4, 64], strides = [1, 1]} : vector<4x128xf32> to vector<4x64xf32>
    %397 = arith.addf %395, %396 : vector<4x64xf32>
    %398 = vector.extract_strided_slice %391 {offsets = [0, 0], sizes = [4, 16], strides = [1, 1]} : vector<4x64xf32> to vector<4x16xf32>
    %399 = arith.negf %398 : vector<4x16xf32>
    %400 = math.exp %399 : vector<4x16xf32>
    %cst_85 = arith.constant 1.000000e+00 : f32
    %401 = vector.broadcast %cst_85 : f32 to vector<4x16xf32>
    %402 = arith.addf %401, %400 : vector<4x16xf32>
    %403 = arith.divf %401, %402 : vector<4x16xf32>
    %404 = vector.extract_strided_slice %391 {offsets = [0, 16], sizes = [4, 16], strides = [1, 1]} : vector<4x64xf32> to vector<4x16xf32>
    %405 = arith.negf %404 : vector<4x16xf32>
    %406 = math.exp %405 : vector<4x16xf32>
    %cst_86 = arith.constant 1.000000e+00 : f32
    %407 = vector.broadcast %cst_86 : f32 to vector<4x16xf32>
    %408 = arith.addf %407, %406 : vector<4x16xf32>
    %409 = arith.divf %407, %408 : vector<4x16xf32>
    %410 = vector.extract_strided_slice %391 {offsets = [0, 32], sizes = [4, 16], strides = [1, 1]} : vector<4x64xf32> to vector<4x16xf32>
    %411 = math.tanh %410 : vector<4x16xf32>
    %412 = vector.extract_strided_slice %391 {offsets = [0, 48], sizes = [4, 16], strides = [1, 1]} : vector<4x64xf32> to vector<4x16xf32>
    %413 = arith.negf %412 : vector<4x16xf32>
    %414 = math.exp %413 : vector<4x16xf32>
    %cst_87 = arith.constant 1.000000e+00 : f32
    %415 = vector.broadcast %cst_87 : f32 to vector<4x16xf32>
    %416 = arith.addf %415, %414 : vector<4x16xf32>
    %417 = arith.divf %415, %416 : vector<4x16xf32>
    %418 = arith.mulf %409, %344 : vector<4x16xf32>
    %419 = arith.mulf %403, %411 : vector<4x16xf32>
    %420 = arith.addf %418, %419 : vector<4x16xf32>
    %421 = math.tanh %420 : vector<4x16xf32>
    %422 = arith.mulf %417, %421 : vector<4x16xf32>
    %423 = vector.extract_strided_slice %397 {offsets = [0, 0], sizes = [4, 16], strides = [1, 1]} : vector<4x64xf32> to vector<4x16xf32>
    %424 = arith.negf %423 : vector<4x16xf32>
    %425 = math.exp %424 : vector<4x16xf32>
    %cst_88 = arith.constant 1.000000e+00 : f32
    %426 = vector.broadcast %cst_88 : f32 to vector<4x16xf32>
    %427 = arith.addf %426, %425 : vector<4x16xf32>
    %428 = arith.divf %426, %427 : vector<4x16xf32>
    %429 = vector.extract_strided_slice %397 {offsets = [0, 16], sizes = [4, 16], strides = [1, 1]} : vector<4x64xf32> to vector<4x16xf32>
    %430 = arith.negf %429 : vector<4x16xf32>
    %431 = math.exp %430 : vector<4x16xf32>
    %cst_89 = arith.constant 1.000000e+00 : f32
    %432 = vector.broadcast %cst_89 : f32 to vector<4x16xf32>
    %433 = arith.addf %432, %431 : vector<4x16xf32>
    %434 = arith.divf %432, %433 : vector<4x16xf32>
    %435 = vector.extract_strided_slice %397 {offsets = [0, 32], sizes = [4, 16], strides = [1, 1]} : vector<4x64xf32> to vector<4x16xf32>
    %436 = math.tanh %435 : vector<4x16xf32>
    %437 = vector.extract_strided_slice %397 {offsets = [0, 48], sizes = [4, 16], strides = [1, 1]} : vector<4x64xf32> to vector<4x16xf32>
    %438 = arith.negf %437 : vector<4x16xf32>
    %439 = math.exp %438 : vector<4x16xf32>
    %cst_90 = arith.constant 1.000000e+00 : f32
    %440 = vector.broadcast %cst_90 : f32 to vector<4x16xf32>
    %441 = arith.addf %440, %439 : vector<4x16xf32>
    %442 = arith.divf %440, %441 : vector<4x16xf32>
    %443 = arith.mulf %434, %369 : vector<4x16xf32>
    %444 = arith.mulf %428, %436 : vector<4x16xf32>
    %445 = arith.addf %443, %444 : vector<4x16xf32>
    %446 = math.tanh %445 : vector<4x16xf32>
    %447 = arith.mulf %442, %446 : vector<4x16xf32>
    %448 = arith.truncf %422 : vector<4x16xf32> to vector<4x16xbf16>
    %449 = arith.index_cast %c5_i32 : i32 to index
    %c0_91 = arith.constant 0 : index
    %c0_92 = arith.constant 0 : index
    %450 = vector.load %arg3[%449, %c0_91, %c0_92] : memref<8x4x32xbf16, #tpu.memory_space<vmem>>, vector<1x4x16xbf16>
    %451 = vector.shape_cast %450 : vector<1x4x16xbf16> to vector<4x16xbf16>
    %452 = vector.shape_cast %448 : vector<4x16xbf16> to vector<1x4x16xbf16>
    tpu.vector_store %arg3[%449, %c0_91, %c0_92], %452 {strides = array<i32>} : memref<8x4x32xbf16, #tpu.memory_space<vmem>>, vector<1x4x16xbf16>,
    %453 = arith.truncf %447 : vector<4x16xf32> to vector<4x16xbf16>
    %454 = arith.index_cast %383 : i32 to index
    %c0_93 = arith.constant 0 : index
    %c16_94 = arith.constant 16 : index
    %455 = vector.load %arg3[%454, %c0_93, %c16_94] : memref<8x4x32xbf16, #tpu.memory_space<vmem>>, vector<1x4x16xbf16>
    %456 = vector.shape_cast %455 : vector<1x4x16xbf16> to vector<4x16xbf16>
    %457 = vector.shape_cast %453 : vector<4x16xbf16> to vector<1x4x16xbf16>
    tpu.vector_store %arg3[%454, %c0_93, %c16_94], %457 {strides = array<i32>} : memref<8x4x32xbf16, #tpu.memory_space<vmem>>, vector<1x4x16xbf16>,
    %458 = tpu.concatenate %422, %447 in 1 : vector<4x16xf32>, vector<4x16xf32> -> vector<4x32xf32>
    %c6_i32 = arith.constant 6 : i32
    %c7_i32_95 = arith.constant 7 : i32
    %459 = arith.subi %c7_i32_95, %c6_i32 : i32
    %460 = arith.truncf %458 : vector<4x32xf32> to vector<4x32xbf16>
    %cst_96 = arith.constant dense<0.000000e+00> : vector<4x128xf32>
    %461 = tpu.matmul %460, %0, %cst_96 {dimension_numbers = #tpu.dot_dimension_numbers<[1], [0], [0], [1], [0, 0, 1, 1], [], []>} : vector<4x32xbf16>, vector<32x128xbf16>, vector<4x128xf32> -> vector<4x128xf32>
    %462 = arith.index_cast %c6_i32 : i32 to index
    %c0_97 = arith.constant 0 : index
    %c0_98 = arith.constant 0 : index
    %463 = vector.load %arg1[%462, %c0_97, %c0_98] : memref<8x4x128xbf16, #tpu.memory_space<vmem>>, vector<1x4x64xbf16>
    %464 = vector.shape_cast %463 : vector<1x4x64xbf16> to vector<4x64xbf16>
    %465 = arith.extf %464 : vector<4x64xbf16> to vector<4x64xf32>
    %466 = vector.extract_strided_slice %461 {offsets = [0, 0], sizes = [4, 64], strides = [1, 1]} : vector<4x128xf32> to vector<4x64xf32>
    %467 = arith.addf %465, %466 : vector<4x64xf32>
    %468 = arith.index_cast %459 : i32 to index
    %c0_99 = arith.constant 0 : index
    %c64_100 = arith.constant 64 : index
    %469 = vector.load %arg1[%468, %c0_99, %c64_100] : memref<8x4x128xbf16, #tpu.memory_space<vmem>>, vector<1x4x64xbf16>
    %470 = vector.shape_cast %469 : vector<1x4x64xbf16> to vector<4x64xbf16>
    %471 = arith.extf %470 : vector<4x64xbf16> to vector<4x64xf32>
    %472 = vector.extract_strided_slice %461 {offsets = [0, 64], sizes = [4, 64], strides = [1, 1]} : vector<4x128xf32> to vector<4x64xf32>
    %473 = arith.addf %471, %472 : vector<4x64xf32>
    %474 = vector.extract_strided_slice %467 {offsets = [0, 0], sizes = [4, 16], strides = [1, 1]} : vector<4x64xf32> to vector<4x16xf32>
    %475 = arith.negf %474 : vector<4x16xf32>
    %476 = math.exp %475 : vector<4x16xf32>
    %cst_101 = arith.constant 1.000000e+00 : f32
    %477 = vector.broadcast %cst_101 : f32 to vector<4x16xf32>
    %478 = arith.addf %477, %476 : vector<4x16xf32>
    %479 = arith.divf %477, %478 : vector<4x16xf32>
    %480 = vector.extract_strided_slice %467 {offsets = [0, 16], sizes = [4, 16], strides = [1, 1]} : vector<4x64xf32> to vector<4x16xf32>
    %481 = arith.negf %480 : vector<4x16xf32>
    %482 = math.exp %481 : vector<4x16xf32>
    %cst_102 = arith.constant 1.000000e+00 : f32
    %483 = vector.broadcast %cst_102 : f32 to vector<4x16xf32>
    %484 = arith.addf %483, %482 : vector<4x16xf32>
    %485 = arith.divf %483, %484 : vector<4x16xf32>
    %486 = vector.extract_strided_slice %467 {offsets = [0, 32], sizes = [4, 16], strides = [1, 1]} : vector<4x64xf32> to vector<4x16xf32>
    %487 = math.tanh %486 : vector<4x16xf32>
    %488 = vector.extract_strided_slice %467 {offsets = [0, 48], sizes = [4, 16], strides = [1, 1]} : vector<4x64xf32> to vector<4x16xf32>
    %489 = arith.negf %488 : vector<4x16xf32>
    %490 = math.exp %489 : vector<4x16xf32>
    %cst_103 = arith.constant 1.000000e+00 : f32
    %491 = vector.broadcast %cst_103 : f32 to vector<4x16xf32>
    %492 = arith.addf %491, %490 : vector<4x16xf32>
    %493 = arith.divf %491, %492 : vector<4x16xf32>
    %494 = arith.mulf %485, %420 : vector<4x16xf32>
    %495 = arith.mulf %479, %487 : vector<4x16xf32>
    %496 = arith.addf %494, %495 : vector<4x16xf32>
    %497 = math.tanh %496 : vector<4x16xf32>
    %498 = arith.mulf %493, %497 : vector<4x16xf32>
    %499 = vector.extract_strided_slice %473 {offsets = [0, 0], sizes = [4, 16], strides = [1, 1]} : vector<4x64xf32> to vector<4x16xf32>
    %500 = arith.negf %499 : vector<4x16xf32>
    %501 = math.exp %500 : vector<4x16xf32>
    %cst_104 = arith.constant 1.000000e+00 : f32
    %502 = vector.broadcast %cst_104 : f32 to vector<4x16xf32>
    %503 = arith.addf %502, %501 : vector<4x16xf32>
    %504 = arith.divf %502, %503 : vector<4x16xf32>
    %505 = vector.extract_strided_slice %473 {offsets = [0, 16], sizes = [4, 16], strides = [1, 1]} : vector<4x64xf32> to vector<4x16xf32>
    %506 = arith.negf %505 : vector<4x16xf32>
    %507 = math.exp %506 : vector<4x16xf32>
    %cst_105 = arith.constant 1.000000e+00 : f32
    %508 = vector.broadcast %cst_105 : f32 to vector<4x16xf32>
    %509 = arith.addf %508, %507 : vector<4x16xf32>
    %510 = arith.divf %508, %509 : vector<4x16xf32>
    %511 = vector.extract_strided_slice %473 {offsets = [0, 32], sizes = [4, 16], strides = [1, 1]} : vector<4x64xf32> to vector<4x16xf32>
    %512 = math.tanh %511 : vector<4x16xf32>
    %513 = vector.extract_strided_slice %473 {offsets = [0, 48], sizes = [4, 16], strides = [1, 1]} : vector<4x64xf32> to vector<4x16xf32>
    %514 = arith.negf %513 : vector<4x16xf32>
    %515 = math.exp %514 : vector<4x16xf32>
    %cst_106 = arith.constant 1.000000e+00 : f32
    %516 = vector.broadcast %cst_106 : f32 to vector<4x16xf32>
    %517 = arith.addf %516, %515 : vector<4x16xf32>
    %518 = arith.divf %516, %517 : vector<4x16xf32>
    %519 = arith.mulf %510, %445 : vector<4x16xf32>
    %520 = arith.mulf %504, %512 : vector<4x16xf32>
    %521 = arith.addf %519, %520 : vector<4x16xf32>
    %522 = math.tanh %521 : vector<4x16xf32>
    %523 = arith.mulf %518, %522 : vector<4x16xf32>
    %524 = arith.truncf %498 : vector<4x16xf32> to vector<4x16xbf16>
    %525 = arith.index_cast %c6_i32 : i32 to index
    %c0_107 = arith.constant 0 : index
    %c0_108 = arith.constant 0 : index
    %526 = vector.load %arg3[%525, %c0_107, %c0_108] : memref<8x4x32xbf16, #tpu.memory_space<vmem>>, vector<1x4x16xbf16>
    %527 = vector.shape_cast %526 : vector<1x4x16xbf16> to vector<4x16xbf16>
    %528 = vector.shape_cast %524 : vector<4x16xbf16> to vector<1x4x16xbf16>
    tpu.vector_store %arg3[%525, %c0_107, %c0_108], %528 {strides = array<i32>} : memref<8x4x32xbf16, #tpu.memory_space<vmem>>, vector<1x4x16xbf16>,
    %529 = arith.truncf %523 : vector<4x16xf32> to vector<4x16xbf16>
    %530 = arith.index_cast %459 : i32 to index
    %c0_109 = arith.constant 0 : index
    %c16_110 = arith.constant 16 : index
    %531 = vector.load %arg3[%530, %c0_109, %c16_110] : memref<8x4x32xbf16, #tpu.memory_space<vmem>>, vector<1x4x16xbf16>
    %532 = vector.shape_cast %531 : vector<1x4x16xbf16> to vector<4x16xbf16>
    %533 = vector.shape_cast %529 : vector<4x16xbf16> to vector<1x4x16xbf16>
    tpu.vector_store %arg3[%530, %c0_109, %c16_110], %533 {strides = array<i32>} : memref<8x4x32xbf16, #tpu.memory_space<vmem>>, vector<1x4x16xbf16>,
    %534 = tpu.concatenate %498, %523 in 1 : vector<4x16xf32>, vector<4x16xf32> -> vector<4x32xf32>
    %c7_i32_111 = arith.constant 7 : i32
    %c7_i32_112 = arith.constant 7 : i32
    %535 = arith.subi %c7_i32_112, %c7_i32_111 : i32
    %536 = arith.truncf %534 : vector<4x32xf32> to vector<4x32xbf16>
    %cst_113 = arith.constant dense<0.000000e+00> : vector<4x128xf32>
    %537 = tpu.matmul %536, %0, %cst_113 {dimension_numbers = #tpu.dot_dimension_numbers<[1], [0], [0], [1], [0, 0, 1, 1], [], []>} : vector<4x32xbf16>, vector<32x128xbf16>, vector<4x128xf32> -> vector<4x128xf32>
    %538 = arith.index_cast %c7_i32_111 : i32 to index
    %c0_114 = arith.constant 0 : index
    %c0_115 = arith.constant 0 : index
    %539 = vector.load %arg1[%538, %c0_114, %c0_115] : memref<8x4x128xbf16, #tpu.memory_space<vmem>>, vector<1x4x64xbf16>
    %540 = vector.shape_cast %539 : vector<1x4x64xbf16> to vector<4x64xbf16>
    %541 = arith.extf %540 : vector<4x64xbf16> to vector<4x64xf32>
    %542 = vector.extract_strided_slice %537 {offsets = [0, 0], sizes = [4, 64], strides = [1, 1]} : vector<4x128xf32> to vector<4x64xf32>
    %543 = arith.addf %541, %542 : vector<4x64xf32>
    %544 = arith.index_cast %535 : i32 to index
    %c0_116 = arith.constant 0 : index
    %c64_117 = arith.constant 64 : index
    %545 = vector.load %arg1[%544, %c0_116, %c64_117] : memref<8x4x128xbf16, #tpu.memory_space<vmem>>, vector<1x4x64xbf16>
    %546 = vector.shape_cast %545 : vector<1x4x64xbf16> to vector<4x64xbf16>
    %547 = arith.extf %546 : vector<4x64xbf16> to vector<4x64xf32>
    %548 = vector.extract_strided_slice %537 {offsets = [0, 64], sizes = [4, 64], strides = [1, 1]} : vector<4x128xf32> to vector<4x64xf32>
    %549 = arith.addf %547, %548 : vector<4x64xf32>
    %550 = vector.extract_strided_slice %543 {offsets = [0, 0], sizes = [4, 16], strides = [1, 1]} : vector<4x64xf32> to vector<4x16xf32>
    %551 = arith.negf %550 : vector<4x16xf32>
    %552 = math.exp %551 : vector<4x16xf32>
    %cst_118 = arith.constant 1.000000e+00 : f32
    %553 = vector.broadcast %cst_118 : f32 to vector<4x16xf32>
    %554 = arith.addf %553, %552 : vector<4x16xf32>
    %555 = arith.divf %553, %554 : vector<4x16xf32>
    %556 = vector.extract_strided_slice %543 {offsets = [0, 16], sizes = [4, 16], strides = [1, 1]} : vector<4x64xf32> to vector<4x16xf32>
    %557 = arith.negf %556 : vector<4x16xf32>
    %558 = math.exp %557 : vector<4x16xf32>
    %cst_119 = arith.constant 1.000000e+00 : f32
    %559 = vector.broadcast %cst_119 : f32 to vector<4x16xf32>
    %560 = arith.addf %559, %558 : vector<4x16xf32>
    %561 = arith.divf %559, %560 : vector<4x16xf32>
    %562 = vector.extract_strided_slice %543 {offsets = [0, 32], sizes = [4, 16], strides = [1, 1]} : vector<4x64xf32> to vector<4x16xf32>
    %563 = math.tanh %562 : vector<4x16xf32>
    %564 = vector.extract_strided_slice %543 {offsets = [0, 48], sizes = [4, 16], strides = [1, 1]} : vector<4x64xf32> to vector<4x16xf32>
    %565 = arith.negf %564 : vector<4x16xf32>
    %566 = math.exp %565 : vector<4x16xf32>
    %cst_120 = arith.constant 1.000000e+00 : f32
    %567 = vector.broadcast %cst_120 : f32 to vector<4x16xf32>
    %568 = arith.addf %567, %566 : vector<4x16xf32>
    %569 = arith.divf %567, %568 : vector<4x16xf32>
    %570 = arith.mulf %561, %496 : vector<4x16xf32>
    %571 = arith.mulf %555, %563 : vector<4x16xf32>
    %572 = arith.addf %570, %571 : vector<4x16xf32>
    %573 = math.tanh %572 : vector<4x16xf32>
    %574 = arith.mulf %569, %573 : vector<4x16xf32>
    %575 = vector.extract_strided_slice %549 {offsets = [0, 0], sizes = [4, 16], strides = [1, 1]} : vector<4x64xf32> to vector<4x16xf32>
    %576 = arith.negf %575 : vector<4x16xf32>
    %577 = math.exp %576 : vector<4x16xf32>
    %cst_121 = arith.constant 1.000000e+00 : f32
    %578 = vector.broadcast %cst_121 : f32 to vector<4x16xf32>
    %579 = arith.addf %578, %577 : vector<4x16xf32>
    %580 = arith.divf %578, %579 : vector<4x16xf32>
    %581 = vector.extract_strided_slice %549 {offsets = [0, 16], sizes = [4, 16], strides = [1, 1]} : vector<4x64xf32> to vector<4x16xf32>
    %582 = arith.negf %581 : vector<4x16xf32>
    %583 = math.exp %582 : vector<4x16xf32>
    %cst_122 = arith.constant 1.000000e+00 : f32
    %584 = vector.broadcast %cst_122 : f32 to vector<4x16xf32>
    %585 = arith.addf %584, %583 : vector<4x16xf32>
    %586 = arith.divf %584, %585 : vector<4x16xf32>
    %587 = vector.extract_strided_slice %549 {offsets = [0, 32], sizes = [4, 16], strides = [1, 1]} : vector<4x64xf32> to vector<4x16xf32>
    %588 = math.tanh %587 : vector<4x16xf32>
    %589 = vector.extract_strided_slice %549 {offsets = [0, 48], sizes = [4, 16], strides = [1, 1]} : vector<4x64xf32> to vector<4x16xf32>
    %590 = arith.negf %589 : vector<4x16xf32>
    %591 = math.exp %590 : vector<4x16xf32>
    %cst_123 = arith.constant 1.000000e+00 : f32
    %592 = vector.broadcast %cst_123 : f32 to vector<4x16xf32>
    %593 = arith.addf %592, %591 : vector<4x16xf32>
    %594 = arith.divf %592, %593 : vector<4x16xf32>
    %595 = arith.mulf %586, %521 : vector<4x16xf32>
    %596 = arith.mulf %580, %588 : vector<4x16xf32>
    %597 = arith.addf %595, %596 : vector<4x16xf32>
    %598 = math.tanh %597 : vector<4x16xf32>
    %599 = arith.mulf %594, %598 : vector<4x16xf32>
    %600 = arith.truncf %574 : vector<4x16xf32> to vector<4x16xbf16>
    %601 = arith.index_cast %c7_i32_111 : i32 to index
    %c0_124 = arith.constant 0 : index
    %c0_125 = arith.constant 0 : index
    %602 = vector.load %arg3[%601, %c0_124, %c0_125] : memref<8x4x32xbf16, #tpu.memory_space<vmem>>, vector<1x4x16xbf16>
    %603 = vector.shape_cast %602 : vector<1x4x16xbf16> to vector<4x16xbf16>
    %604 = vector.shape_cast %600 : vector<4x16xbf16> to vector<1x4x16xbf16>
    tpu.vector_store %arg3[%601, %c0_124, %c0_125], %604 {strides = array<i32>} : memref<8x4x32xbf16, #tpu.memory_space<vmem>>, vector<1x4x16xbf16>,
    %605 = arith.truncf %599 : vector<4x16xf32> to vector<4x16xbf16>
    %606 = arith.index_cast %535 : i32 to index
    %c0_126 = arith.constant 0 : index
    %c16_127 = arith.constant 16 : index
    %607 = vector.load %arg3[%606, %c0_126, %c16_127] : memref<8x4x32xbf16, #tpu.memory_space<vmem>>, vector<1x4x16xbf16>
    %608 = vector.shape_cast %607 : vector<1x4x16xbf16> to vector<4x16xbf16>
    %609 = vector.shape_cast %605 : vector<4x16xbf16> to vector<1x4x16xbf16>
    tpu.vector_store %arg3[%606, %c0_126, %c16_127], %609 {strides = array<i32>} : memref<8x4x32xbf16, #tpu.memory_space<vmem>>, vector<1x4x16xbf16>,
    %610 = tpu.concatenate %574, %599 in 1 : vector<4x16xf32>, vector<4x16xf32> -> vector<4x32xf32>
    %c8_i32 = arith.constant 8 : i32
    return
  }
  func.func @transform_0(%arg0: i32) -> (i32, i32, i32) {
    %c0_i32 = arith.constant 0 : i32
    %c0_i32_0 = arith.constant 0 : i32
    %c0_i32_1 = arith.constant 0 : i32
    %c0_i32_2 = arith.constant 0 : i32
    return %c0_i32, %c0_i32_0, %c0_i32_1 : i32, i32, i32
  }
  func.func @transform_1(%arg0: i32) -> (i32, i32) {
    %c0_i32 = arith.constant 0 : i32
    %c0_i32_0 = arith.constant 0 : i32
    %c0_i32_1 = arith.constant 0 : i32
    return %c0_i32, %c0_i32_0 : i32, i32
  }
  func.func @transform_2(%arg0: i32) -> (i32, i32, i32) {
    %c0_i32 = arith.constant 0 : i32
    %c0_i32_0 = arith.constant 0 : i32
    %c0_i32_1 = arith.constant 0 : i32
    %c0_i32_2 = arith.constant 0 : i32
    return %c0_i32, %c0_i32_0, %c0_i32_1 : i32, i32, i32
  }
}

module attributes {stable_mosaic.version = 11 : i64} {
  func.func @_attention_head_kernel(%arg0: i32, %arg1: memref<8x2x32xbf16, #tpu.memory_space<vmem>>, %arg2: memref<16x32xbf16, #tpu.memory_space<vmem>>, %arg3: memref<32x32xbf16, #tpu.memory_space<vmem>>, %arg4: memref<1x32xf32, #tpu.memory_space<vmem>>, %arg5: memref<32x32xbf16, #tpu.memory_space<vmem>>, %arg6: memref<1x32xf32, #tpu.memory_space<vmem>>, %arg7: memref<1x32xf32, #tpu.memory_space<vmem>>, %arg8: memref<1x1xf32, #tpu.memory_space<vmem>>, %arg9: memref<32x32xbf16, #tpu.memory_space<vmem>>, %arg10: memref<1x32xf32, #tpu.memory_space<vmem>>, %arg11: memref<32x32xbf16, #tpu.memory_space<vmem>>, %arg12: memref<1x32xf32, #tpu.memory_space<vmem>>, %arg13: memref<2x32xf32, #tpu.memory_space<vmem>>, %arg14: memref<2x1xf32, #tpu.memory_space<vmem>>) attributes {dimension_semantics = [#tpu.dimension_semantics<arbitrary>], iteration_bounds = array<i64: 1>, scalar_prefetch = 0 : i64, scratch_operands = 0 : i64, tpu.core_type = #tpu.core_type<tc>, window_params = [{pipeline_mode = #tpu.pipeline_mode<synchronous>, transform_indices = @transform_0, window_bounds = array<i64: 8, 2, 32>}, {pipeline_mode = #tpu.pipeline_mode<synchronous>, transform_indices = @transform_1, window_bounds = array<i64: 16, 32>}, {pipeline_mode = #tpu.pipeline_mode<synchronous>, transform_indices = @transform_2, window_bounds = array<i64: 32, 32>}, {pipeline_mode = #tpu.pipeline_mode<synchronous>, transform_indices = @transform_3, window_bounds = array<i64: 1, 32>}, {pipeline_mode = #tpu.pipeline_mode<synchronous>, transform_indices = @transform_4, window_bounds = array<i64: 32, 32>}, {pipeline_mode = #tpu.pipeline_mode<synchronous>, transform_indices = @transform_5, window_bounds = array<i64: 1, 32>}, {pipeline_mode = #tpu.pipeline_mode<synchronous>, transform_indices = @transform_6, window_bounds = array<i64: 1, 32>}, {pipeline_mode = #tpu.pipeline_mode<synchronous>, transform_indices = @transform_7, window_bounds = array<i64: 1, 1>}, {pipeline_mode = #tpu.pipeline_mode<synchronous>, transform_indices = @transform_8, window_bounds = array<i64: 32, 32>}, {pipeline_mode = #tpu.pipeline_mode<synchronous>, transform_indices = @transform_9, window_bounds = array<i64: 1, 32>}, {pipeline_mode = #tpu.pipeline_mode<synchronous>, transform_indices = @transform_10, window_bounds = array<i64: 32, 32>}, {pipeline_mode = #tpu.pipeline_mode<synchronous>, transform_indices = @transform_11, window_bounds = array<i64: 1, 32>}, {pipeline_mode = #tpu.pipeline_mode<synchronous>, transform_indices = @transform_12, window_bounds = array<i64: 2, 32>}, {pipeline_mode = #tpu.pipeline_mode<synchronous>, transform_indices = @transform_13, window_bounds = array<i64: 2, 1>}]} {
    %c0 = arith.constant 0 : index
    %c0_0 = arith.constant 0 : index
    %c0_1 = arith.constant 0 : index
    %0 = vector.load %arg1[%c0, %c0_0, %c0_1] : memref<8x2x32xbf16, #tpu.memory_space<vmem>>, vector<8x2x32xbf16>
    %1 = arith.extf %0 : vector<8x2x32xbf16> to vector<8x2x32xf32>
    %cst = arith.constant dense<0.000000e+00> : vector<2x32xf32>
    %2 = vector.multi_reduction <add>, %1, %cst [0] : vector<8x2x32xf32> to vector<2x32xf32>
    %cst_2 = arith.constant 8.000000e+00 : f32
    %3 = vector.broadcast %cst_2 : f32 to vector<2x32xf32>
    %4 = arith.divf %2, %3 : vector<2x32xf32>
    %5 = arith.truncf %4 : vector<2x32xf32> to vector<2x32xbf16>
    %c0_3 = arith.constant 0 : index
    %c0_4 = arith.constant 0 : index
    %6 = vector.load %arg5[%c0_3, %c0_4] : memref<32x32xbf16, #tpu.memory_space<vmem>>, vector<32x32xbf16>
    %cst_5 = arith.constant dense<0.000000e+00> : vector<2x32xf32>
    %7 = tpu.matmul %5, %6, %cst_5 {dimension_numbers = #tpu.dot_dimension_numbers<[1], [0], [0], [1], [0, 0, 1, 1], [], []>} : vector<2x32xbf16>, vector<32x32xbf16>, vector<2x32xf32> -> vector<2x32xf32>
    %c0_6 = arith.constant 0 : index
    %c0_7 = arith.constant 0 : index
    %8 = vector.load %arg6[%c0_6, %c0_7] : memref<1x32xf32, #tpu.memory_space<vmem>>, vector<1x32xf32>
    %9 = vector.broadcast %8 : vector<1x32xf32> to vector<2x32xf32>
    %10 = arith.addf %7, %9 : vector<2x32xf32>
    %c0_8 = arith.constant 0 : index
    %c0_9 = arith.constant 0 : index
    %11 = vector.load %arg4[%c0_8, %c0_9] : memref<1x32xf32, #tpu.memory_space<vmem>>, vector<1x32xf32>
    %12 = vector.broadcast %11 : vector<1x32xf32> to vector<2x32xf32>
    %13 = arith.addf %10, %12 : vector<2x32xf32>
    %14 = tpu.iota {dimensions = array<i32: 0>} : vector<16x2xi32>
    %c2_i32 = arith.constant 2 : i32
    %c0_i32 = arith.constant 0 : i32
    %15 = arith.cmpi eq, %c2_i32, %c0_i32 : i32
    %c1_i32 = arith.constant 1 : i32
    %16 = arith.select %15, %c1_i32, %c2_i32 : i32
    %17 = vector.broadcast %16 : i32 to vector<16x2xi32>
    %18 = arith.remsi %14, %17 : vector<16x2xi32>
    %c0_i32_10 = arith.constant 0 : i32
    %19 = vector.broadcast %c0_i32_10 : i32 to vector<16x2xi32>
    %20 = arith.cmpi ne, %18, %19 : vector<16x2xi32>
    %c0_i32_11 = arith.constant 0 : i32
    %21 = vector.broadcast %c0_i32_11 : i32 to vector<16x2xi32>
    %22 = arith.cmpi slt, %18, %21 : vector<16x2xi32>
    %c0_i32_12 = arith.constant 0 : i32
    %23 = arith.cmpi slt, %16, %c0_i32_12 : i32
    %24 = vector.broadcast %23 : i1 to vector<16x2xi1>
    %25 = vector.broadcast %24 : vector<16x2xi1> to vector<16x2xi1>
    %26 = arith.xori %22, %25 : vector<16x2xi1>
    %27 = arith.andi %26, %20 : vector<16x2xi1>
    %28 = vector.broadcast %16 : i32 to vector<16x2xi32>
    %29 = arith.addi %18, %28 : vector<16x2xi32>
    %30 = arith.select %27, %29, %18 : vector<16x2xi1>, vector<16x2xi32>
    %31 = tpu.iota {dimensions = array<i32: 1>} : vector<16x2xi32>
    %32 = arith.cmpi eq, %30, %31 : vector<16x2xi32>
    %33 = arith.extui %32 : vector<16x2xi1> to vector<16x2xi32>
    %34 = arith.sitofp %33 : vector<16x2xi32> to vector<16x2xf32>
    %35 = tpu.iota {dimensions = array<i32: 0>} : vector<2x16xi32>
    %36 = tpu.iota {dimensions = array<i32: 1>} : vector<2x16xi32>
    %c2_i32_13 = arith.constant 2 : i32
    %c0_i32_14 = arith.constant 0 : i32
    %37 = arith.cmpi eq, %c2_i32_13, %c0_i32_14 : i32
    %c1_i32_15 = arith.constant 1 : i32
    %38 = arith.select %37, %c1_i32_15, %c2_i32_13 : i32
    %39 = vector.broadcast %38 : i32 to vector<2x16xi32>
    %40 = arith.remsi %36, %39 : vector<2x16xi32>
    %c0_i32_16 = arith.constant 0 : i32
    %41 = vector.broadcast %c0_i32_16 : i32 to vector<2x16xi32>
    %42 = arith.cmpi ne, %40, %41 : vector<2x16xi32>
    %c0_i32_17 = arith.constant 0 : i32
    %43 = vector.broadcast %c0_i32_17 : i32 to vector<2x16xi32>
    %44 = arith.cmpi slt, %40, %43 : vector<2x16xi32>
    %c0_i32_18 = arith.constant 0 : i32
    %45 = arith.cmpi slt, %38, %c0_i32_18 : i32
    %46 = vector.broadcast %45 : i1 to vector<2x16xi1>
    %47 = vector.broadcast %46 : vector<2x16xi1> to vector<2x16xi1>
    %48 = arith.xori %44, %47 : vector<2x16xi1>
    %49 = arith.andi %48, %42 : vector<2x16xi1>
    %50 = vector.broadcast %38 : i32 to vector<2x16xi32>
    %51 = arith.addi %40, %50 : vector<2x16xi32>
    %52 = arith.select %49, %51, %40 : vector<2x16xi1>, vector<2x16xi32>
    %53 = arith.cmpi eq, %35, %52 : vector<2x16xi32>
    %54 = arith.extui %53 : vector<2x16xi1> to vector<2x16xi32>
    %55 = arith.sitofp %54 : vector<2x16xi32> to vector<2x16xf32>
    %c0_19 = arith.constant 0 : index
    %c0_20 = arith.constant 0 : index
    %56 = vector.load %arg2[%c0_19, %c0_20] : memref<16x32xbf16, #tpu.memory_space<vmem>>, vector<16x32xbf16>
    %c0_21 = arith.constant 0 : index
    %c0_22 = arith.constant 0 : index
    %57 = vector.load %arg3[%c0_21, %c0_22] : memref<32x32xbf16, #tpu.memory_space<vmem>>, vector<32x32xbf16>
    %cst_23 = arith.constant dense<0.000000e+00> : vector<16x32xf32>
    %58 = tpu.matmul %56, %57, %cst_23 {dimension_numbers = #tpu.dot_dimension_numbers<[1], [0], [0], [1], [0, 0, 1, 1], [], []>} : vector<16x32xbf16>, vector<32x32xbf16>, vector<16x32xf32> -> vector<16x32xf32>
    %cst_24 = arith.constant dense<0.000000e+00> : vector<16x32xf32>
    %59 = tpu.matmul %34, %13, %cst_24 {dimension_numbers = #tpu.dot_dimension_numbers<[1], [0], [0], [1], [0, 0, 1, 1], [], []>} : vector<16x2xf32>, vector<2x32xf32>, vector<16x32xf32> -> vector<16x32xf32>
    %60 = arith.addf %58, %59 : vector<16x32xf32>
    %61 = math.tanh %60 : vector<16x32xf32>
    %c0_25 = arith.constant 0 : index
    %c0_26 = arith.constant 0 : index
    %62 = vector.load %arg7[%c0_25, %c0_26] : memref<1x32xf32, #tpu.memory_space<vmem>>, vector<1x32xf32>
    %63 = vector.broadcast %62 : vector<1x32xf32> to vector<16x32xf32>
    %64 = arith.mulf %61, %63 : vector<16x32xf32>
    %cst_27 = arith.constant dense<0.000000e+00> : vector<16xf32>
    %65 = vector.multi_reduction <add>, %64, %cst_27 [1] : vector<16x32xf32> to vector<16xf32>
    %66 = vector.shape_cast %65 : vector<16xf32> to vector<16x1xf32>
    %c0_28 = arith.constant 0 : index
    %c0_29 = arith.constant 0 : index
    %67 = vector.load %arg8[%c0_28, %c0_29] : memref<1x1xf32, #tpu.memory_space<vmem>>, vector<1x1xf32>
    %68 = vector.broadcast %67 : vector<1x1xf32> to vector<16x1xf32>
    %69 = arith.addf %66, %68 : vector<16x1xf32>
    %cst_30 = arith.constant -1.000000e+30 : f32
    %70 = vector.shape_cast %69 : vector<16x1xf32> to vector<16x1xf32>
    %71 = vector.broadcast %70 : vector<16x1xf32> to vector<16x2xf32>
    %72 = vector.broadcast %cst_30 : f32 to vector<16x2xf32>
    %73 = arith.select %32, %71, %72 : vector<16x2xi1>, vector<16x2xf32>
    %cst_31 = arith.constant dense<0xFF800000> : vector<2xf32>
    %74 = vector.multi_reduction <maximumf>, %73, %cst_31 [0] : vector<16x2xf32> to vector<2xf32>
    %75 = vector.shape_cast %74 : vector<2xf32> to vector<1x2xf32>
    %cst_32 = arith.constant 0.000000e+00 : f32
    %76 = vector.shape_cast %75 : vector<1x2xf32> to vector<1x2xf32>
    %77 = vector.broadcast %76 : vector<1x2xf32> to vector<16x2xf32>
    %78 = vector.broadcast %cst_32 : f32 to vector<16x2xf32>
    %79 = arith.select %32, %77, %78 : vector<16x2xi1>, vector<16x2xf32>
    %cst_33 = arith.constant dense<0.000000e+00> : vector<16xf32>
    %80 = vector.multi_reduction <add>, %79, %cst_33 [1] : vector<16x2xf32> to vector<16xf32>
    %81 = vector.shape_cast %80 : vector<16xf32> to vector<16x1xf32>
    %82 = arith.subf %69, %81 : vector<16x1xf32>
    %83 = math.exp %82 : vector<16x1xf32>
    %cst_34 = arith.constant 0.000000e+00 : f32
    %84 = vector.shape_cast %83 : vector<16x1xf32> to vector<16x1xf32>
    %85 = vector.broadcast %84 : vector<16x1xf32> to vector<16x2xf32>
    %86 = vector.broadcast %cst_34 : f32 to vector<16x2xf32>
    %87 = arith.select %32, %85, %86 : vector<16x2xi1>, vector<16x2xf32>
    %cst_35 = arith.constant dense<0.000000e+00> : vector<2xf32>
    %88 = vector.multi_reduction <add>, %87, %cst_35 [0] : vector<16x2xf32> to vector<2xf32>
    %89 = vector.shape_cast %88 : vector<2xf32> to vector<1x2xf32>
    %cst_36 = arith.constant 0.000000e+00 : f32
    %90 = vector.shape_cast %89 : vector<1x2xf32> to vector<1x2xf32>
    %91 = vector.broadcast %90 : vector<1x2xf32> to vector<16x2xf32>
    %92 = vector.broadcast %cst_36 : f32 to vector<16x2xf32>
    %93 = arith.select %32, %91, %92 : vector<16x2xi1>, vector<16x2xf32>
    %cst_37 = arith.constant dense<0.000000e+00> : vector<16xf32>
    %94 = vector.multi_reduction <add>, %93, %cst_37 [1] : vector<16x2xf32> to vector<16xf32>
    %95 = vector.shape_cast %94 : vector<16xf32> to vector<16x1xf32>
    %96 = arith.divf %83, %95 : vector<16x1xf32>
    %97 = arith.extf %56 : vector<16x32xbf16> to vector<16x32xf32>
    %98 = vector.broadcast %96 : vector<16x1xf32> to vector<16x32xf32>
    %99 = arith.mulf %98, %97 : vector<16x32xf32>
    %cst_38 = arith.constant dense<0.000000e+00> : vector<2x32xf32>
    %100 = tpu.matmul %55, %99, %cst_38 {dimension_numbers = #tpu.dot_dimension_numbers<[1], [0], [0], [1], [0, 0, 1, 1], [], []>} : vector<2x16xf32>, vector<16x32xf32>, vector<2x32xf32> -> vector<2x32xf32>
    %cst_39 = arith.constant 1.250000e-01 : f32
    %101 = vector.broadcast %cst_39 : f32 to vector<2x32xf32>
    %102 = arith.mulf %100, %101 : vector<2x32xf32>
    %103 = arith.truncf %4 : vector<2x32xf32> to vector<2x32xbf16>
    %c0_40 = arith.constant 0 : index
    %c0_41 = arith.constant 0 : index
    %104 = vector.load %arg9[%c0_40, %c0_41] : memref<32x32xbf16, #tpu.memory_space<vmem>>, vector<32x32xbf16>
    %cst_42 = arith.constant dense<0.000000e+00> : vector<2x32xf32>
    %105 = tpu.matmul %103, %104, %cst_42 {dimension_numbers = #tpu.dot_dimension_numbers<[1], [0], [0], [1], [0, 0, 1, 1], [], []>} : vector<2x32xbf16>, vector<32x32xbf16>, vector<2x32xf32> -> vector<2x32xf32>
    %c0_43 = arith.constant 0 : index
    %c0_44 = arith.constant 0 : index
    %106 = vector.load %arg10[%c0_43, %c0_44] : memref<1x32xf32, #tpu.memory_space<vmem>>, vector<1x32xf32>
    %107 = vector.broadcast %106 : vector<1x32xf32> to vector<2x32xf32>
    %108 = arith.addf %105, %107 : vector<2x32xf32>
    %109 = arith.truncf %102 : vector<2x32xf32> to vector<2x32xbf16>
    %c0_45 = arith.constant 0 : index
    %c0_46 = arith.constant 0 : index
    %110 = vector.load %arg11[%c0_45, %c0_46] : memref<32x32xbf16, #tpu.memory_space<vmem>>, vector<32x32xbf16>
    %cst_47 = arith.constant dense<0.000000e+00> : vector<2x32xf32>
    %111 = tpu.matmul %109, %110, %cst_47 {dimension_numbers = #tpu.dot_dimension_numbers<[1], [0], [0], [1], [0, 0, 1, 1], [], []>} : vector<2x32xbf16>, vector<32x32xbf16>, vector<2x32xf32> -> vector<2x32xf32>
    %112 = arith.addf %108, %111 : vector<2x32xf32>
    %c0_48 = arith.constant 0 : index
    %c0_49 = arith.constant 0 : index
    %113 = vector.load %arg12[%c0_48, %c0_49] : memref<1x32xf32, #tpu.memory_space<vmem>>, vector<1x32xf32>
    %114 = vector.broadcast %113 : vector<1x32xf32> to vector<2x32xf32>
    %115 = arith.addf %112, %114 : vector<2x32xf32>
    %116 = math.tanh %115 : vector<2x32xf32>
    %cst_50 = arith.constant dense<0xFF800000> : vector<2xf32>
    %117 = vector.multi_reduction <maximumf>, %116, %cst_50 [1] : vector<2x32xf32> to vector<2xf32>
    %118 = vector.shape_cast %117 : vector<2xf32> to vector<2x1xf32>
    %119 = vector.broadcast %118 : vector<2x1xf32> to vector<2x32xf32>
    %120 = arith.subf %116, %119 : vector<2x32xf32>
    %121 = math.exp %120 : vector<2x32xf32>
    %cst_51 = arith.constant dense<0.000000e+00> : vector<2xf32>
    %122 = vector.multi_reduction <add>, %121, %cst_51 [1] : vector<2x32xf32> to vector<2xf32>
    %123 = vector.shape_cast %122 : vector<2xf32> to vector<2x1xf32>
    %124 = vector.broadcast %123 : vector<2x1xf32> to vector<2x32xf32>
    %125 = arith.divf %121, %124 : vector<2x32xf32>
    %c0_52 = arith.constant 0 : index
    %c0_53 = arith.constant 0 : index
    %126 = vector.load %arg13[%c0_52, %c0_53] : memref<2x32xf32, #tpu.memory_space<vmem>>, vector<2x32xf32>
    tpu.vector_store %arg13[%c0_52, %c0_53], %125 {strides = array<i32>} : memref<2x32xf32, #tpu.memory_space<vmem>>, vector<2x32xf32>,
    %127 = arith.mulf %4, %102 : vector<2x32xf32>
    %cst_54 = arith.constant dense<0.000000e+00> : vector<2xf32>
    %128 = vector.multi_reduction <add>, %127, %cst_54 [1] : vector<2x32xf32> to vector<2xf32>
    %129 = vector.shape_cast %128 : vector<2xf32> to vector<2x1xf32>
    %130 = arith.mulf %4, %4 : vector<2x32xf32>
    %cst_55 = arith.constant dense<0.000000e+00> : vector<2xf32>
    %131 = vector.multi_reduction <add>, %130, %cst_55 [1] : vector<2x32xf32> to vector<2xf32>
    %132 = vector.shape_cast %131 : vector<2xf32> to vector<2x1xf32>
    %133 = math.sqrt %132 : vector<2x1xf32>
    %cst_56 = arith.constant 9.99999993E-9 : f32
    %134 = vector.broadcast %cst_56 : f32 to vector<2x1xf32>
    %135 = arith.maximumf %133, %134 : vector<2x1xf32>
    %136 = arith.mulf %102, %102 : vector<2x32xf32>
    %cst_57 = arith.constant dense<0.000000e+00> : vector<2xf32>
    %137 = vector.multi_reduction <add>, %136, %cst_57 [1] : vector<2x32xf32> to vector<2xf32>
    %138 = vector.shape_cast %137 : vector<2xf32> to vector<2x1xf32>
    %139 = math.sqrt %138 : vector<2x1xf32>
    %cst_58 = arith.constant 9.99999993E-9 : f32
    %140 = vector.broadcast %cst_58 : f32 to vector<2x1xf32>
    %141 = arith.maximumf %139, %140 : vector<2x1xf32>
    %142 = arith.mulf %135, %141 : vector<2x1xf32>
    %143 = arith.divf %129, %142 : vector<2x1xf32>
    %c0_59 = arith.constant 0 : index
    %c0_60 = arith.constant 0 : index
    %144 = vector.load %arg14[%c0_59, %c0_60] : memref<2x1xf32, #tpu.memory_space<vmem>>, vector<2x1xf32>
    tpu.vector_store %arg14[%c0_59, %c0_60], %143 {strides = array<i32>} : memref<2x1xf32, #tpu.memory_space<vmem>>, vector<2x1xf32>,
    return
  }
  func.func @transform_0(%arg0: i32) -> (i32, i32, i32) {
    %c0_i32 = arith.constant 0 : i32
    %c0_i32_0 = arith.constant 0 : i32
    %c0_i32_1 = arith.constant 0 : i32
    %c0_i32_2 = arith.constant 0 : i32
    return %c0_i32, %c0_i32_0, %c0_i32_1 : i32, i32, i32
  }
  func.func @transform_1(%arg0: i32) -> (i32, i32) {
    %c0_i32 = arith.constant 0 : i32
    %c0_i32_0 = arith.constant 0 : i32
    %c0_i32_1 = arith.constant 0 : i32
    return %c0_i32, %c0_i32_0 : i32, i32
  }
  func.func @transform_2(%arg0: i32) -> (i32, i32) {
    %c0_i32 = arith.constant 0 : i32
    %c0_i32_0 = arith.constant 0 : i32
    %c0_i32_1 = arith.constant 0 : i32
    return %c0_i32, %c0_i32_0 : i32, i32
  }
  func.func @transform_3(%arg0: i32) -> (i32, i32) {
    %c0_i32 = arith.constant 0 : i32
    %c0_i32_0 = arith.constant 0 : i32
    %c0_i32_1 = arith.constant 0 : i32
    return %c0_i32, %c0_i32_0 : i32, i32
  }
  func.func @transform_4(%arg0: i32) -> (i32, i32) {
    %c0_i32 = arith.constant 0 : i32
    %c0_i32_0 = arith.constant 0 : i32
    %c0_i32_1 = arith.constant 0 : i32
    return %c0_i32, %c0_i32_0 : i32, i32
  }
  func.func @transform_5(%arg0: i32) -> (i32, i32) {
    %c0_i32 = arith.constant 0 : i32
    %c0_i32_0 = arith.constant 0 : i32
    %c0_i32_1 = arith.constant 0 : i32
    return %c0_i32, %c0_i32_0 : i32, i32
  }
  func.func @transform_6(%arg0: i32) -> (i32, i32) {
    %c0_i32 = arith.constant 0 : i32
    %c0_i32_0 = arith.constant 0 : i32
    %c0_i32_1 = arith.constant 0 : i32
    return %c0_i32, %c0_i32_0 : i32, i32
  }
  func.func @transform_7(%arg0: i32) -> (i32, i32) {
    %c0_i32 = arith.constant 0 : i32
    %c0_i32_0 = arith.constant 0 : i32
    %c0_i32_1 = arith.constant 0 : i32
    return %c0_i32, %c0_i32_0 : i32, i32
  }
  func.func @transform_8(%arg0: i32) -> (i32, i32) {
    %c0_i32 = arith.constant 0 : i32
    %c0_i32_0 = arith.constant 0 : i32
    %c0_i32_1 = arith.constant 0 : i32
    return %c0_i32, %c0_i32_0 : i32, i32
  }
  func.func @transform_9(%arg0: i32) -> (i32, i32) {
    %c0_i32 = arith.constant 0 : i32
    %c0_i32_0 = arith.constant 0 : i32
    %c0_i32_1 = arith.constant 0 : i32
    return %c0_i32, %c0_i32_0 : i32, i32
  }
  func.func @transform_10(%arg0: i32) -> (i32, i32) {
    %c0_i32 = arith.constant 0 : i32
    %c0_i32_0 = arith.constant 0 : i32
    %c0_i32_1 = arith.constant 0 : i32
    return %c0_i32, %c0_i32_0 : i32, i32
  }
  func.func @transform_11(%arg0: i32) -> (i32, i32) {
    %c0_i32 = arith.constant 0 : i32
    %c0_i32_0 = arith.constant 0 : i32
    %c0_i32_1 = arith.constant 0 : i32
    return %c0_i32, %c0_i32_0 : i32, i32
  }
  func.func @transform_12(%arg0: i32) -> (i32, i32) {
    %c0_i32 = arith.constant 0 : i32
    %c0_i32_0 = arith.constant 0 : i32
    %c0_i32_1 = arith.constant 0 : i32
    return %c0_i32, %c0_i32_0 : i32, i32
  }
  func.func @transform_13(%arg0: i32) -> (i32, i32) {
    %c0_i32 = arith.constant 0 : i32
    %c0_i32_0 = arith.constant 0 : i32
    %c0_i32_1 = arith.constant 0 : i32
    return %c0_i32, %c0_i32_0 : i32, i32
  }
}

</mosaic_0001>

<llo_original>
// kernel: _lambda_.3
$region0: #{_lambda_.3}
  #allocation0 [shape = 'u32[]', space=smem, size = 0x4, offset = 0x4, fixed_abs, tag = 'smem constant byte address 0x4 - core index']
  #allocation1 [shape = 'u32[144,128]{1,0:T(1,128)}', space=vmem, size = 0x12000, scoped, tag = 'internal scratch']
  %s0 = inlined_call_operand.vmem [shape: bf16[32,32], index: 0, kind: input, shape index: {}]
  %s1 = inlined_call_operand.vmem [shape: bf16[32,128], index: 1, kind: input, shape index: {}]
  %s2 = inlined_call_operand.vmem [shape: f32[1,128], index: 2, kind: input, shape index: {}]
  %s3 = inlined_call_operand.vmem [shape: bf16[32,128], index: 3, kind: output, shape index: {}]
  %s4 = sld [smem:[#allocation0]]
  $region22: #{_lambda_.3} parent=0
    _
  %s6 = ssub.s32 1, %s4
  %s7 = scalar_select 0, %s6, %s4
  // Predicated region
  $region2: #{_lambda_.3} parent=0 // pred_check
    _
  $region3: #{_lambda_.3} parent=0 // pred_check_branch
    %9 = sbr.rel (0) target = $region5
  $region4: #{_lambda_.3} parent=0 // pred_region
    _
  $region5: #{_lambda_.3} parent=0 // pred_fallthru
    _
  // Predicated region
  $region6: #{_lambda_.3} parent=0 // pred_check
    _
  $region7: #{_lambda_.3} parent=0 // pred_check_branch
    %11 = sbr.rel (0) target = $region9
  $region8: #{_lambda_.3} parent=0 // pred_region
    _
  $region9: #{_lambda_.3} parent=0 // pred_fallthru
    _
  // Predicated region
  $region10: #{_lambda_.3} parent=0 // pred_check
    _
  $region11: #{_lambda_.3} parent=0 // pred_check_branch
    %13 = sbr.rel (0) target = $region13
  $region12: #{_lambda_.3} parent=0 // pred_region
    _
  $region13: #{_lambda_.3} parent=0 // pred_fallthru
    _
  %v15 = vld [vmem:[%s0] sm:$0xf]
  %v16 = vld [vmem:[%s0 + $0x4] sm:$0xf]
  %v17 = vld [vmem:[%s0 + $0x8] sm:$0xf]
  %v18 = vld [vmem:[%s0 + $0xc] sm:$0xf]
  %v19 = vld [vmem:[%s1] sm:$0xf]
  %v20 = vld [vmem:[%s1 + $0x4] sm:$0xf]
  %v21 = vld [vmem:[%s1 + $0x8] sm:$0xf]
  %v22 = vld [vmem:[%s1 + $0xc] sm:$0xf]
  %v23 = vld [vmem:[%s2] sm:$0x1]
  %v25 = vlaneseq
  %v26 = vshrl.u32 %v25, 7
  %v27 = vsub.s32 0, %v26
  %v28 = vrot.slane %v23, %v27
  %v34 = vunpack.c.l.b16 %v15
  %v35 = vunpack.c.l.b16 %v16
  %v36 = vunpack.c.l.b16 %v17
  %v37 = vunpack.c.l.b16 %v18
  %v38 = vpack.c.b16 %v35, %v34
  %v39 = vpack.c.b16 %v37, %v36
  %v44 = vunpack.c.l.b16 %v19
  %v45 = vunpack.c.l.b16 %v20
  %v46 = vunpack.c.l.b16 %v21
  %v47 = vunpack.c.l.b16 %v22
  %v48 = vpack.c.b16 %v45, %v44
  %v49 = vpack.c.b16 %v47, %v46
  %vm52 = vcmask 261120
  %v54 = vsel %vm52, %v38, 0
  %v57 = vsel %vm52, %v39, 0
  %59 = vmatprep.subr.bf16.mxu0 0
  %60 = vmatpush1.bf16.msra.mxu0 %v48
  %61 = vmatprep.subr.bf16.mxu0 0
  %62 = vmatpush1.bf16.msra.mxu0 %v49
  %63 = vmatprep.subr.bf16.mxu0 0
  %64 = vmatpush1.bf16.msra.mxu0 0
  %65 = vmatprep.subr.bf16.mxu0 0
  %66 = vmatpush1.bf16.msra.mxu0 0
  %67 = vmatprep.subr.bf16.mxu0 0
  %68 = vmatpush1.bf16.msra.mxu0 0
  %69 = vmatprep.subr.bf16.mxu0 0
  %70 = vmatpush1.bf16.msra.mxu0 0
  %71 = vmatprep.subr.bf16.mxu0 0
  %72 = vmatpush1.bf16.msra.mxu0 0
  %73 = vmatprep.subr.bf16.mxu0 0
  %74 = vmatpush1.bf16.msra.mxu0 0
  %75 = vmatprep.subr.bf16.mxu0 0
  %76 = vmatpush1.bf16.msra.mxu0 0
  %77 = vmatprep.subr.bf16.mxu0 0
  %78 = vmatpush1.bf16.msra.mxu0 0
  %79 = vmatprep.subr.bf16.mxu0 0
  %80 = vmatpush1.bf16.msra.mxu0 0
  %81 = vmatprep.subr.bf16.mxu0 0
  %82 = vmatpush1.bf16.msra.mxu0 0
  %83 = vmatprep.subr.bf16.mxu0 0
  %84 = vmatpush1.bf16.msra.mxu0 0
  %85 = vmatprep.subr.bf16.mxu0 0
  %86 = vmatpush1.bf16.msra.mxu0 0
  %87 = vmatprep.subr.bf16.mxu0 0
  %88 = vmatpush1.bf16.msra.mxu0 0
  %89 = vmatprep.subr.bf16.mxu0 0
  %90 = vmatpush1.bf16.msra.mxu0 0
  %91 = vmatprep.mubr.bf16.mxu0 0
  %92 = vmatmul.mubr.bf16.gmra.mrb[0].mxu0 %v54
  %v93 = vpop.f32.mrb[0].mxu0
  %v94 = vadd.f32 %v28, %v93
  %v95 = vpop.f32.mrb[0].mxu0
  %v96 = vpop.f32.mrb[0].mxu0
  %v97 = vadd.f32 %v28, %v96
  %v98 = vpop.f32.mrb[0].mxu0
  %99 = vmatprep.mubr.bf16.mxu0 0
  %100 = vmatmul.mubr.bf16.gmra.mrb[0].mxu0 %v57
  %v101 = vpop.f32.mrb[0].mxu0
  %v102 = vadd.f32 %v28, %v101
  %v103 = vpop.f32.mrb[0].mxu0
  %v104 = vpop.f32.mrb[0].mxu0
  %v105 = vadd.f32 %v28, %v104
  %v106 = vpop.f32.mrb[0].mxu0
  %107 = vdwg.mxu0
  %v108 = vpack.c.bf16 %v97, %v94
  %v109 = vpack.c.bf16 %v105, %v102
  %v112 = vunpack.c.l.b16 %v108
  %v113 = vunpack.c.h.b16 %v108
  %v114 = vunpack.c.l.b16 %v109
  %v115 = vunpack.c.h.b16 %v109
  %v116 = vpack.c.b16 %v112, %v112
  %v117 = vpack.c.b16 %v113, %v113
  %v118 = vpack.c.b16 %v114, %v114
  %v119 = vpack.c.b16 %v115, %v115
  %124 = vst [vmem:[%s3] sm:$0xf] %v116
  %125 = vst [vmem:[%s3 + $0x4] sm:$0xf] %v117
  %126 = vst [vmem:[%s3 + $0x8] sm:$0xf] %v118
  %127 = vst [vmem:[%s3 + $0xc] sm:$0xf] %v119
  // Predicated region
  $region14: #{_lambda_.3} parent=0 // pred_check
    _
  $region15: #{_lambda_.3} parent=0 // pred_check_branch
    %129 = sbr.rel (0) target = $region17
  $region16: #{_lambda_.3} parent=0 // pred_region
    _
  $region17: #{_lambda_.3} parent=0 // pred_fallthru
    _
  // Predicated region
  $region18: #{_lambda_.3} parent=0 // pred_check
    _
  $region19: #{_lambda_.3} parent=0 // pred_check_branch
    %131 = sbr.rel (0) target = $region21
  $region20: #{_lambda_.3} parent=0 // pred_region
    _
  $region21: #{_lambda_.3} parent=0 // pred_fallthru
    _

// kernel: _lambda_.5
$region0: #{_lambda_.5}
  #allocation0 [shape = 'u32[]', space=smem, size = 0x4, offset = 0x4, fixed_abs, tag = 'smem constant byte address 0x4 - core index']
  #allocation1 [shape = 'u32[144,128]{1,0:T(1,128)}', space=vmem, size = 0x12000, scoped, tag = 'internal scratch']
  #allocation2 [shape = 'f32[1,1]{1,0:T(1,128)S(1)}', space=vmem, size = 0x200, scoped, tag = 'scoped memory for _lambda_.5']
  %s0 = inlined_call_operand.vmem [shape: bf16[8,2,32], index: 0, kind: input, shape index: {}]
  %s1 = inlined_call_operand.vmem [shape: bf16[16,32], index: 1, kind: input, shape index: {}]
  %s2 = inlined_call_operand.vmem [shape: bf16[32,32], index: 2, kind: input, shape index: {}]
  %s3 = inlined_call_operand.vmem [shape: f32[1,32], index: 3, kind: input, shape index: {}]
  %s4 = inlined_call_operand.vmem [shape: bf16[32,32], index: 4, kind: input, shape index: {}]
  %s5 = inlined_call_operand.vmem [shape: f32[1,32], index: 5, kind: input, shape index: {}]
  %s6 = inlined_call_operand.vmem [shape: f32[1,32], index: 6, kind: input, shape index: {}]
  %s7 = inlined_call_operand.<no memory space> [shape: f32[1,1], index: 7, kind: input, shape index: {}]
  %s8 = inlined_call_operand.vmem [shape: bf16[32,32], index: 8, kind: input, shape index: {}]
  %s9 = inlined_call_operand.vmem [shape: f32[1,32], index: 9, kind: input, shape index: {}]
  %s10 = inlined_call_operand.vmem [shape: bf16[32,32], index: 10, kind: input, shape index: {}]
  %s11 = inlined_call_operand.vmem [shape: f32[1,32], index: 11, kind: input, shape index: {}]
  %s12 = inlined_call_operand.vmem [shape: f32[2,32], index: 12, kind: output, shape index: {0}]
  %s13 = inlined_call_operand.hbm [shape: f32[2,1], index: 13, kind: output, shape index: {1}]
  %14 = xla_tuple %s12, %s13
  %s15 = sld [smem:[#allocation0]]
  $region66: #{_lambda_.5} parent=0
    _
  %s17 = ssub.s32 1, %s15
  %s18 = scalar_select 0, %s17, %s15
  %v19 = vstv %s7
  %20 = vst [vmem:[#allocation2] sm:$0x1] %v19
  $region1: #{_lambda_.5} parent=0
    #allocation3 [shape = 'u8[1024]{0}', space=vmem, size = 0x400, scoped, tag = 'output window, operand 1, single buffered']
    #allocation4 [shape = 's32[1]{0}', space=sflag, size = 0x4, scoped, tag = 'scoped memory for _lambda_.5']
    %21 = vsyncpa [#allocation4], 0
    // Predicated region
    $region2: #{_lambda_.5} parent=1 // pred_check
      _
    $region3: #{_lambda_.5} parent=1 // pred_check_branch
      %23 = sbr.rel (0) target = $region5
    $region4: #{_lambda_.5} parent=1 // pred_region
      _
    $region5: #{_lambda_.5} parent=1 // pred_fallthru
      _
    // Predicated region
    $region6: #{_lambda_.5} parent=1 // pred_check
      _
    $region7: #{_lambda_.5} parent=1 // pred_check_branch
      %25 = sbr.rel (0) target = $region9
    $region8: #{_lambda_.5} parent=1 // pred_region
      _
    $region9: #{_lambda_.5} parent=1 // pred_fallthru
      _
    // Predicated region
    $region10: #{_lambda_.5} parent=1 // pred_check
      _
    $region11: #{_lambda_.5} parent=1 // pred_check_branch
      %27 = sbr.rel (0) target = $region13
    $region12: #{_lambda_.5} parent=1 // pred_region
      _
    $region13: #{_lambda_.5} parent=1 // pred_fallthru
      _
    // Predicated region
    $region14: #{_lambda_.5} parent=1 // pred_check
      _
    $region15: #{_lambda_.5} parent=1 // pred_check_branch
      %29 = sbr.rel (0) target = $region17
    $region16: #{_lambda_.5} parent=1 // pred_region
      _
    $region17: #{_lambda_.5} parent=1 // pred_fallthru
      _
    // Predicated region
    $region18: #{_lambda_.5} parent=1 // pred_check
      _
    $region19: #{_lambda_.5} parent=1 // pred_check_branch
      %31 = sbr.rel (0) target = $region21
    $region20: #{_lambda_.5} parent=1 // pred_region
      _
    $region21: #{_lambda_.5} parent=1 // pred_fallthru
      _
    // Predicated region
    $region22: #{_lambda_.5} parent=1 // pred_check
      _
    $region23: #{_lambda_.5} parent=1 // pred_check_branch
      %33 = sbr.rel (0) target = $region25
    $region24: #{_lambda_.5} parent=1 // pred_region
      _
    $region25: #{_lambda_.5} parent=1 // pred_fallthru
      _
    // Predicated region
    $region26: #{_lambda_.5} parent=1 // pred_check
      _
    $region27: #{_lambda_.5} parent=1 // pred_check_branch
      %35 = sbr.rel (0) target = $region29
    $region28: #{_lambda_.5} parent=1 // pred_region
      _
    $region29: #{_lambda_.5} parent=1 // pred_fallthru
      _
    // Predicated region
    $region30: #{_lambda_.5} parent=1 // pred_check
      _
    $region31: #{_lambda_.5} parent=1 // pred_check_branch
      %37 = sbr.rel (0) target = $region33
    $region32: #{_lambda_.5} parent=1 // pred_region
      _
    $region33: #{_lambda_.5} parent=1 // pred_fallthru
      _
    // Predicated region
    $region34: #{_lambda_.5} parent=1 // pred_check
      _
    $region35: #{_lambda_.5} parent=1 // pred_check_branch
      %39 = sbr.rel (0) target = $region37
    $region36: #{_lambda_.5} parent=1 // pred_region
      _
    $region37: #{_lambda_.5} parent=1 // pred_fallthru
      _
    // Predicated region
    $region38: #{_lambda_.5} parent=1 // pred_check
      _
    $region39: #{_lambda_.5} parent=1 // pred_check_branch
      %41 = sbr.rel (0) target = $region41
    $region40: #{_lambda_.5} parent=1 // pred_region
      _
    $region41: #{_lambda_.5} parent=1 // pred_fallthru
      _
    // Predicated region
    $region42: #{_lambda_.5} parent=1 // pred_check
      _
    $region43: #{_lambda_.5} parent=1 // pred_check_branch
      %43 = sbr.rel (0) target = $region45
    $region44: #{_lambda_.5} parent=1 // pred_region
      _
    $region45: #{_lambda_.5} parent=1 // pred_fallthru
      _
    // Predicated region
    $region46: #{_lambda_.5} parent=1 // pred_check
      _
    $region47: #{_lambda_.5} parent=1 // pred_check_branch
      %45 = sbr.rel (0) target = $region49
    $region48: #{_lambda_.5} parent=1 // pred_region
      _
    $region49: #{_lambda_.5} parent=1 // pred_fallthru
      _
    %v47 = vld [vmem:[%s0] sm:$0x1]
    %v48 = vld [vmem:[%s0 + $0x1] sm:$0x1]
    %v49 = vld [vmem:[%s0 + $0x2] sm:$0x1]
    %v50 = vld [vmem:[%s0 + $0x3] sm:$0x1]
    %v51 = vld [vmem:[%s0 + $0x4] sm:$0x1]
    %v52 = vld [vmem:[%s0 + $0x5] sm:$0x1]
    %v53 = vld [vmem:[%s0 + $0x6] sm:$0x1]
    %v54 = vld [vmem:[%s0 + $0x7] sm:$0x1]
    %v55 = vunpack.c.l.bf16 %v47
    %v56 = vunpack.c.l.bf16 %v48
    %v57 = vunpack.c.l.bf16 %v49
    %v58 = vunpack.c.l.bf16 %v50
    %v59 = vunpack.c.l.bf16 %v51
    %v60 = vunpack.c.l.bf16 %v52
    %v61 = vunpack.c.l.bf16 %v53
    %v62 = vunpack.c.l.bf16 %v54
    %vm63 = vcmask 254976
    %v64 = vsel %vm63, %v55, 0.0
    %v65 = vsel %vm63, %v56, 0.0
    %v66 = vadd.f32 %v64, %v65
    %v67 = vsel %vm63, %v57, 0.0
    %v68 = vadd.f32 %v66, %v67
    %v69 = vsel %vm63, %v58, 0.0
    %v70 = vadd.f32 %v68, %v69
    %v71 = vsel %vm63, %v59, 0.0
    %v72 = vadd.f32 %v70, %v71
    %v73 = vsel %vm63, %v60, 0.0
    %v74 = vadd.f32 %v72, %v73
    %v75 = vsel %vm63, %v61, 0.0
    %v76 = vadd.f32 %v74, %v75
    %v77 = vsel %vm63, %v62, 0.0
    %v78 = vadd.f32 %v76, %v77
    %v79 = vrcp.pop 8.0
    %v80 = vmul.f32 %v78, %v79
    %v81 = vpack.c.bf16 %v80, %v80
    %v82 = vld [vmem:[%s4] sm:$0xf]
    %v83 = vld [vmem:[%s4 + $0x4] sm:$0xf]
    %v84 = vld [vmem:[%s4 + $0x8] sm:$0xf]
    %v85 = vld [vmem:[%s4 + $0xc] sm:$0xf]
    %v86 = vld [vmem:[%s5] sm:$0x1]
    %v88 = vlaneseq
    %v89 = vshrl.u32 %v88, 7
    %v90 = vsub.s32 0, %v89
    %v91 = vrot.slane %v86, %v90
    %v97 = vunpack.c.l.b16 %v82
    %v98 = vunpack.c.l.b16 %v83
    %v99 = vunpack.c.l.b16 %v84
    %v100 = vunpack.c.l.b16 %v85
    %v101 = vpack.c.b16 %v98, %v97
    %v102 = vpack.c.b16 %v100, %v99
    %vm105 = vcmask 261120
    %v107 = vsel %vm105, %v81, 0
    %109 = vmatprep.subr.bf16.mxu0 0
    %110 = vmatpush1.bf16.msra.mxu0 %v101
    %111 = vmatprep.subr.bf16.mxu0 0
    %112 = vmatpush1.bf16.msra.mxu0 %v102
    %113 = vmatprep.subr.bf16.mxu0 0
    %114 = vmatpush1.bf16.msra.mxu0 0
    %115 = vmatprep.subr.bf16.mxu0 0
    %116 = vmatpush1.bf16.msra.mxu0 0
    %117 = vmatprep.subr.bf16.mxu0 0
    %118 = vmatpush1.bf16.msra.mxu0 0
    %119 = vmatprep.subr.bf16.mxu0 0
    %120 = vmatpush1.bf16.msra.mxu0 0
    %121 = vmatprep.subr.bf16.mxu0 0
    %122 = vmatpush1.bf16.msra.mxu0 0
    %123 = vmatprep.subr.bf16.mxu0 0
    %124 = vmatpush1.bf16.msra.mxu0 0
    %125 = vmatprep.subr.bf16.mxu0 0
    %126 = vmatpush1.bf16.msra.mxu0 0
    %127 = vmatprep.subr.bf16.mxu0 0
    %128 = vmatpush1.bf16.msra.mxu0 0
    %129 = vmatprep.subr.bf16.mxu0 0
    %130 = vmatpush1.bf16.msra.mxu0 0
    %131 = vmatprep.subr.bf16.mxu0 0
    %132 = vmatpush1.bf16.msra.mxu0 0
    %133 = vmatprep.subr.bf16.mxu0 0
    %134 = vmatpush1.bf16.msra.mxu0 0
    %135 = vmatprep.subr.bf16.mxu0 0
    %136 = vmatpush1.bf16.msra.mxu0 0
    %137 = vmatprep.subr.bf16.mxu0 0
    %138 = vmatpush1.bf16.msra.mxu0 0
    %139 = vmatprep.subr.bf16.mxu0 0
    %140 = vmatpush1.bf16.msra.mxu0 0
    %141 = vmatprep.mubr.bf16.mxu0 0
    %142 = vmatmul.mubr.bf16.gmra.mrb[0].mxu0 %v107
    %v143 = vpop.f32.mrb[0].mxu0
    %v144 = vadd.f32 %v91, %v143
    %v145 = vpop.f32.mrb[0].mxu0
    %v146 = vpop.f32.mrb[0].mxu0
    %v147 = vpop.f32.mrb[0].mxu0
    %148 = vdwg.mxu0
    %v149 = vld [vmem:[%s3] sm:$0x1]
    %v151 = vlaneseq
    %v152 = vshrl.u32 %v151, 7
    %v153 = vsub.s32 0, %v152
    %v154 = vrot.slane %v149, %v153
    %v156 = vadd.f32 %v144, %v154
    %v157 = vlaneseq
    %v158 = vshrl.u32 %v157, 7
    %v159 = vadd.s32 %v158, 8
    %vm160 = vcmp.lt.s32.totalorder %v158, 0
    %v161 = vsub.s32 0, %v158
    %v162 = vsel %vm160, %v161, %v158
    %v163 = vshrl.u32 %v162, 1
    %v164 = vand.u32 %v162, 1
    %v165 = vsub.s32 0, %v164
    %v166 = vsel %vm160, %v165, %v164
    %vm167 = vcmp.lt.s32.totalorder %v159, 0
    %v168 = vsub.s32 0, %v159
    %v169 = vsel %vm167, %v168, %v159
    %v170 = vshrl.u32 %v169, 1
    %v171 = vand.u32 %v169, 1
    %v172 = vsub.s32 0, %v171
    %v173 = vsel %vm167, %v172, %v171
    %vm174 = vcmp.ne.s32.totalorder %v166, 0
    %vm175 = vcmp.ne.s32.totalorder %v173, 0
    %vm176 = vcmp.lt.s32.totalorder %v166, 0
    %vm177 = vcmp.lt.s32.totalorder %v173, 0
    %vm178 = vmand %vm176, %vm174
    %vm179 = vmand %vm177, %vm175
    %v180 = vadd.s32 %v166, 2
    %v181 = vadd.s32 %v173, 2
    %v182 = vsel %vm178, %v180, %v166
    %v183 = vsel %vm179, %v181, %v173
    %v184 = vlaneseq
    %v185 = vand.u32 %v184, 127
    %vm186 = vcmp.eq.s32.totalorder %v182, %v185
    %vm187 = vcmp.eq.s32.totalorder %v183, %v185
    %v188 = vsel %vm186, 1, 0
    %v189 = vsel %vm187, 1, 0
    %v190 = vcvt.s32.f32 %v188
    %v191 = vcvt.s32.f32 %v189
    %vm192 = vcmp.lt.s32.totalorder %v185, 0
    %v193 = vsub.s32 0, %v185
    %v194 = vsel %vm192, %v193, %v185
    %v195 = vshrl.u32 %v194, 1
    %v196 = vand.u32 %v194, 1
    %v197 = vsub.s32 0, %v196
    %v198 = vsel %vm192, %v197, %v196
    %vm199 = vcmp.ne.s32.totalorder %v198, 0
    %vm200 = vcmp.lt.s32.totalorder %v198, 0
    %vm201 = vmand %vm200, %vm199
    %v202 = vadd.s32 %v198, 2
    %v203 = vsel %vm201, %v202, %v198
    %vm204 = vcmp.eq.s32.totalorder %v158, %v203
    %v205 = vsel %vm204, 1, 0
    %v206 = vcvt.s32.f32 %v205
    %v207 = vld [vmem:[%s1] sm:$0xf]
    %v208 = vld [vmem:[%s1 + $0x4] sm:$0xf]
    %v209 = vld [vmem:[%s2] sm:$0xf]
    %v210 = vld [vmem:[%s2 + $0x4] sm:$0xf]
    %v211 = vld [vmem:[%s2 + $0x8] sm:$0xf]
    %v212 = vld [vmem:[%s2 + $0xc] sm:$0xf]
    %vm213 = vcmask 15360
    %v215 = vsel %vm213, %v190, 0
    %v218 = vsel %vm213, %v191, 0
    %vm220 = vcmask 1041408
    %v222 = vsel %vm220, %v156, 0
    %224 = vmatprep.subr.mxu0 0.0
    %225 = vmatpush1.msra.mxu0 %v222
    %226 = vmatprep.subr.mxu0 0.0
    %227 = vmatpush1.msra.mxu0 0.0
    %228 = vmatprep.subr.mxu0 0.0
    %229 = vmatpush1.msra.mxu0 0.0
    %230 = vmatprep.subr.mxu0 0.0
    %231 = vmatpush1.msra.mxu0 0.0
    %232 = vmatprep.subr.mxu0 0.0
    %233 = vmatpush1.msra.mxu0 0.0
    %234 = vmatprep.subr.mxu0 0.0
    %235 = vmatpush1.msra.mxu0 0.0
    %236 = vmatprep.subr.mxu0 0.0
    %237 = vmatpush1.msra.mxu0 0.0
    %238 = vmatprep.subr.mxu0 0.0
    %239 = vmatpush1.msra.mxu0 0.0
    %240 = vmatprep.subr.mxu0 0.0
    %241 = vmatpush1.msra.mxu0 0.0
    %242 = vmatprep.subr.mxu0 0.0
    %243 = vmatpush1.msra.mxu0 0.0
    %244 = vmatprep.subr.mxu0 0.0
    %245 = vmatpush1.msra.mxu0 0.0
    %246 = vmatprep.subr.mxu0 0.0
    %247 = vmatpush1.msra.mxu0 0.0
    %248 = vmatprep.subr.mxu0 0.0
    %249 = vmatpush1.msra.mxu0 0.0
    %250 = vmatprep.subr.mxu0 0.0
    %251 = vmatpush1.msra.mxu0 0.0
    %252 = vmatprep.subr.mxu0 0.0
    %253 = vmatpush1.msra.mxu0 0.0
    %254 = vmatprep.subr.mxu0 0.0
    %255 = vmatpush1.msra.mxu0 0.0
    %256 = vmatprep.subr.mxu0 0.0
    %257 = vmatpush1.msra.mxu0 0.0
    %258 = vmatprep.subr.mxu0 0.0
    %259 = vmatpush1.msra.mxu0 0.0
    %260 = vmatprep.subr.mxu0 0.0
    %261 = vmatpush1.msra.mxu0 0.0
    %262 = vmatprep.subr.mxu0 0.0
    %263 = vmatpush1.msra.mxu0 0.0
    %264 = vmatprep.subr.mxu0 0.0
    %265 = vmatpush1.msra.mxu0 0.0
    %266 = vmatprep.subr.mxu0 0.0
    %267 = vmatpush1.msra.mxu0 0.0
    %268 = vmatprep.subr.mxu0 0.0
    %269 = vmatpush1.msra.mxu0 0.0
    %270 = vmatprep.subr.mxu0 0.0
    %271 = vmatpush1.msra.mxu0 0.0
    %272 = vmatprep.subr.mxu0 0.0
    %273 = vmatpush1.msra.mxu0 0.0
    %274 = vmatprep.subr.mxu0 0.0
    %275 = vmatpush1.msra.mxu0 0.0
    %276 = vmatprep.subr.mxu0 0.0
    %277 = vmatpush1.msra.mxu0 0.0
    %278 = vmatprep.subr.mxu0 0.0
    %279 = vmatpush1.msra.mxu0 0.0
    %280 = vmatprep.subr.mxu0 0.0
    %281 = vmatpush1.msra.mxu0 0.0
    %282 = vmatprep.subr.mxu0 0.0
    %283 = vmatpush1.msra.mxu0 0.0
    %284 = vmatprep.subr.mxu0 0.0
    %285 = vmatpush1.msra.mxu0 0.0
    %286 = vmatprep.subr.mxu0 0.0
    %287 = vmatpush1.msra.mxu0 0.0
    %288 = vmatprep.mubr.f32.mxu0 0.0
    %289 = vmatmul.mubr.f32.gmra.mrb[0].mxu0 %v215
    %v290 = vpop.f32.mrb[0].mxu0
    %v291 = vadd.f32 0.0, %v290
    %v292 = vpop.f32.mrb[0].mxu0
    %293 = vmatprep.mubr.f32.mxu0 0.0
    %294 = vmatmul.mubr.f32.gmra.mrb[0].mxu0 %v218
    %v295 = vpop.f32.mrb[0].mxu0
    %v296 = vadd.f32 0.0, %v295
    %v297 = vpop.f32.mrb[0].mxu0
    %298 = vdwg.mxu0
    %v301 = vunpack.c.l.b16 %v207
    %v302 = vunpack.c.l.b16 %v208
    %v303 = vpack.c.b16 %v302, %v301
    %v308 = vunpack.c.l.b16 %v209
    %v309 = vunpack.c.l.b16 %v210
    %v310 = vunpack.c.l.b16 %v211
    %v311 = vunpack.c.l.b16 %v212
    %v312 = vpack.c.b16 %v309, %v308
    %v313 = vpack.c.b16 %v311, %v310
    %v317 = vsel %vm105, %v303, 0
    %319 = vmatprep.subr.bf16.mxu0 0
    %320 = vmatpush1.bf16.msra.mxu0 %v312
    %321 = vmatprep.subr.bf16.mxu0 0
    %322 = vmatpush1.bf16.msra.mxu0 %v313
    %323 = vmatprep.subr.bf16.mxu0 0
    %324 = vmatpush1.bf16.msra.mxu0 0
    %325 = vmatprep.subr.bf16.mxu0 0
    %326 = vmatpush1.bf16.msra.mxu0 0
    %327 = vmatprep.subr.bf16.mxu0 0
    %328 = vmatpush1.bf16.msra.mxu0 0
    %329 = vmatprep.subr.bf16.mxu0 0
    %330 = vmatpush1.bf16.msra.mxu0 0
    %331 = vmatprep.subr.bf16.mxu0 0
    %332 = vmatpush1.bf16.msra.mxu0 0
    %333 = vmatprep.subr.bf16.mxu0 0
    %334 = vmatpush1.bf16.msra.mxu0 0
    %335 = vmatprep.subr.bf16.mxu0 0
    %336 = vmatpush1.bf16.msra.mxu0 0
    %337 = vmatprep.subr.bf16.mxu0 0
    %338 = vmatpush1.bf16.msra.mxu0 0
    %339 = vmatprep.subr.bf16.mxu0 0
    %340 = vmatpush1.bf16.msra.mxu0 0
    %341 = vmatprep.subr.bf16.mxu0 0
    %342 = vmatpush1.bf16.msra.mxu0 0
    %343 = vmatprep.subr.bf16.mxu0 0
    %344 = vmatpush1.bf16.msra.mxu0 0
    %345 = vmatprep.subr.bf16.mxu0 0
    %346 = vmatpush1.bf16.msra.mxu0 0
    %347 = vmatprep.subr.bf16.mxu0 0
    %348 = vmatpush1.bf16.msra.mxu0 0
    %349 = vmatprep.subr.bf16.mxu0 0
    %350 = vmatpush1.bf16.msra.mxu0 0
    %351 = vmatprep.mubr.bf16.mxu0 0
    %352 = vmatmul.mubr.bf16.gmra.mrb[0].mxu0 %v317
    %v353 = vpop.f32.mrb[0].mxu0
    %v354 = vadd.f32 %v291, %v353
    %v355 = vpop.f32.mrb[0].mxu0
    %v356 = vpop.f32.mrb[0].mxu0
    %v357 = vadd.f32 %v296, %v356
    %v358 = vpop.f32.mrb[0].mxu0
    %359 = vdwg.mxu0
    %v360 = vtanh.pop %v354
    %v361 = vtanh.pop %v357
    %v362 = vld [vmem:[%s6] sm:$0x1]
    %v364 = vlaneseq
    %v365 = vshrl.u32 %v364, 7
    %v366 = vsub.s32 0, %v365
    %v367 = vrot.slane %v362, %v366
    %v369 = vmul.f32 %v360, %v367
    %v370 = vmul.f32 %v361, %v367
    %v371 = vsel %vm105, %v369, 0.0
    %372 = vadd.xlane.f32.xlu0 %v371
    %v373 = vpop.xlane.xlu0 %372
    %v374 = vsel %vm105, %v370, 0.0
    %375 = vadd.xlane.f32.xlu0 %v374
    %v376 = vpop.xlane.xlu0 %375
    %v377 = vld [vmem:[#allocation2] sm:$0x1]
    %v379 = vlaneseq
    %v380 = vshrl.u32 %v379, 7
    %v381 = vsub.s32 0, %v380
    %v382 = vrot.slane %v377, %v381
    %v384 = vadd.f32 %v373, %v382
    %v385 = vadd.f32 %v376, %v382
    %387 = vset.pattern.permute.xlu0 0
    %388 = vperm.xlu0 %387, %v384
    %v389 = vpop.permute.xlu0 %388
    %392 = vset.pattern.permute.xlu0 0
    %393 = vperm.xlu0 %392, %v385
    %v394 = vpop.permute.xlu0 %393
    %v396 = vsel %vm186, %v389, -1e+30
    %v397 = vsel %vm187, %v394, -1e+30
    %v398 = vsel %vm213, %v396, -inf
    %v399 = vsel %vm213, %v397, -inf
    %v400 = vmax.f32 %v398, %v399
    %v401 = vrot.slane %v400, 4
    %v402 = vmax.f32 %v400, %v401
    %v403 = vrot.slane %v402, 2
    %v404 = vmax.f32 %v402, %v403
    %v405 = vrot.slane %v404, 1
    %v406 = vmax.f32 %v404, %v405
    %v407 = vsel %vm186, %v406, 0.0
    %v408 = vsel %vm187, %v406, 0.0
    %v409 = vsel %vm213, %v407, 0.0
    %410 = vadd.xlane.f32.xlu0 %v409
    %v411 = vpop.xlane.xlu0 %410
    %v412 = vsel %vm213, %v408, 0.0
    %413 = vadd.xlane.f32.xlu0 %v412
    %v414 = vpop.xlane.xlu0 %413
    %v415 = vsub.f32 %v384, %v411
    %v416 = vsub.f32 %v385, %v414
    %v417 = vmul.f32 %v415, 1.442695
    %v418 = vpow.pop %v417
    %v419 = vmul.f32 %v416, 1.442695
    %v420 = vpow.pop %v419
    %422 = vset.pattern.permute.xlu0 0
    %423 = vperm.xlu0 %422, %v418
    %v424 = vpop.permute.xlu0 %423
    %427 = vset.pattern.permute.xlu0 0
    %428 = vperm.xlu0 %427, %v420
    %v429 = vpop.permute.xlu0 %428
    %v431 = vsel %vm186, %v424, 0.0
    %v432 = vsel %vm187, %v429, 0.0
    %v433 = vsel %vm213, %v431, 0.0
    %v434 = vsel %vm213, %v432, 0.0
    %v435 = vadd.f32 %v433, %v434
    %v436 = vrot.slane %v435, 4
    %v437 = vadd.f32 %v435, %v436
    %v438 = vrot.slane %v437, 2
    %v439 = vadd.f32 %v437, %v438
    %v440 = vrot.slane %v439, 1
    %v441 = vadd.f32 %v439, %v440
    %v442 = vsel %vm186, %v441, 0.0
    %v443 = vsel %vm187, %v441, 0.0
    %v444 = vsel %vm213, %v442, 0.0
    %445 = vadd.xlane.f32.xlu0 %v444
    %v446 = vpop.xlane.xlu0 %445
    %v447 = vsel %vm213, %v443, 0.0
    %448 = vadd.xlane.f32.xlu0 %v447
    %v449 = vpop.xlane.xlu0 %448
    %v450 = vrcp.pop %v446
    %v451 = vmul.f32 %v418, %v450
    %v452 = vrcp.pop %v449
    %v453 = vmul.f32 %v420, %v452
    %v454 = vunpack.c.l.bf16 %v207
    %v455 = vunpack.c.l.bf16 %v208
    %457 = vset.pattern.permute.xlu0 0
    %458 = vperm.xlu0 %457, %v451
    %v459 = vpop.permute.xlu0 %458
    %462 = vset.pattern.permute.xlu0 0
    %463 = vperm.xlu0 %462, %v453
    %v464 = vpop.permute.xlu0 %463
    %v466 = vmul.f32 %v459, %v454
    %v467 = vmul.f32 %v464, %v455
    %vm468 = vcmask 130048
    %v470 = vsel %vm468, %v206, 0
    %472 = vmatprep.subr.mxu0 0.0
    %473 = vmatpush1.msra.mxu0 %v466
    %474 = vmatprep.subr.mxu0 0.0
    %475 = vmatpush1.msra.mxu0 %v467
    %476 = vmatprep.subr.mxu0 0.0
    %477 = vmatpush1.msra.mxu0 0.0
    %478 = vmatprep.subr.mxu0 0.0
    %479 = vmatpush1.msra.mxu0 0.0
    %480 = vmatprep.subr.mxu0 0.0
    %481 = vmatpush1.msra.mxu0 0.0
    %482 = vmatprep.subr.mxu0 0.0
    %483 = vmatpush1.msra.mxu0 0.0
    %484 = vmatprep.subr.mxu0 0.0
    %485 = vmatpush1.msra.mxu0 0.0
    %486 = vmatprep.subr.mxu0 0.0
    %487 = vmatpush1.msra.mxu0 0.0
    %488 = vmatprep.subr.mxu0 0.0
    %489 = vmatpush1.msra.mxu0 0.0
    %490 = vmatprep.subr.mxu0 0.0
    %491 = vmatpush1.msra.mxu0 0.0
    %492 = vmatprep.subr.mxu0 0.0
    %493 = vmatpush1.msra.mxu0 0.0
    %494 = vmatprep.subr.mxu0 0.0
    %495 = vmatpush1.msra.mxu0 0.0
    %496 = vmatprep.subr.mxu0 0.0
    %497 = vmatpush1.msra.mxu0 0.0
    %498 = vmatprep.subr.mxu0 0.0
    %499 = vmatpush1.msra.mxu0 0.0
    %500 = vmatprep.subr.mxu0 0.0
    %501 = vmatpush1.msra.mxu0 0.0
    %502 = vmatprep.subr.mxu0 0.0
    %503 = vmatpush1.msra.mxu0 0.0
    %504 = vmatprep.subr.mxu0 0.0
    %505 = vmatpush1.msra.mxu0 0.0
    %506 = vmatprep.subr.mxu0 0.0
    %507 = vmatpush1.msra.mxu0 0.0
    %508 = vmatprep.subr.mxu0 0.0
    %509 = vmatpush1.msra.mxu0 0.0
    %510 = vmatprep.subr.mxu0 0.0
    %511 = vmatpush1.msra.mxu0 0.0
    %512 = vmatprep.subr.mxu0 0.0
    %513 = vmatpush1.msra.mxu0 0.0
    %514 = vmatprep.subr.mxu0 0.0
    %515 = vmatpush1.msra.mxu0 0.0
    %516 = vmatprep.subr.mxu0 0.0
    %517 = vmatpush1.msra.mxu0 0.0
    %518 = vmatprep.subr.mxu0 0.0
    %519 = vmatpush1.msra.mxu0 0.0
    %520 = vmatprep.subr.mxu0 0.0
    %521 = vmatpush1.msra.mxu0 0.0
    %522 = vmatprep.subr.mxu0 0.0
    %523 = vmatpush1.msra.mxu0 0.0
    %524 = vmatprep.subr.mxu0 0.0
    %525 = vmatpush1.msra.mxu0 0.0
    %526 = vmatprep.subr.mxu0 0.0
    %527 = vmatpush1.msra.mxu0 0.0
    %528 = vmatprep.subr.mxu0 0.0
    %529 = vmatpush1.msra.mxu0 0.0
    %530 = vmatprep.subr.mxu0 0.0
    %531 = vmatpush1.msra.mxu0 0.0
    %532 = vmatprep.subr.mxu0 0.0
    %533 = vmatpush1.msra.mxu0 0.0
    %534 = vmatprep.subr.mxu0 0.0
    %535 = vmatpush1.msra.mxu0 0.0
    %536 = vmatprep.mubr.f32.mxu0 0.0
    %537 = vmatmul.mubr.f32.gmra.mrb[0].mxu0 %v470
    %v538 = vpop.f32.mrb[0].mxu0
    %v539 = vadd.f32 0.0, %v538
    %v540 = vpop.f32.mrb[0].mxu0
    %541 = vdwg.mxu0
    %v542 = vmul.f32 %v539, 0.125
    %v543 = vld [vmem:[%s8] sm:$0xf]
    %v544 = vld [vmem:[%s8 + $0x4] sm:$0xf]
    %v545 = vld [vmem:[%s8 + $0x8] sm:$0xf]
    %v546 = vld [vmem:[%s8 + $0xc] sm:$0xf]
    %v547 = vld [vmem:[%s9] sm:$0x1]
    %v549 = vlaneseq
    %v550 = vshrl.u32 %v549, 7
    %v551 = vsub.s32 0, %v550
    %v552 = vrot.slane %v547, %v551
    %v558 = vunpack.c.l.b16 %v543
    %v559 = vunpack.c.l.b16 %v544
    %v560 = vunpack.c.l.b16 %v545
    %v561 = vunpack.c.l.b16 %v546
    %v562 = vpack.c.b16 %v559, %v558
    %v563 = vpack.c.b16 %v561, %v560
    %566 = vmatprep.subr.bf16.mxu0 0
    %567 = vmatpush1.bf16.msra.mxu0 %v562
    %568 = vmatprep.subr.bf16.mxu0 0
    %569 = vmatpush1.bf16.msra.mxu0 %v563
    %570 = vmatprep.subr.bf16.mxu0 0
    %571 = vmatpush1.bf16.msra.mxu0 0
    %572 = vmatprep.subr.bf16.mxu0 0
    %573 = vmatpush1.bf16.msra.mxu0 0
    %574 = vmatprep.subr.bf16.mxu0 0
    %575 = vmatpush1.bf16.msra.mxu0 0
    %576 = vmatprep.subr.bf16.mxu0 0
    %577 = vmatpush1.bf16.msra.mxu0 0
    %578 = vmatprep.subr.bf16.mxu0 0
    %579 = vmatpush1.bf16.msra.mxu0 0
    %580 = vmatprep.subr.bf16.mxu0 0
    %581 = vmatpush1.bf16.msra.mxu0 0
    %582 = vmatprep.subr.bf16.mxu0 0
    %583 = vmatpush1.bf16.msra.mxu0 0
    %584 = vmatprep.subr.bf16.mxu0 0
    %585 = vmatpush1.bf16.msra.mxu0 0
    %586 = vmatprep.subr.bf16.mxu0 0
    %587 = vmatpush1.bf16.msra.mxu0 0
    %588 = vmatprep.subr.bf16.mxu0 0
    %589 = vmatpush1.bf16.msra.mxu0 0
    %590 = vmatprep.subr.bf16.mxu0 0
    %591 = vmatpush1.bf16.msra.mxu0 0
    %592 = vmatprep.subr.bf16.mxu0 0
    %593 = vmatpush1.bf16.msra.mxu0 0
    %594 = vmatprep.subr.bf16.mxu0 0
    %595 = vmatpush1.bf16.msra.mxu0 0
    %596 = vmatprep.subr.bf16.mxu0 0
    %597 = vmatpush1.bf16.msra.mxu0 0
    %598 = vmatprep.mubr.bf16.mxu0 0
    %599 = vmatmul.mubr.bf16.gmra.mrb[0].mxu0 %v107
    %v600 = vpop.f32.mrb[0].mxu0
    %v601 = vadd.f32 %v552, %v600
    %v602 = vpop.f32.mrb[0].mxu0
    %v603 = vpop.f32.mrb[0].mxu0
    %v604 = vpop.f32.mrb[0].mxu0
    %605 = vdwg.mxu0
    %v606 = vpack.c.bf16 %v542, %v542
    %v607 = vld [vmem:[%s10] sm:$0xf]
    %v608 = vld [vmem:[%s10 + $0x4] sm:$0xf]
    %v609 = vld [vmem:[%s10 + $0x8] sm:$0xf]
    %v610 = vld [vmem:[%s10 + $0xc] sm:$0xf]
    %v615 = vunpack.c.l.b16 %v607
    %v616 = vunpack.c.l.b16 %v608
    %v617 = vunpack.c.l.b16 %v609
    %v618 = vunpack.c.l.b16 %v610
    %v619 = vpack.c.b16 %v616, %v615
    %v620 = vpack.c.b16 %v618, %v617
    %v624 = vsel %vm105, %v606, 0
    %626 = vmatprep.subr.bf16.mxu0 0
    %627 = vmatpush1.bf16.msra.mxu0 %v619
    %628 = vmatprep.subr.bf16.mxu0 0
    %629 = vmatpush1.bf16.msra.mxu0 %v620
    %630 = vmatprep.subr.bf16.mxu0 0
    %631 = vmatpush1.bf16.msra.mxu0 0
    %632 = vmatprep.subr.bf16.mxu0 0
    %633 = vmatpush1.bf16.msra.mxu0 0
    %634 = vmatprep.subr.bf16.mxu0 0
    %635 = vmatpush1.bf16.msra.mxu0 0
    %636 = vmatprep.subr.bf16.mxu0 0
    %637 = vmatpush1.bf16.msra.mxu0 0
    %638 = vmatprep.subr.bf16.mxu0 0
    %639 = vmatpush1.bf16.msra.mxu0 0
    %640 = vmatprep.subr.bf16.mxu0 0
    %641 = vmatpush1.bf16.msra.mxu0 0
    %642 = vmatprep.subr.bf16.mxu0 0
    %643 = vmatpush1.bf16.msra.mxu0 0
    %644 = vmatprep.subr.bf16.mxu0 0
    %645 = vmatpush1.bf16.msra.mxu0 0
    %646 = vmatprep.subr.bf16.mxu0 0
    %647 = vmatpush1.bf16.msra.mxu0 0
    %648 = vmatprep.subr.bf16.mxu0 0
    %649 = vmatpush1.bf16.msra.mxu0 0
    %650 = vmatprep.subr.bf16.mxu0 0
    %651 = vmatpush1.bf16.msra.mxu0 0
    %652 = vmatprep.subr.bf16.mxu0 0
    %653 = vmatpush1.bf16.msra.mxu0 0
    %654 = vmatprep.subr.bf16.mxu0 0
    %655 = vmatpush1.bf16.msra.mxu0 0
    %656 = vmatprep.subr.bf16.mxu0 0
    %657 = vmatpush1.bf16.msra.mxu0 0
    %658 = vmatprep.mubr.bf16.mxu0 0
    %659 = vmatmul.mubr.bf16.gmra.mrb[0].mxu0 %v624
    %v660 = vpop.f32.mrb[0].mxu0
    %v661 = vadd.f32 0.0, %v660
    %v662 = vpop.f32.mrb[0].mxu0
    %v663 = vpop.f32.mrb[0].mxu0
    %v664 = vpop.f32.mrb[0].mxu0
    %665 = vdwg.mxu0
    %v666 = vadd.f32 %v601, %v661
    %v667 = vld [vmem:[%s11] sm:$0x1]
    %v669 = vlaneseq
    %v670 = vshrl.u32 %v669, 7
    %v671 = vsub.s32 0, %v670
    %v672 = vrot.slane %v667, %v671
    %v674 = vadd.f32 %v666, %v672
    %v675 = vtanh.pop %v674
    %v676 = vsel %vm63, %v675, -inf
    %677 = vmax.xlane.f32.xlu0 %v676
    %v678 = vpop.xlane.xlu0 %677
    %v679 = vsub.f32 %v675, %v678
    %v680 = vmul.f32 %v679, 1.442695
    %v681 = vpow.pop %v680
    %v682 = vsel %vm63, %v681, 0.0
    %683 = vadd.xlane.f32.xlu0 %v682
    %v684 = vpop.xlane.xlu0 %683
    %v685 = vrcp.pop %v684
    %v686 = vmul.f32 %v681, %v685
    %687 = vst.msk [vmem:[%s12] sm:$0x3] %vm63, %v686
    %v688 = vmul.f32 %v80, %v542
    %v689 = vsel %vm63, %v688, 0.0
    %690 = vadd.xlane.f32.xlu0 %v689
    %v691 = vpop.xlane.xlu0 %690
    %v692 = vmul.f32 %v80, %v80
    %v693 = vsel %vm63, %v692, 0.0
    %694 = vadd.xlane.f32.xlu0 %v693
    %v695 = vpop.xlane.xlu0 %694
    %v696 = vrsqrt.pop %v695
    %v697 = vmul.f32 %v695, %v696
    %vm698 = vcmp.eq.f32.partialorder %v695, inf
    %v699 = vsel %vm698, %v695, %v697
    %vm700 = vcmp.eq.f32.partialorder %v695, 0.0
    %v701 = vand.u32 %v695, 2147483648
    %v702 = vsel %vm700, %v701, %v699
    %v703 = vmax.f32 %v702, 1e-08
    %v704 = vmul.f32 %v542, %v542
    %v705 = vsel %vm63, %v704, 0.0
    %706 = vadd.xlane.f32.xlu0 %v705
    %v707 = vpop.xlane.xlu0 %706
    %v708 = vrsqrt.pop %v707
    %v709 = vmul.f32 %v707, %v708
    %vm710 = vcmp.eq.f32.partialorder %v707, inf
    %v711 = vsel %vm710, %v707, %v709
    %vm712 = vcmp.eq.f32.partialorder %v707, 0.0
    %v713 = vand.u32 %v707, 2147483648
    %v714 = vsel %vm712, %v713, %v711
    %v715 = vmax.f32 %v714, 1e-08
    %v716 = vmul.f32 %v703, %v715
    %v717 = vrcp.pop %v716
    %v718 = vmul.f32 %v691, %v717
    %vm719 = vcmask 1024
    %720 = vst.msk [vmem:[#allocation3] sm:$0x3] %vm719, %v718
    // Predicated region
    $region50: #{_lambda_.5} parent=1 // pred_check
      _
    $region51: #{_lambda_.5} parent=1 // pred_check_branch
      %722 = sbr.rel (0) target = $region53
    $region52: #{_lambda_.5} parent=1 // pred_region
      _
    $region53: #{_lambda_.5} parent=1 // pred_fallthru
      _
    // Predicated region
    $region54: #{_lambda_.5} parent=1 // pred_check
      _
    $region55: #{_lambda_.5} parent=1 // pred_check_branch
      %724 = sbr.rel (0) target = $region57
    $region56: #{_lambda_.5} parent=1 // pred_region
      %s726 = ssub.s32 32, 32
      %727 = vsyncadd [#allocation4], %s726
      %s729 = sshll.u32 [#allocation3], 4
      %s730 = int_to_ptr.vmem [resolvable:$true] %s729
      %732 = dma.vmem_to_hbm [thread:$0]  %s730, 32, %s13, [#allocation4]
    $region57: #{_lambda_.5} parent=1 // pred_fallthru
      _
    // Predicated region
    $region58: #{_lambda_.5} parent=1 // pred_check
      _
    $region59: #{_lambda_.5} parent=1 // pred_check_branch
      %734 = sbr.rel (0) target = $region61
    $region60: #{_lambda_.5} parent=1 // pred_region
      _
    $region61: #{_lambda_.5} parent=1 // pred_fallthru
      _
    // Predicated region
    $region62: #{_lambda_.5} parent=1 // pred_check
      _
    $region63: #{_lambda_.5} parent=1 // pred_check_branch
      %736 = sbr.rel (0) target = $region65
    $region64: #{_lambda_.5} parent=1 // pred_region
      %737 = dma.done [#allocation4], 32
    $region65: #{_lambda_.5} parent=1 // pred_fallthru
      _
    %738 = vsyncpa [#allocation4], 1

// kernel: _lambda_.4
$region0: #{_lambda_.4}
  #allocation0 [shape = 'u32[]', space=smem, size = 0x4, offset = 0x4, fixed_abs, tag = 'smem constant byte address 0x4 - core index']
  #allocation1 [shape = 'u32[144,128]{1,0:T(1,128)}', space=vmem, size = 0x12000, scoped, tag = 'internal scratch']
  %s0 = inlined_call_operand.vmem [shape: bf16[8,4,128], index: 0, kind: input, shape index: {}]
  %s1 = inlined_call_operand.vmem [shape: bf16[32,128], index: 1, kind: input, shape index: {}]
  %s2 = inlined_call_operand.vmem [shape: bf16[8,4,32], index: 2, kind: output, shape index: {}]
  %s3 = sld [smem:[#allocation0]]
  $region18: #{_lambda_.4} parent=0
    _
  %s5 = ssub.s32 1, %s3
  %s6 = scalar_select 0, %s5, %s3
  // Predicated region
  $region2: #{_lambda_.4} parent=0 // pred_check
    _
  $region3: #{_lambda_.4} parent=0 // pred_check_branch
    %8 = sbr.rel (0) target = $region5
  $region4: #{_lambda_.4} parent=0 // pred_region
    _
  $region5: #{_lambda_.4} parent=0 // pred_fallthru
    _
  // Predicated region
  $region6: #{_lambda_.4} parent=0 // pred_check
    _
  $region7: #{_lambda_.4} parent=0 // pred_check_branch
    %10 = sbr.rel (0) target = $region9
  $region8: #{_lambda_.4} parent=0 // pred_region
    _
  $region9: #{_lambda_.4} parent=0 // pred_fallthru
    _
  %v12 = vld [vmem:[%s1] sm:$0xf]
  %v13 = vld [vmem:[%s1 + $0x4] sm:$0xf]
  %v14 = vld [vmem:[%s1 + $0x8] sm:$0xf]
  %v15 = vld [vmem:[%s1 + $0xc] sm:$0xf]
  %v20 = vunpack.c.l.b16 %v12
  %v21 = vunpack.c.l.b16 %v13
  %v22 = vunpack.c.l.b16 %v14
  %v23 = vunpack.c.l.b16 %v15
  %v24 = vpack.c.b16 %v21, %v20
  %v25 = vpack.c.b16 %v23, %v22
  %vm28 = vcmask 261120
  %v30 = vsel %vm28, 0, 0
  %32 = vmatprep.subr.bf16.mxu0 0
  %33 = vmatpush1.bf16.msra.mxu0 %v24
  %34 = vmatprep.subr.bf16.mxu0 0
  %35 = vmatpush1.bf16.msra.mxu0 %v25
  %36 = vmatprep.subr.bf16.mxu0 0
  %37 = vmatpush1.bf16.msra.mxu0 0
  %38 = vmatprep.subr.bf16.mxu0 0
  %39 = vmatpush1.bf16.msra.mxu0 0
  %40 = vmatprep.subr.bf16.mxu0 0
  %41 = vmatpush1.bf16.msra.mxu0 0
  %42 = vmatprep.subr.bf16.mxu0 0
  %43 = vmatpush1.bf16.msra.mxu0 0
  %44 = vmatprep.subr.bf16.mxu0 0
  %45 = vmatpush1.bf16.msra.mxu0 0
  %46 = vmatprep.subr.bf16.mxu0 0
  %47 = vmatpush1.bf16.msra.mxu0 0
  %48 = vmatprep.subr.bf16.mxu0 0
  %49 = vmatpush1.bf16.msra.mxu0 0
  %50 = vmatprep.subr.bf16.mxu0 0
  %51 = vmatpush1.bf16.msra.mxu0 0
  %52 = vmatprep.subr.bf16.mxu0 0
  %53 = vmatpush1.bf16.msra.mxu0 0
  %54 = vmatprep.subr.bf16.mxu0 0
  %55 = vmatpush1.bf16.msra.mxu0 0
  %56 = vmatprep.subr.bf16.mxu0 0
  %57 = vmatpush1.bf16.msra.mxu0 0
  %58 = vmatprep.subr.bf16.mxu0 0
  %59 = vmatpush1.bf16.msra.mxu0 0
  %60 = vmatprep.subr.bf16.mxu0 0
  %61 = vmatpush1.bf16.msra.mxu0 0
  %62 = vmatprep.subr.bf16.mxu0 0
  %63 = vmatpush1.bf16.msra.mxu0 0
  %64 = vmatprep.mubr.bf16.mxu0 0
  %65 = vmatmul.mubr.bf16.gmra.mrb[0].mxu0 %v30
  %v66 = vpop.f32.mrb[0].mxu0
  %v67 = vadd.f32 0.0, %v66
  %v68 = vpop.f32.mrb[0].mxu0
  %v69 = vpop.f32.mrb[0].mxu0
  %v70 = vpop.f32.mrb[0].mxu0
  %71 = vdwg.mxu0
  %v72 = vld [vmem:[%s0] sm:$0x3]
  %v73 = vunpack.c.l.bf16 %v72
  %v74 = vadd.f32 %v73, %v67
  %s75 = scalar_lea.vmem %s0, 14
  %v76 = vld [vmem:[%s75] sm:$0x3]
  %v77 = vunpack.c.l.bf16 %v76
  %v78 = vadd.f32 %v77, %v67
  %v79 = vxor.u32 %v74, 2147483648
  %v80 = vmul.f32 %v79, 1.442695
  %v81 = vpow.pop %v80
  %v82 = vadd.f32 %v81, 1.0
  %v83 = vrcp.pop %v82
  %v84 = vmul.f32 1.0, %v83
  %v85 = vtanh.pop %v74
  %v86 = vmul.f32 %v84, 0.0
  %88 = vrot.lane.b32.xlu0 %v85, 96
  %v89 = vpop.permute.xlu0 %88
  %v91 = vmul.f32 %v84, %v89
  %93 = vrot.lane.b32.xlu0 %v91, 16
  %v94 = vpop.permute.xlu0 %93
  %v96 = vadd.f32 %v86, %v94
  %v97 = vtanh.pop %v96
  %99 = vrot.lane.b32.xlu0 %v97, 32
  %v100 = vpop.permute.xlu0 %99
  %v102 = vmul.f32 %v84, %v100
  %v103 = vxor.u32 %v78, 2147483648
  %v104 = vmul.f32 %v103, 1.442695
  %v105 = vpow.pop %v104
  %v106 = vadd.f32 %v105, 1.0
  %v107 = vrcp.pop %v106
  %v108 = vmul.f32 1.0, %v107
  %v109 = vtanh.pop %v78
  %v110 = vmul.f32 %v108, 0.0
  %112 = vrot.lane.b32.xlu0 %v109, 96
  %v113 = vpop.permute.xlu0 %112
  %v115 = vmul.f32 %v108, %v113
  %117 = vrot.lane.b32.xlu0 %v115, 16
  %v118 = vpop.permute.xlu0 %117
  %v120 = vadd.f32 %v110, %v118
  %v121 = vtanh.pop %v120
  %123 = vrot.lane.b32.xlu0 %v121, 32
  %v124 = vpop.permute.xlu0 %123
  %v126 = vmul.f32 %v108, %v124
  %v127 = vpack.c.bf16 %v102, %v102
  %v130 = vunpack.c.l.s4 1983009808
  %v131 = vunpack.c.0.s8 %v130
  %v132 = vlaneseq
  %v133 = vshrl.u32 %v132, 7
  %v134 = vsub.s32 %v131, %v133
  %v135 = vrot.slane %v127, %v134
  %136 = vrot.lane.b32.xlu0 %v135, 80
  %v137 = vpop.permute.xlu0 %136
  %vm139 = vcmask 123904
  %140 = vst.msk [vmem:[%s2] sm:$0x3] %vm139, %v137
  %v141 = vpack.c.bf16 %v126, %v126
  %v144 = vunpack.c.l.s4 1983009808
  %v145 = vunpack.c.0.s8 %v144
  %v146 = vlaneseq
  %v147 = vshrl.u32 %v146, 7
  %v148 = vsub.s32 %v145, %v147
  %v149 = vrot.slane %v141, %v148
  %150 = vrot.lane.b32.xlu0 %v149, 32
  %v151 = vpop.permute.xlu0 %150
  %s153 = scalar_lea.vmem %s2, 14
  %vm154 = vcmask 255104
  %155 = vst.msk [vmem:[%s153] sm:$0x3] %vm154, %v151
  %157 = vrot.lane.b32.xlu0 %v102, 80
  %v158 = vpop.permute.xlu0 %157
  %161 = vrot.lane.b32.xlu0 %v126, 32
  %v162 = vpop.permute.xlu0 %161
  %vm164 = vcmask 130048
  %v165 = vsel %vm164, %v158, %v162
  %v166 = vpack.c.bf16 %v165, %v165
  %v168 = vsel %vm28, %v166, 0
  %170 = vmatprep.subr.bf16.mxu0 0
  %171 = vmatpush1.bf16.msra.mxu0 %v24
  %172 = vmatprep.subr.bf16.mxu0 0
  %173 = vmatpush1.bf16.msra.mxu0 %v25
  %174 = vmatprep.subr.bf16.mxu0 0
  %175 = vmatpush1.bf16.msra.mxu0 0
  %176 = vmatprep.subr.bf16.mxu0 0
  %177 = vmatpush1.bf16.msra.mxu0 0
  %178 = vmatprep.subr.bf16.mxu0 0
  %179 = vmatpush1.bf16.msra.mxu0 0
  %180 = vmatprep.subr.bf16.mxu0 0
  %181 = vmatpush1.bf16.msra.mxu0 0
  %182 = vmatprep.subr.bf16.mxu0 0
  %183 = vmatpush1.bf16.msra.mxu0 0
  %184 = vmatprep.subr.bf16.mxu0 0
  %185 = vmatpush1.bf16.msra.mxu0 0
  %186 = vmatprep.subr.bf16.mxu0 0
  %187 = vmatpush1.bf16.msra.mxu0 0
  %188 = vmatprep.subr.bf16.mxu0 0
  %189 = vmatpush1.bf16.msra.mxu0 0
  %190 = vmatprep.subr.bf16.mxu0 0
  %191 = vmatpush1.bf16.msra.mxu0 0
  %192 = vmatprep.subr.bf16.mxu0 0
  %193 = vmatpush1.bf16.msra.mxu0 0
  %194 = vmatprep.subr.bf16.mxu0 0
  %195 = vmatpush1.bf16.msra.mxu0 0
  %196 = vmatprep.subr.bf16.mxu0 0
  %197 = vmatpush1.bf16.msra.mxu0 0
  %198 = vmatprep.subr.bf16.mxu0 0
  %199 = vmatpush1.bf16.msra.mxu0 0
  %200 = vmatprep.subr.bf16.mxu0 0
  %201 = vmatpush1.bf16.msra.mxu0 0
  %202 = vmatprep.mubr.bf16.mxu0 0
  %203 = vmatmul.mubr.bf16.gmra.mrb[0].mxu0 %v168
  %v204 = vpop.f32.mrb[0].mxu0
  %v205 = vadd.f32 0.0, %v204
  %v206 = vpop.f32.mrb[0].mxu0
  %v207 = vpop.f32.mrb[0].mxu0
  %v208 = vpop.f32.mrb[0].mxu0
  %209 = vdwg.mxu0
  %s210 = scalar_lea.vmem %s0, 2
  %v211 = vld [vmem:[%s210] sm:$0x3]
  %v212 = vunpack.c.l.bf16 %v211
  %v213 = vadd.f32 %v212, %v205
  %s214 = scalar_lea.vmem %s0, 12
  %v215 = vld [vmem:[%s214] sm:$0x3]
  %v216 = vunpack.c.l.bf16 %v215
  %v217 = vadd.f32 %v216, %v205
  %v218 = vxor.u32 %v213, 2147483648
  %v219 = vmul.f32 %v218, 1.442695
  %v220 = vpow.pop %v219
  %v221 = vadd.f32 %v220, 1.0
  %v222 = vrcp.pop %v221
  %v223 = vmul.f32 1.0, %v222
  %v224 = vtanh.pop %v213
  %v225 = vmul.f32 %v223, %v96
  %227 = vrot.lane.b32.xlu0 %v224, 96
  %v228 = vpop.permute.xlu0 %227
  %v230 = vmul.f32 %v223, %v228
  %232 = vrot.lane.b32.xlu0 %v230, 16
  %v233 = vpop.permute.xlu0 %232
  %v235 = vadd.f32 %v225, %v233
  %v236 = vtanh.pop %v235
  %238 = vrot.lane.b32.xlu0 %v236, 32
  %v239 = vpop.permute.xlu0 %238
  %v241 = vmul.f32 %v223, %v239
  %v242 = vxor.u32 %v217, 2147483648
  %v243 = vmul.f32 %v242, 1.442695
  %v244 = vpow.pop %v243
  %v245 = vadd.f32 %v244, 1.0
  %v246 = vrcp.pop %v245
  %v247 = vmul.f32 1.0, %v246
  %v248 = vtanh.pop %v217
  %v249 = vmul.f32 %v247, %v120
  %251 = vrot.lane.b32.xlu0 %v248, 96
  %v252 = vpop.permute.xlu0 %251
  %v254 = vmul.f32 %v247, %v252
  %256 = vrot.lane.b32.xlu0 %v254, 16
  %v257 = vpop.permute.xlu0 %256
  %v259 = vadd.f32 %v249, %v257
  %v260 = vtanh.pop %v259
  %262 = vrot.lane.b32.xlu0 %v260, 32
  %v263 = vpop.permute.xlu0 %262
  %v265 = vmul.f32 %v247, %v263
  %v266 = vpack.c.bf16 %v241, %v241
  %v269 = vunpack.c.l.s4 1983009808
  %v270 = vunpack.c.0.s8 %v269
  %v271 = vlaneseq
  %v272 = vshrl.u32 %v271, 7
  %v273 = vsub.s32 %v270, %v272
  %v274 = vrot.slane %v266, %v273
  %275 = vrot.lane.b32.xlu0 %v274, 80
  %v276 = vpop.permute.xlu0 %275
  %s278 = scalar_lea.vmem %s2, 2
  %279 = vst.msk [vmem:[%s278] sm:$0x3] %vm139, %v276
  %v280 = vpack.c.bf16 %v265, %v265
  %v283 = vunpack.c.l.s4 1983009808
  %v284 = vunpack.c.0.s8 %v283
  %v285 = vlaneseq
  %v286 = vshrl.u32 %v285, 7
  %v287 = vsub.s32 %v284, %v286
  %v288 = vrot.slane %v280, %v287
  %289 = vrot.lane.b32.xlu0 %v288, 32
  %v290 = vpop.permute.xlu0 %289
  %s292 = scalar_lea.vmem %s2, 12
  %293 = vst.msk [vmem:[%s292] sm:$0x3] %vm154, %v290
  %295 = vrot.lane.b32.xlu0 %v241, 80
  %v296 = vpop.permute.xlu0 %295
  %299 = vrot.lane.b32.xlu0 %v265, 32
  %v300 = vpop.permute.xlu0 %299
  %v302 = vsel %vm164, %v296, %v300
  %v303 = vpack.c.bf16 %v302, %v302
  %v305 = vsel %vm28, %v303, 0
  %307 = vmatprep.subr.bf16.mxu0 0
  %308 = vmatpush1.bf16.msra.mxu0 %v24
  %309 = vmatprep.subr.bf16.mxu0 0
  %310 = vmatpush1.bf16.msra.mxu0 %v25
  %311 = vmatprep.subr.bf16.mxu0 0
  %312 = vmatpush1.bf16.msra.mxu0 0
  %313 = vmatprep.subr.bf16.mxu0 0
  %314 = vmatpush1.bf16.msra.mxu0 0
  %315 = vmatprep.subr.bf16.mxu0 0
  %316 = vmatpush1.bf16.msra.mxu0 0
  %317 = vmatprep.subr.bf16.mxu0 0
  %318 = vmatpush1.bf16.msra.mxu0 0
  %319 = vmatprep.subr.bf16.mxu0 0
  %320 = vmatpush1.bf16.msra.mxu0 0
  %321 = vmatprep.subr.bf16.mxu0 0
  %322 = vmatpush1.bf16.msra.mxu0 0
  %323 = vmatprep.subr.bf16.mxu0 0
  %324 = vmatpush1.bf16.msra.mxu0 0
  %325 = vmatprep.subr.bf16.mxu0 0
  %326 = vmatpush1.bf16.msra.mxu0 0
  %327 = vmatprep.subr.bf16.mxu0 0
  %328 = vmatpush1.bf16.msra.mxu0 0
  %329 = vmatprep.subr.bf16.mxu0 0
  %330 = vmatpush1.bf16.msra.mxu0 0
  %331 = vmatprep.subr.bf16.mxu0 0
  %332 = vmatpush1.bf16.msra.mxu0 0
  %333 = vmatprep.subr.bf16.mxu0 0
  %334 = vmatpush1.bf16.msra.mxu0 0
  %335 = vmatprep.subr.bf16.mxu0 0
  %336 = vmatpush1.bf16.msra.mxu0 0
  %337 = vmatprep.subr.bf16.mxu0 0
  %338 = vmatpush1.bf16.msra.mxu0 0
  %339 = vmatprep.mubr.bf16.mxu0 0
  %340 = vmatmul.mubr.bf16.gmra.mrb[0].mxu0 %v305
  %v341 = vpop.f32.mrb[0].mxu0
  %v342 = vadd.f32 0.0, %v341
  %v343 = vpop.f32.mrb[0].mxu0
  %v344 = vpop.f32.mrb[0].mxu0
  %v345 = vpop.f32.mrb[0].mxu0
  %346 = vdwg.mxu0
  %s347 = scalar_lea.vmem %s0, 4
  %v348 = vld [vmem:[%s347] sm:$0x3]
  %v349 = vunpack.c.l.bf16 %v348
  %v350 = vadd.f32 %v349, %v342
  %s351 = scalar_lea.vmem %s0, 10
  %v352 = vld [vmem:[%s351] sm:$0x3]
  %v353 = vunpack.c.l.bf16 %v352
  %v354 = vadd.f32 %v353, %v342
  %v355 = vxor.u32 %v350, 2147483648
  %v356 = vmul.f32 %v355, 1.442695
  %v357 = vpow.pop %v356
  %v358 = vadd.f32 %v357, 1.0
  %v359 = vrcp.pop %v358
  %v360 = vmul.f32 1.0, %v359
  %v361 = vtanh.pop %v350
  %v362 = vmul.f32 %v360, %v235
  %364 = vrot.lane.b32.xlu0 %v361, 96
  %v365 = vpop.permute.xlu0 %364
  %v367 = vmul.f32 %v360, %v365
  %369 = vrot.lane.b32.xlu0 %v367, 16
  %v370 = vpop.permute.xlu0 %369
  %v372 = vadd.f32 %v362, %v370
  %v373 = vtanh.pop %v372
  %375 = vrot.lane.b32.xlu0 %v373, 32
  %v376 = vpop.permute.xlu0 %375
  %v378 = vmul.f32 %v360, %v376
  %v379 = vxor.u32 %v354, 2147483648
  %v380 = vmul.f32 %v379, 1.442695
  %v381 = vpow.pop %v380
  %v382 = vadd.f32 %v381, 1.0
  %v383 = vrcp.pop %v382
  %v384 = vmul.f32 1.0, %v383
  %v385 = vtanh.pop %v354
  %v386 = vmul.f32 %v384, %v259
  %388 = vrot.lane.b32.xlu0 %v385, 96
  %v389 = vpop.permute.xlu0 %388
  %v391 = vmul.f32 %v384, %v389
  %393 = vrot.lane.b32.xlu0 %v391, 16
  %v394 = vpop.permute.xlu0 %393
  %v396 = vadd.f32 %v386, %v394
  %v397 = vtanh.pop %v396
  %399 = vrot.lane.b32.xlu0 %v397, 32
  %v400 = vpop.permute.xlu0 %399
  %v402 = vmul.f32 %v384, %v400
  %v403 = vpack.c.bf16 %v378, %v378
  %v406 = vunpack.c.l.s4 1983009808
  %v407 = vunpack.c.0.s8 %v406
  %v408 = vlaneseq
  %v409 = vshrl.u32 %v408, 7
  %v410 = vsub.s32 %v407, %v409
  %v411 = vrot.slane %v403, %v410
  %412 = vrot.lane.b32.xlu0 %v411, 80
  %v413 = vpop.permute.xlu0 %412
  %s415 = scalar_lea.vmem %s2, 4
  %416 = vst.msk [vmem:[%s415] sm:$0x3] %vm139, %v413
  %v417 = vpack.c.bf16 %v402, %v402
  %v420 = vunpack.c.l.s4 1983009808
  %v421 = vunpack.c.0.s8 %v420
  %v422 = vlaneseq
  %v423 = vshrl.u32 %v422, 7
  %v424 = vsub.s32 %v421, %v423
  %v425 = vrot.slane %v417, %v424
  %426 = vrot.lane.b32.xlu0 %v425, 32
  %v427 = vpop.permute.xlu0 %426
  %s429 = scalar_lea.vmem %s2, 10
  %430 = vst.msk [vmem:[%s429] sm:$0x3] %vm154, %v427
  %432 = vrot.lane.b32.xlu0 %v378, 80
  %v433 = vpop.permute.xlu0 %432
  %436 = vrot.lane.b32.xlu0 %v402, 32
  %v437 = vpop.permute.xlu0 %436
  %v439 = vsel %vm164, %v433, %v437
  %v440 = vpack.c.bf16 %v439, %v439
  %v442 = vsel %vm28, %v440, 0
  %444 = vmatprep.subr.bf16.mxu0 0
  %445 = vmatpush1.bf16.msra.mxu0 %v24
  %446 = vmatprep.subr.bf16.mxu0 0
  %447 = vmatpush1.bf16.msra.mxu0 %v25
  %448 = vmatprep.subr.bf16.mxu0 0
  %449 = vmatpush1.bf16.msra.mxu0 0
  %450 = vmatprep.subr.bf16.mxu0 0
  %451 = vmatpush1.bf16.msra.mxu0 0
  %452 = vmatprep.subr.bf16.mxu0 0
  %453 = vmatpush1.bf16.msra.mxu0 0
  %454 = vmatprep.subr.bf16.mxu0 0
  %455 = vmatpush1.bf16.msra.mxu0 0
  %456 = vmatprep.subr.bf16.mxu0 0
  %457 = vmatpush1.bf16.msra.mxu0 0
  %458 = vmatprep.subr.bf16.mxu0 0
  %459 = vmatpush1.bf16.msra.mxu0 0
  %460 = vmatprep.subr.bf16.mxu0 0
  %461 = vmatpush1.bf16.msra.mxu0 0
  %462 = vmatprep.subr.bf16.mxu0 0
  %463 = vmatpush1.bf16.msra.mxu0 0
  %464 = vmatprep.subr.bf16.mxu0 0
  %465 = vmatpush1.bf16.msra.mxu0 0
  %466 = vmatprep.subr.bf16.mxu0 0
  %467 = vmatpush1.bf16.msra.mxu0 0
  %468 = vmatprep.subr.bf16.mxu0 0
  %469 = vmatpush1.bf16.msra.mxu0 0
  %470 = vmatprep.subr.bf16.mxu0 0
  %471 = vmatpush1.bf16.msra.mxu0 0
  %472 = vmatprep.subr.bf16.mxu0 0
  %473 = vmatpush1.bf16.msra.mxu0 0
  %474 = vmatprep.subr.bf16.mxu0 0
  %475 = vmatpush1.bf16.msra.mxu0 0
  %476 = vmatprep.mubr.bf16.mxu0 0
  %477 = vmatmul.mubr.bf16.gmra.mrb[0].mxu0 %v442
  %v478 = vpop.f32.mrb[0].mxu0
  %v479 = vadd.f32 0.0, %v478
  %v480 = vpop.f32.mrb[0].mxu0
  %v481 = vpop.f32.mrb[0].mxu0
  %v482 = vpop.f32.mrb[0].mxu0
  %483 = vdwg.mxu0
  %s484 = scalar_lea.vmem %s0, 6
  %v485 = vld [vmem:[%s484] sm:$0x3]
  %v486 = vunpack.c.l.bf16 %v485
  %v487 = vadd.f32 %v486, %v479
  %s488 = scalar_lea.vmem %s0, 8
  %v489 = vld [vmem:[%s488] sm:$0x3]
  %v490 = vunpack.c.l.bf16 %v489
  %v491 = vadd.f32 %v490, %v479
  %v492 = vxor.u32 %v487, 2147483648
  %v493 = vmul.f32 %v492, 1.442695
  %v494 = vpow.pop %v493
  %v495 = vadd.f32 %v494, 1.0
  %v496 = vrcp.pop %v495
  %v497 = vmul.f32 1.0, %v496
  %v498 = vtanh.pop %v487
  %v499 = vmul.f32 %v497, %v372
  %501 = vrot.lane.b32.xlu0 %v498, 96
  %v502 = vpop.permute.xlu0 %501
  %v504 = vmul.f32 %v497, %v502
  %506 = vrot.lane.b32.xlu0 %v504, 16
  %v507 = vpop.permute.xlu0 %506
  %v509 = vadd.f32 %v499, %v507
  %v510 = vtanh.pop %v509
  %512 = vrot.lane.b32.xlu0 %v510, 32
  %v513 = vpop.permute.xlu0 %512
  %v515 = vmul.f32 %v497, %v513
  %v516 = vxor.u32 %v491, 2147483648
  %v517 = vmul.f32 %v516, 1.442695
  %v518 = vpow.pop %v517
  %v519 = vadd.f32 %v518, 1.0
  %v520 = vrcp.pop %v519
  %v521 = vmul.f32 1.0, %v520
  %v522 = vtanh.pop %v491
  %v523 = vmul.f32 %v521, %v396
  %525 = vrot.lane.b32.xlu0 %v522, 96
  %v526 = vpop.permute.xlu0 %525
  %v528 = vmul.f32 %v521, %v526
  %530 = vrot.lane.b32.xlu0 %v528, 16
  %v531 = vpop.permute.xlu0 %530
  %v533 = vadd.f32 %v523, %v531
  %v534 = vtanh.pop %v533
  %536 = vrot.lane.b32.xlu0 %v534, 32
  %v537 = vpop.permute.xlu0 %536
  %v539 = vmul.f32 %v521, %v537
  %v540 = vpack.c.bf16 %v515, %v515
  %v543 = vunpack.c.l.s4 1983009808
  %v544 = vunpack.c.0.s8 %v543
  %v545 = vlaneseq
  %v546 = vshrl.u32 %v545, 7
  %v547 = vsub.s32 %v544, %v546
  %v548 = vrot.slane %v540, %v547
  %549 = vrot.lane.b32.xlu0 %v548, 80
  %v550 = vpop.permute.xlu0 %549
  %s552 = scalar_lea.vmem %s2, 6
  %553 = vst.msk [vmem:[%s552] sm:$0x3] %vm139, %v550
  %v554 = vpack.c.bf16 %v539, %v539
  %v557 = vunpack.c.l.s4 1983009808
  %v558 = vunpack.c.0.s8 %v557
  %v559 = vlaneseq
  %v560 = vshrl.u32 %v559, 7
  %v561 = vsub.s32 %v558, %v560
  %v562 = vrot.slane %v554, %v561
  %563 = vrot.lane.b32.xlu0 %v562, 32
  %v564 = vpop.permute.xlu0 %563
  %s566 = scalar_lea.vmem %s2, 8
  %567 = vst.msk [vmem:[%s566] sm:$0x3] %vm154, %v564
  %569 = vrot.lane.b32.xlu0 %v515, 80
  %v570 = vpop.permute.xlu0 %569
  %573 = vrot.lane.b32.xlu0 %v539, 32
  %v574 = vpop.permute.xlu0 %573
  %v576 = vsel %vm164, %v570, %v574
  %v577 = vpack.c.bf16 %v576, %v576
  %v579 = vsel %vm28, %v577, 0
  %581 = vmatprep.subr.bf16.mxu0 0
  %582 = vmatpush1.bf16.msra.mxu0 %v24
  %583 = vmatprep.subr.bf16.mxu0 0
  %584 = vmatpush1.bf16.msra.mxu0 %v25
  %585 = vmatprep.subr.bf16.mxu0 0
  %586 = vmatpush1.bf16.msra.mxu0 0
  %587 = vmatprep.subr.bf16.mxu0 0
  %588 = vmatpush1.bf16.msra.mxu0 0
  %589 = vmatprep.subr.bf16.mxu0 0
  %590 = vmatpush1.bf16.msra.mxu0 0
  %591 = vmatprep.subr.bf16.mxu0 0
  %592 = vmatpush1.bf16.msra.mxu0 0
  %593 = vmatprep.subr.bf16.mxu0 0
  %594 = vmatpush1.bf16.msra.mxu0 0
  %595 = vmatprep.subr.bf16.mxu0 0
  %596 = vmatpush1.bf16.msra.mxu0 0
  %597 = vmatprep.subr.bf16.mxu0 0
  %598 = vmatpush1.bf16.msra.mxu0 0
  %599 = vmatprep.subr.bf16.mxu0 0
  %600 = vmatpush1.bf16.msra.mxu0 0
  %601 = vmatprep.subr.bf16.mxu0 0
  %602 = vmatpush1.bf16.msra.mxu0 0
  %603 = vmatprep.subr.bf16.mxu0 0
  %604 = vmatpush1.bf16.msra.mxu0 0
  %605 = vmatprep.subr.bf16.mxu0 0
  %606 = vmatpush1.bf16.msra.mxu0 0
  %607 = vmatprep.subr.bf16.mxu0 0
  %608 = vmatpush1.bf16.msra.mxu0 0
  %609 = vmatprep.subr.bf16.mxu0 0
  %610 = vmatpush1.bf16.msra.mxu0 0
  %611 = vmatprep.subr.bf16.mxu0 0
  %612 = vmatpush1.bf16.msra.mxu0 0
  %613 = vmatprep.mubr.bf16.mxu0 0
  %614 = vmatmul.mubr.bf16.gmra.mrb[0].mxu0 %v579
  %v615 = vpop.f32.mrb[0].mxu0
  %v616 = vadd.f32 0.0, %v615
  %v617 = vpop.f32.mrb[0].mxu0
  %v618 = vpop.f32.mrb[0].mxu0
  %v619 = vpop.f32.mrb[0].mxu0
  %620 = vdwg.mxu0
  %v621 = vld [vmem:[%s488] sm:$0x3]
  %v622 = vunpack.c.l.bf16 %v621
  %v623 = vadd.f32 %v622, %v616
  %v624 = vld [vmem:[%s484] sm:$0x3]
  %v625 = vunpack.c.l.bf16 %v624
  %v626 = vadd.f32 %v625, %v616
  %v627 = vxor.u32 %v623, 2147483648
  %v628 = vmul.f32 %v627, 1.442695
  %v629 = vpow.pop %v628
  %v630 = vadd.f32 %v629, 1.0
  %v631 = vrcp.pop %v630
  %v632 = vmul.f32 1.0, %v631
  %v633 = vtanh.pop %v623
  %v634 = vmul.f32 %v632, %v509
  %636 = vrot.lane.b32.xlu0 %v633, 96
  %v637 = vpop.permute.xlu0 %636
  %v639 = vmul.f32 %v632, %v637
  %641 = vrot.lane.b32.xlu0 %v639, 16
  %v642 = vpop.permute.xlu0 %641
  %v644 = vadd.f32 %v634, %v642
  %v645 = vtanh.pop %v644
  %647 = vrot.lane.b32.xlu0 %v645, 32
  %v648 = vpop.permute.xlu0 %647
  %v650 = vmul.f32 %v632, %v648
  %v651 = vxor.u32 %v626, 2147483648
  %v652 = vmul.f32 %v651, 1.442695
  %v653 = vpow.pop %v652
  %v654 = vadd.f32 %v653, 1.0
  %v655 = vrcp.pop %v654
  %v656 = vmul.f32 1.0, %v655
  %v657 = vtanh.pop %v626
  %v658 = vmul.f32 %v656, %v533
  %660 = vrot.lane.b32.xlu0 %v657, 96
  %v661 = vpop.permute.xlu0 %660
  %v663 = vmul.f32 %v656, %v661
  %665 = vrot.lane.b32.xlu0 %v663, 16
  %v666 = vpop.permute.xlu0 %665
  %v668 = vadd.f32 %v658, %v666
  %v669 = vtanh.pop %v668
  %671 = vrot.lane.b32.xlu0 %v669, 32
  %v672 = vpop.permute.xlu0 %671
  %v674 = vmul.f32 %v656, %v672
  %v675 = vpack.c.bf16 %v650, %v650
  %v678 = vunpack.c.l.s4 1983009808
  %v679 = vunpack.c.0.s8 %v678
  %v680 = vlaneseq
  %v681 = vshrl.u32 %v680, 7
  %v682 = vsub.s32 %v679, %v681
  %v683 = vrot.slane %v675, %v682
  %684 = vrot.lane.b32.xlu0 %v683, 80
  %v685 = vpop.permute.xlu0 %684
  %687 = vst.msk [vmem:[%s566] sm:$0x3] %vm139, %v685
  %v688 = vpack.c.bf16 %v674, %v674
  %v691 = vunpack.c.l.s4 1983009808
  %v692 = vunpack.c.0.s8 %v691
  %v693 = vlaneseq
  %v694 = vshrl.u32 %v693, 7
  %v695 = vsub.s32 %v692, %v694
  %v696 = vrot.slane %v688, %v695
  %697 = vrot.lane.b32.xlu0 %v696, 32
  %v698 = vpop.permute.xlu0 %697
  %700 = vst.msk [vmem:[%s552] sm:$0x3] %vm154, %v698
  %702 = vrot.lane.b32.xlu0 %v650, 80
  %v703 = vpop.permute.xlu0 %702
  %706 = vrot.lane.b32.xlu0 %v674, 32
  %v707 = vpop.permute.xlu0 %706
  %v709 = vsel %vm164, %v703, %v707
  %v710 = vpack.c.bf16 %v709, %v709
  %v712 = vsel %vm28, %v710, 0
  %714 = vmatprep.subr.bf16.mxu0 0
  %715 = vmatpush1.bf16.msra.mxu0 %v24
  %716 = vmatprep.subr.bf16.mxu0 0
  %717 = vmatpush1.bf16.msra.mxu0 %v25
  %718 = vmatprep.subr.bf16.mxu0 0
  %719 = vmatpush1.bf16.msra.mxu0 0
  %720 = vmatprep.subr.bf16.mxu0 0
  %721 = vmatpush1.bf16.msra.mxu0 0
  %722 = vmatprep.subr.bf16.mxu0 0
  %723 = vmatpush1.bf16.msra.mxu0 0
  %724 = vmatprep.subr.bf16.mxu0 0
  %725 = vmatpush1.bf16.msra.mxu0 0
  %726 = vmatprep.subr.bf16.mxu0 0
  %727 = vmatpush1.bf16.msra.mxu0 0
  %728 = vmatprep.subr.bf16.mxu0 0
  %729 = vmatpush1.bf16.msra.mxu0 0
  %730 = vmatprep.subr.bf16.mxu0 0
  %731 = vmatpush1.bf16.msra.mxu0 0
  %732 = vmatprep.subr.bf16.mxu0 0
  %733 = vmatpush1.bf16.msra.mxu0 0
  %734 = vmatprep.subr.bf16.mxu0 0
  %735 = vmatpush1.bf16.msra.mxu0 0
  %736 = vmatprep.subr.bf16.mxu0 0
  %737 = vmatpush1.bf16.msra.mxu0 0
  %738 = vmatprep.subr.bf16.mxu0 0
  %739 = vmatpush1.bf16.msra.mxu0 0
  %740 = vmatprep.subr.bf16.mxu0 0
  %741 = vmatpush1.bf16.msra.mxu0 0
  %742 = vmatprep.subr.bf16.mxu0 0
  %743 = vmatpush1.bf16.msra.mxu0 0
  %744 = vmatprep.subr.bf16.mxu0 0
  %745 = vmatpush1.bf16.msra.mxu0 0
  %746 = vmatprep.mubr.bf16.mxu0 0
  %747 = vmatmul.mubr.bf16.gmra.mrb[0].mxu0 %v712
  %v748 = vpop.f32.mrb[0].mxu0
  %v749 = vadd.f32 0.0, %v748
  %v750 = vpop.f32.mrb[0].mxu0
  %v751 = vpop.f32.mrb[0].mxu0
  %v752 = vpop.f32.mrb[0].mxu0
  %753 = vdwg.mxu0
  %v754 = vld [vmem:[%s351] sm:$0x3]
  %v755 = vunpack.c.l.bf16 %v754
  %v756 = vadd.f32 %v755, %v749
  %v757 = vld [vmem:[%s347] sm:$0x3]
  %v758 = vunpack.c.l.bf16 %v757
  %v759 = vadd.f32 %v758, %v749
  %v760 = vxor.u32 %v756, 2147483648
  %v761 = vmul.f32 %v760, 1.442695
  %v762 = vpow.pop %v761
  %v763 = vadd.f32 %v762, 1.0
  %v764 = vrcp.pop %v763
  %v765 = vmul.f32 1.0, %v764
  %v766 = vtanh.pop %v756
  %v767 = vmul.f32 %v765, %v644
  %769 = vrot.lane.b32.xlu0 %v766, 96
  %v770 = vpop.permute.xlu0 %769
  %v772 = vmul.f32 %v765, %v770
  %774 = vrot.lane.b32.xlu0 %v772, 16
  %v775 = vpop.permute.xlu0 %774
  %v777 = vadd.f32 %v767, %v775
  %v778 = vtanh.pop %v777
  %780 = vrot.lane.b32.xlu0 %v778, 32
  %v781 = vpop.permute.xlu0 %780
  %v783 = vmul.f32 %v765, %v781
  %v784 = vxor.u32 %v759, 2147483648
  %v785 = vmul.f32 %v784, 1.442695
  %v786 = vpow.pop %v785
  %v787 = vadd.f32 %v786, 1.0
  %v788 = vrcp.pop %v787
  %v789 = vmul.f32 1.0, %v788
  %v790 = vtanh.pop %v759
  %v791 = vmul.f32 %v789, %v668
  %793 = vrot.lane.b32.xlu0 %v790, 96
  %v794 = vpop.permute.xlu0 %793
  %v796 = vmul.f32 %v789, %v794
  %798 = vrot.lane.b32.xlu0 %v796, 16
  %v799 = vpop.permute.xlu0 %798
  %v801 = vadd.f32 %v791, %v799
  %v802 = vtanh.pop %v801
  %804 = vrot.lane.b32.xlu0 %v802, 32
  %v805 = vpop.permute.xlu0 %804
  %v807 = vmul.f32 %v789, %v805
  %v808 = vpack.c.bf16 %v783, %v783
  %v811 = vunpack.c.l.s4 1983009808
  %v812 = vunpack.c.0.s8 %v811
  %v813 = vlaneseq
  %v814 = vshrl.u32 %v813, 7
  %v815 = vsub.s32 %v812, %v814
  %v816 = vrot.slane %v808, %v815
  %817 = vrot.lane.b32.xlu0 %v816, 80
  %v818 = vpop.permute.xlu0 %817
  %820 = vst.msk [vmem:[%s429] sm:$0x3] %vm139, %v818
  %v821 = vpack.c.bf16 %v807, %v807
  %v824 = vunpack.c.l.s4 1983009808
  %v825 = vunpack.c.0.s8 %v824
  %v826 = vlaneseq
  %v827 = vshrl.u32 %v826, 7
  %v828 = vsub.s32 %v825, %v827
  %v829 = vrot.slane %v821, %v828
  %830 = vrot.lane.b32.xlu0 %v829, 32
  %v831 = vpop.permute.xlu0 %830
  %833 = vst.msk [vmem:[%s415] sm:$0x3] %vm154, %v831
  %835 = vrot.lane.b32.xlu0 %v783, 80
  %v836 = vpop.permute.xlu0 %835
  %839 = vrot.lane.b32.xlu0 %v807, 32
  %v840 = vpop.permute.xlu0 %839
  %v842 = vsel %vm164, %v836, %v840
  %v843 = vpack.c.bf16 %v842, %v842
  %v845 = vsel %vm28, %v843, 0
  %847 = vmatprep.subr.bf16.mxu0 0
  %848 = vmatpush1.bf16.msra.mxu0 %v24
  %849 = vmatprep.subr.bf16.mxu0 0
  %850 = vmatpush1.bf16.msra.mxu0 %v25
  %851 = vmatprep.subr.bf16.mxu0 0
  %852 = vmatpush1.bf16.msra.mxu0 0
  %853 = vmatprep.subr.bf16.mxu0 0
  %854 = vmatpush1.bf16.msra.mxu0 0
  %855 = vmatprep.subr.bf16.mxu0 0
  %856 = vmatpush1.bf16.msra.mxu0 0
  %857 = vmatprep.subr.bf16.mxu0 0
  %858 = vmatpush1.bf16.msra.mxu0 0
  %859 = vmatprep.subr.bf16.mxu0 0
  %860 = vmatpush1.bf16.msra.mxu0 0
  %861 = vmatprep.subr.bf16.mxu0 0
  %862 = vmatpush1.bf16.msra.mxu0 0
  %863 = vmatprep.subr.bf16.mxu0 0
  %864 = vmatpush1.bf16.msra.mxu0 0
  %865 = vmatprep.subr.bf16.mxu0 0
  %866 = vmatpush1.bf16.msra.mxu0 0
  %867 = vmatprep.subr.bf16.mxu0 0
  %868 = vmatpush1.bf16.msra.mxu0 0
  %869 = vmatprep.subr.bf16.mxu0 0
  %870 = vmatpush1.bf16.msra.mxu0 0
  %871 = vmatprep.subr.bf16.mxu0 0
  %872 = vmatpush1.bf16.msra.mxu0 0
  %873 = vmatprep.subr.bf16.mxu0 0
  %874 = vmatpush1.bf16.msra.mxu0 0
  %875 = vmatprep.subr.bf16.mxu0 0
  %876 = vmatpush1.bf16.msra.mxu0 0
  %877 = vmatprep.subr.bf16.mxu0 0
  %878 = vmatpush1.bf16.msra.mxu0 0
  %879 = vmatprep.mubr.bf16.mxu0 0
  %880 = vmatmul.mubr.bf16.gmra.mrb[0].mxu0 %v845
  %v881 = vpop.f32.mrb[0].mxu0
  %v882 = vadd.f32 0.0, %v881
  %v883 = vpop.f32.mrb[0].mxu0
  %v884 = vpop.f32.mrb[0].mxu0
  %v885 = vpop.f32.mrb[0].mxu0
  %886 = vdwg.mxu0
  %v887 = vld [vmem:[%s214] sm:$0x3]
  %v888 = vunpack.c.l.bf16 %v887
  %v889 = vadd.f32 %v888, %v882
  %v890 = vld [vmem:[%s210] sm:$0x3]
  %v891 = vunpack.c.l.bf16 %v890
  %v892 = vadd.f32 %v891, %v882
  %v893 = vxor.u32 %v889, 2147483648
  %v894 = vmul.f32 %v893, 1.442695
  %v895 = vpow.pop %v894
  %v896 = vadd.f32 %v895, 1.0
  %v897 = vrcp.pop %v896
  %v898 = vmul.f32 1.0, %v897
  %v899 = vtanh.pop %v889
  %v900 = vmul.f32 %v898, %v777
  %902 = vrot.lane.b32.xlu0 %v899, 96
  %v903 = vpop.permute.xlu0 %902
  %v905 = vmul.f32 %v898, %v903
  %907 = vrot.lane.b32.xlu0 %v905, 16
  %v908 = vpop.permute.xlu0 %907
  %v910 = vadd.f32 %v900, %v908
  %v911 = vtanh.pop %v910
  %913 = vrot.lane.b32.xlu0 %v911, 32
  %v914 = vpop.permute.xlu0 %913
  %v916 = vmul.f32 %v898, %v914
  %v917 = vxor.u32 %v892, 2147483648
  %v918 = vmul.f32 %v917, 1.442695
  %v919 = vpow.pop %v918
  %v920 = vadd.f32 %v919, 1.0
  %v921 = vrcp.pop %v920
  %v922 = vmul.f32 1.0, %v921
  %v923 = vtanh.pop %v892
  %v924 = vmul.f32 %v922, %v801
  %926 = vrot.lane.b32.xlu0 %v923, 96
  %v927 = vpop.permute.xlu0 %926
  %v929 = vmul.f32 %v922, %v927
  %931 = vrot.lane.b32.xlu0 %v929, 16
  %v932 = vpop.permute.xlu0 %931
  %v934 = vadd.f32 %v924, %v932
  %v935 = vtanh.pop %v934
  %937 = vrot.lane.b32.xlu0 %v935, 32
  %v938 = vpop.permute.xlu0 %937
  %v940 = vmul.f32 %v922, %v938
  %v941 = vpack.c.bf16 %v916, %v916
  %v944 = vunpack.c.l.s4 1983009808
  %v945 = vunpack.c.0.s8 %v944
  %v946 = vlaneseq
  %v947 = vshrl.u32 %v946, 7
  %v948 = vsub.s32 %v945, %v947
  %v949 = vrot.slane %v941, %v948
  %950 = vrot.lane.b32.xlu0 %v949, 80
  %v951 = vpop.permute.xlu0 %950
  %953 = vst.msk [vmem:[%s292] sm:$0x3] %vm139, %v951
  %v954 = vpack.c.bf16 %v940, %v940
  %v957 = vunpack.c.l.s4 1983009808
  %v958 = vunpack.c.0.s8 %v957
  %v959 = vlaneseq
  %v960 = vshrl.u32 %v959, 7
  %v961 = vsub.s32 %v958, %v960
  %v962 = vrot.slane %v954, %v961
  %963 = vrot.lane.b32.xlu0 %v962, 32
  %v964 = vpop.permute.xlu0 %963
  %966 = vst.msk [vmem:[%s278] sm:$0x3] %vm154, %v964
  %968 = vrot.lane.b32.xlu0 %v916, 80
  %v969 = vpop.permute.xlu0 %968
  %972 = vrot.lane.b32.xlu0 %v940, 32
  %v973 = vpop.permute.xlu0 %972
  %v975 = vsel %vm164, %v969, %v973
  %v976 = vpack.c.bf16 %v975, %v975
  %v978 = vsel %vm28, %v976, 0
  %980 = vmatprep.subr.bf16.mxu0 0
  %981 = vmatpush1.bf16.msra.mxu0 %v24
  %982 = vmatprep.subr.bf16.mxu0 0
  %983 = vmatpush1.bf16.msra.mxu0 %v25
  %984 = vmatprep.subr.bf16.mxu0 0
  %985 = vmatpush1.bf16.msra.mxu0 0
  %986 = vmatprep.subr.bf16.mxu0 0
  %987 = vmatpush1.bf16.msra.mxu0 0
  %988 = vmatprep.subr.bf16.mxu0 0
  %989 = vmatpush1.bf16.msra.mxu0 0
  %990 = vmatprep.subr.bf16.mxu0 0
  %991 = vmatpush1.bf16.msra.mxu0 0
  %992 = vmatprep.subr.bf16.mxu0 0
  %993 = vmatpush1.bf16.msra.mxu0 0
  %994 = vmatprep.subr.bf16.mxu0 0
  %995 = vmatpush1.bf16.msra.mxu0 0
  %996 = vmatprep.subr.bf16.mxu0 0
  %997 = vmatpush1.bf16.msra.mxu0 0
  %998 = vmatprep.subr.bf16.mxu0 0
  %999 = vmatpush1.bf16.msra.mxu0 0
  %1000 = vmatprep.subr.bf16.mxu0 0
  %1001 = vmatpush1.bf16.msra.mxu0 0
  %1002 = vmatprep.subr.bf16.mxu0 0
  %1003 = vmatpush1.bf16.msra.mxu0 0
  %1004 = vmatprep.subr.bf16.mxu0 0
  %1005 = vmatpush1.bf16.msra.mxu0 0
  %1006 = vmatprep.subr.bf16.mxu0 0
  %1007 = vmatpush1.bf16.msra.mxu0 0
  %1008 = vmatprep.subr.bf16.mxu0 0
  %1009 = vmatpush1.bf16.msra.mxu0 0
  %1010 = vmatprep.subr.bf16.mxu0 0
  %1011 = vmatpush1.bf16.msra.mxu0 0
  %1012 = vmatprep.mubr.bf16.mxu0 0
  %1013 = vmatmul.mubr.bf16.gmra.mrb[0].mxu0 %v978
  %v1014 = vpop.f32.mrb[0].mxu0
  %v1015 = vadd.f32 0.0, %v1014
  %v1016 = vpop.f32.mrb[0].mxu0
  %v1017 = vpop.f32.mrb[0].mxu0
  %v1018 = vpop.f32.mrb[0].mxu0
  %1019 = vdwg.mxu0
  %v1020 = vld [vmem:[%s75] sm:$0x3]
  %v1021 = vunpack.c.l.bf16 %v1020
  %v1022 = vadd.f32 %v1021, %v1015
  %v1023 = vld [vmem:[%s0] sm:$0x3]
  %v1024 = vunpack.c.l.bf16 %v1023
  %v1025 = vadd.f32 %v1024, %v1015
  %v1026 = vxor.u32 %v1022, 2147483648
  %v1027 = vmul.f32 %v1026, 1.442695
  %v1028 = vpow.pop %v1027
  %v1029 = vadd.f32 %v1028, 1.0
  %v1030 = vrcp.pop %v1029
  %v1031 = vmul.f32 1.0, %v1030
  %v1032 = vtanh.pop %v1022
  %v1033 = vmul.f32 %v1031, %v910
  %1035 = vrot.lane.b32.xlu0 %v1032, 96
  %v1036 = vpop.permute.xlu0 %1035
  %v1038 = vmul.f32 %v1031, %v1036
  %1040 = vrot.lane.b32.xlu0 %v1038, 16
  %v1041 = vpop.permute.xlu0 %1040
  %v1043 = vadd.f32 %v1033, %v1041
  %v1044 = vtanh.pop %v1043
  %1046 = vrot.lane.b32.xlu0 %v1044, 32
  %v1047 = vpop.permute.xlu0 %1046
  %v1049 = vmul.f32 %v1031, %v1047
  %v1050 = vxor.u32 %v1025, 2147483648
  %v1051 = vmul.f32 %v1050, 1.442695
  %v1052 = vpow.pop %v1051
  %v1053 = vadd.f32 %v1052, 1.0
  %v1054 = vrcp.pop %v1053
  %v1055 = vmul.f32 1.0, %v1054
  %v1056 = vtanh.pop %v1025
  %v1057 = vmul.f32 %v1055, %v934
  %1059 = vrot.lane.b32.xlu0 %v1056, 96
  %v1060 = vpop.permute.xlu0 %1059
  %v1062 = vmul.f32 %v1055, %v1060
  %1064 = vrot.lane.b32.xlu0 %v1062, 16
  %v1065 = vpop.permute.xlu0 %1064
  %v1067 = vadd.f32 %v1057, %v1065
  %v1068 = vtanh.pop %v1067
  %1070 = vrot.lane.b32.xlu0 %v1068, 32
  %v1071 = vpop.permute.xlu0 %1070
  %v1073 = vmul.f32 %v1055, %v1071
  %v1074 = vpack.c.bf16 %v1049, %v1049
  %v1077 = vunpack.c.l.s4 1983009808
  %v1078 = vunpack.c.0.s8 %v1077
  %v1079 = vlaneseq
  %v1080 = vshrl.u32 %v1079, 7
  %v1081 = vsub.s32 %v1078, %v1080
  %v1082 = vrot.slane %v1074, %v1081
  %1083 = vrot.lane.b32.xlu0 %v1082, 80
  %v1084 = vpop.permute.xlu0 %1083
  %1086 = vst.msk [vmem:[%s153] sm:$0x3] %vm139, %v1084
  %v1087 = vpack.c.bf16 %v1073, %v1073
  %v1090 = vunpack.c.l.s4 1983009808
  %v1091 = vunpack.c.0.s8 %v1090
  %v1092 = vlaneseq
  %v1093 = vshrl.u32 %v1092, 7
  %v1094 = vsub.s32 %v1091, %v1093
  %v1095 = vrot.slane %v1087, %v1094
  %1096 = vrot.lane.b32.xlu0 %v1095, 32
  %v1097 = vpop.permute.xlu0 %1096
  %1099 = vst.msk [vmem:[%s2] sm:$0x3] %vm154, %v1097
  // Predicated region
  $region10: #{_lambda_.4} parent=0 // pred_check
    _
  $region11: #{_lambda_.4} parent=0 // pred_check_branch
    %1101 = sbr.rel (0) target = $region13
  $region12: #{_lambda_.4} parent=0 // pred_region
    _
  $region13: #{_lambda_.4} parent=0 // pred_fallthru
    _
  // Predicated region
  $region14: #{_lambda_.4} parent=0 // pred_check
    _
  $region15: #{_lambda_.4} parent=0 // pred_check_branch
    %1103 = sbr.rel (0) target = $region17
  $region16: #{_lambda_.4} parent=0 // pred_region
    _
  $region17: #{_lambda_.4} parent=0 // pred_fallthru
    _

</llo_original>
